<compile_context>
chip_gen: v6e
topology: v6e:2x2x1
jax: 0.10.0
libtpu: 0.0.40
codegen_flags: <defaults>
</compile_context>

<pallas_src>
import functools

import jax
import jax.numpy as jnp
from jax import lax
from jax.experimental import pallas as pl
from jax.experimental.pallas import tpu as pltpu

# ---------------- model config (small, synthetic) ----------------
H = 32            # hidden size
HEADS = 2
DH = H // HEADS   # head dim
INTER = 64        # intermediate (FFN) size
LAYERS = 2
VOCAB = 50
MAX_POS = 16
TYPES = 2
NUM_LABELS = 5    # num_intent_labels
LN_EPS = 1e-12

# packed-slab layout constants
EMB_ROWS = VOCAB + MAX_POS + TYPES          # 68 rows of the packed embedding table
WP_OFF = LAYERS * INTER                     # pooler-weight row offset inside wB
EMB_OFF = WP_OFF + H                        # embedding-table row offset inside wB
V_EMB_G, V_EMB_B, V_BP = 0, 1, 2            # vecs slab row indices
V_LAYER0, V_PER_LAYER = 3, 8                # per-layer rows: bqkv,bo,ln1g,ln1b,bi,bo2,ln2g,ln2b
OUT_ROWS, OUT_LANES = 8, 128                # single lane-dense output slab


# ---------------- the single fused Pallas kernel ----------------

def _make_kernel(n_ex, batch, seq):
    """Build the fused kernel for static shapes (n_ex example seqs, batch input seqs, seq len)."""
    nseq = n_ex + batch
    T = nseq * seq
    f32 = jnp.float32

    def kernel(meta_ref, kvalid_ref, wA_ref, wB_ref, vecs_ref, out_ref):
        def vrow(idx, width):                       # one packed bias/LN vector -> [1, width]
            return vecs_ref[idx][:, 0:width]

        def layernorm(x, g, b):
            m = jnp.mean(x, axis=-1, keepdims=True)
            v = jnp.mean((x - m) ** 2, axis=-1, keepdims=True)
            return (x - m) * lax.rsqrt(v + LN_EPS) * g + b

        def softmax_attn(s):                        # approx reciprocal is fine inside attention
            s = s - jnp.max(s, axis=-1, keepdims=True)
            e = jnp.exp(s)
            return e * pl.reciprocal(jnp.sum(e, axis=-1, keepdims=True), approx=True)

        # ---- embeddings: word + position + type via ONE one-hot matmul ----
        ids = meta_ref[:, 0:1]                      # [T,1] word ids
        typ = meta_ref[:, 1:2]                      # [T,1] token types
        pos = meta_ref[:, 2:3]                      # [T,1] position in sequence
        col = lax.broadcasted_iota(jnp.int32, (T, EMB_ROWS), 1)
        onehot = ((col == ids)
                  | (col == VOCAB + pos)
                  | (col == VOCAB + MAX_POS + typ)).astype(f32)     # [T, 68]
        emb_tbl = wB_ref[EMB_OFF:EMB_OFF + EMB_ROWS, :]              # [68, H]
        x = jnp.dot(onehot, emb_tbl, preferred_element_type=f32)     # [T, H]
        x = layernorm(x, vrow(V_EMB_G, H), vrow(V_EMB_B, H))

        # ---- additive attention mask: block-diagonal (own sequence) + key padding ----
        seq_start = meta_ref[:, 3:4] * seq                           # [T,1] first token of own seq
        cT = lax.broadcasted_iota(jnp.int32, (T, T), 1)
        same_seq = (cT >= seq_start) & (cT < seq_start + seq)        # [T,T]
        key_ok = kvalid_ref[...] > 0                                 # [1,T]
        add_mask = jnp.where(same_seq & key_ok, f32(0.0), f32(-10000.0))

        lane = lax.broadcasted_iota(jnp.int32, (T, H), 1)            # hoisted out of the loops

        # ---- transformer layers ----
        for li in range(LAYERS):
            wa = wA_ref[li]                                          # [H, 4H+INTER]
            base = V_LAYER0 + li * V_PER_LAYER
            # 1/sqrt(DH) is folded into Wq / bq at pack time -> no in-kernel scaling.
            qkv = (jnp.dot(x, wa[:, 0:3 * H], preferred_element_type=f32)
                   + vrow(base + 0, 3 * H))                          # [T, 3H]
            v_all = qkv[:, 2 * H:3 * H]                              # [T, H]
            ctx = jnp.zeros((T, H), f32)
            for h in range(HEADS):
                qh = qkv[:, h * DH:(h + 1) * DH]
                kh = qkv[:, H + h * DH:H + (h + 1) * DH]
                s = lax.dot_general(qh, kh, (((1,), (1,)), ((), ())),
                                    preferred_element_type=f32) + add_mask
                p = softmax_attn(s)
                # zero the other head's V lanes so ctx stays lane-packed across heads
                vh = jnp.where((lane >= h * DH) & (lane < (h + 1) * DH), v_all, f32(0.0))
                ctx = ctx + jnp.dot(p, vh, preferred_element_type=f32)
            # single output-projection matmul on the lane-packed context
            attn = (jnp.dot(ctx, wa[:, 3 * H:4 * H], preferred_element_type=f32)
                    + vrow(base + 1, H))
            x = layernorm(x + attn, vrow(base + 2, H), vrow(base + 3, H))

            inter = (jnp.dot(x, wa[:, 4 * H:4 * H + INTER], preferred_element_type=f32)
                     + vrow(base + 4, INTER))
            # TODO(synk): tanh-approx GELU; HF BERT default is exact erf GELU (~1e-3 diff).
            cg = f32(0.7978845608028654)
            inter = 0.5 * inter * (1.0 + jnp.tanh(cg * (inter + 0.044715 * inter * inter * inter)))
            wo2 = wB_ref[li * INTER:(li + 1) * INTER, :]              # [INTER, H]
            ffn = jnp.dot(inter, wo2, preferred_element_type=f32) + vrow(base + 5, H)
            x = layernorm(x + ffn, vrow(base + 6, H), vrow(base + 7, H))

        # ---- tanh pooler on CLS rows (selected via in-kernel one-hot matmuls) ----
        wp = wB_ref[WP_OFF:WP_OFF + H, :]
        bp = vrow(V_BP, H)
        r_ex = lax.broadcasted_iota(jnp.int32, (n_ex, T), 0)
        c_ex = lax.broadcasted_iota(jnp.int32, (n_ex, T), 1)
        sel_ex = (c_ex == r_ex * seq).astype(f32)                     # [N_ex, T]
        r_in = lax.broadcasted_iota(jnp.int32, (batch, T), 0)
        c_in = lax.broadcasted_iota(jnp.int32, (batch, T), 1)
        sel_in = (c_in == (n_ex + r_in) * seq).astype(f32)            # [B, T]
        pooled_ex = jnp.tanh(jnp.dot(jnp.dot(sel_ex, x, preferred_element_type=f32), wp,
                                     preferred_element_type=f32) + bp)
        pooled_in = jnp.tanh(jnp.dot(jnp.dot(sel_in, x, preferred_element_type=f32), wp,
                                     preferred_element_type=f32) + bp)
        # TODO(synk): dropout on pooled_in is identity (eval mode); training would use
        # pltpu.prng_seed / pltpu.prng_random_bits here.

        # ---- example-similarity softmax (EXACT divide -- feeds log + NLL) ----
        logits = lax.dot_general(pooled_in, pooled_ex, (((1,), (1,)), ((), ())),
                                 preferred_element_type=f32)          # [B, N_ex]
        logits = logits - jnp.max(logits, axis=-1, keepdims=True)
        e = jnp.exp(logits)
        probs = e / jnp.sum(e, axis=-1, keepdims=True)

        # ---- scatter-add over intent labels + NLL loss, lane-dense (128 lanes) ----
        ex_int = meta_ref[0:n_ex, 4:5]                                # [N_ex,1]
        scat = (lax.broadcasted_iota(jnp.int32, (n_ex, OUT_LANES), 1) == ex_int).astype(f32)
        intent_probs = 1e-6 + jnp.dot(probs, scat, preferred_element_type=f32)  # [B,128]

        lab = meta_ref[0:batch, 5:6]                                  # [B,1]
        lab_oh = (lax.broadcasted_iota(jnp.int32, (batch, OUT_LANES), 1) == lab).astype(f32)
        picked = jnp.sum(jnp.log(intent_probs) * lab_oh, axis=-1, keepdims=True)  # [B,1]
        loss = -jnp.sum(picked, axis=0, keepdims=True) * (1.0 / batch)            # [1,1]

        # single lane-dense output slab: rows 0..B-1 = intent_probs, any row >= B = loss
        out_ref[...] = jnp.broadcast_to(loss, (OUT_ROWS, OUT_LANES))
        out_ref[0:batch, :] = intent_probs

    return kernel


# ---------------- synthetic BERT parameters ----------------

def init_params(key):
    def nrm(k, shape):
        return 0.02 * jax.random.normal(k, shape, dtype=jnp.float32)

    keys = jax.random.split(key, 4 + LAYERS)
    params = {
        "word_emb": nrm(keys[0], (VOCAB, H)),
        "pos_emb": nrm(keys[1], (MAX_POS, H)),
        "type_emb": nrm(keys[2], (TYPES, H)),
        "emb_ln_g": jnp.ones((H,), jnp.float32),
        "emb_ln_b": jnp.zeros((H,), jnp.float32),
        "wp": nrm(keys[3], (H, H)),
        "bp": jnp.zeros((H,), jnp.float32),
        "layers": [],
    }
    for li in range(LAYERS):
        ks = jax.random.split(keys[4 + li], 6)
        params["layers"].append({
            "wq": nrm(ks[0], (H, H)), "bq": jnp.zeros((H,), jnp.float32),
            "wk": nrm(ks[1], (H, H)), "bk": jnp.zeros((H,), jnp.float32),
            "wv": nrm(ks[2], (H, H)), "bv": jnp.zeros((H,), jnp.float32),
            "wo": nrm(ks[3], (H, H)), "bo": jnp.zeros((H,), jnp.float32),
            "ln1_g": jnp.ones((H,), jnp.float32), "ln1_b": jnp.zeros((H,), jnp.float32),
            "wi": nrm(ks[4], (H, INTER)), "bi": jnp.zeros((INTER,), jnp.float32),
            "wo2": nrm(ks[5], (INTER, H)), "bo2": jnp.zeros((H,), jnp.float32),
            "ln2_g": jnp.ones((H,), jnp.float32), "ln2_b": jnp.zeros((H,), jnp.float32),
        })
    return params


def pack_params(params):
    """ONE-TIME packing of all weights into 3 slabs (wA, wB, vecs). 1/sqrt(DH) folded into Wq/bq."""
    scale = 1.0 / (DH ** 0.5)

    def row128(v):
        return jnp.pad(v, (0, 128 - v.shape[0])).reshape(1, 128)

    rows = [row128(params["emb_ln_g"]), row128(params["emb_ln_b"]), row128(params["bp"])]
    wa_list, wo2_list = [], []
    for l in params["layers"]:
        wqkv = jnp.concatenate([l["wq"] * scale, l["wk"], l["wv"]], axis=1)   # [H, 3H]
        wa_list.append(jnp.concatenate([wqkv, l["wo"], l["wi"]], axis=1))     # [H, 4H+INTER]
        wo2_list.append(l["wo2"])
        bqkv = jnp.concatenate([l["bq"] * scale, l["bk"], l["bv"]])
        rows += [row128(bqkv), row128(l["bo"]), row128(l["ln1_g"]), row128(l["ln1_b"]),
                 row128(l["bi"]), row128(l["bo2"]), row128(l["ln2_g"]), row128(l["ln2_b"])]
    wA = jnp.stack(wa_list)                                                   # [LAYERS, H, 4H+INTER]
    emb_tbl = jnp.concatenate(
        [params["word_emb"], params["pos_emb"], params["type_emb"]], axis=0)  # [68, H]
    wB = jnp.concatenate(wo2_list + [params["wp"], emb_tbl], axis=0)          # [L*INTER+H+68, H]
    vecs = jnp.stack(rows)                                                    # [19, 1, 128]
    return {"wA": wA, "wB": wB, "vecs": vecs}


# ---------------- full forward (matches ExampleIntentBertModel.forward) ----------------

@jax.jit
def forward(packed, input_ids, attention_mask, token_type_ids, intent_label,
            example_input, example_mask, example_token_types, example_intents):
    n_ex, S = example_input.shape
    B = input_ids.shape[0]
    nseq = n_ex + B
    T = nseq * S

    # per-call int metadata only (all weight packing is done once in pack_params)
    all_ids = jnp.concatenate([example_input, input_ids], axis=0).reshape(T).astype(jnp.int32)
    all_typ = jnp.concatenate([example_token_types, token_type_ids], axis=0).reshape(T).astype(jnp.int32)
    kvalid = jnp.concatenate([example_mask, attention_mask], axis=0).reshape(1, T).astype(jnp.int32)
    pos_col = jnp.tile(jnp.arange(S, dtype=jnp.int32), nseq)
    seq_col = jnp.repeat(jnp.arange(nseq, dtype=jnp.int32), S)
    zero = jnp.zeros((T,), jnp.int32)
    ex_col = zero.at[:n_ex].set(example_intents.astype(jnp.int32))
    lab_col = zero.at[:B].set(intent_label.astype(jnp.int32))
    meta = jnp.stack([all_ids, all_typ, pos_col, seq_col, ex_col, lab_col, zero, zero],
                     axis=1)                                                  # [T, 8]

    vmem = pl.BlockSpec(memory_space=pltpu.MemorySpace.VMEM)
    out = pl.pallas_call(
        _make_kernel(n_ex, B, S),
        out_shape=jax.ShapeDtypeStruct((OUT_ROWS, OUT_LANES), jnp.float32),
        in_specs=[vmem, vmem, vmem, vmem, vmem],
        out_specs=vmem,
        cost_estimate=pl.CostEstimate(flops=3_300_000, transcendentals=16_000,
                                      bytes_accessed=100_000),
    )(meta, kvalid, packed["wA"], packed["wB"], packed["vecs"])

    intent_probs = out[:B, :NUM_LABELS]
    intent_loss = out[B, 0]
    return intent_probs, intent_loss


if __name__ == "__main__":
    key = jax.random.PRNGKey(0)
    kp, k1, k2, k3, k4, k5 = jax.random.split(key, 6)

    params = init_params(kp)
    packed = pack_params(params)          # one-time weight packing (not per forward call)

    B, N_EX, S = 2, 4, 8
    input_ids = jax.random.randint(k1, (B, S), 0, VOCAB, dtype=jnp.int32)
    attention_mask = jnp.ones((B, S), jnp.int32).at[:, -2:].set(0)
    token_type_ids = jnp.zeros((B, S), jnp.int32)
    intent_label = jax.random.randint(k2, (B,), 0, NUM_LABELS, dtype=jnp.int32)

    example_input = jax.random.randint(k3, (N_EX, S), 0, VOCAB, dtype=jnp.int32)
    example_mask = jnp.ones((N_EX, S), jnp.int32)
    example_token_types = jnp.zeros((N_EX, S), jnp.int32)
    example_intents = jax.random.randint(k4, (N_EX,), 0, NUM_LABELS, dtype=jnp.int32)

    intent_probs, intent_loss = forward(
        packed, input_ids, attention_mask, token_type_ids, intent_label,
        example_input, example_mask, example_token_types, example_intents,
    )
    jax.block_until_ready((intent_probs, intent_loss))

    assert intent_probs.shape == (B, NUM_LABELS)
    assert bool(jnp.all(jnp.isfinite(intent_probs)))
    assert bool(jnp.isfinite(intent_loss))
    print("KERNEL_OK")
</pallas_src>

<mosaic_0001>
module attributes {stable_mosaic.version = 11 : i64} {
  func.func @kernel(%arg0: memref<48x8xi32, #tpu.memory_space<vmem>>, %arg1: memref<1x48xi32, #tpu.memory_space<vmem>>, %arg2: memref<2x32x192xf32, #tpu.memory_space<vmem>>, %arg3: memref<228x32xf32, #tpu.memory_space<vmem>>, %arg4: memref<19x1x128xf32, #tpu.memory_space<vmem>>, %arg5: memref<8x128xf32, #tpu.memory_space<vmem>>) attributes {dimension_semantics = [], scalar_prefetch = 0 : i64, scratch_operands = 0 : i64, tpu.core_type = #tpu.core_type<tc>} {
    %c0 = arith.constant 0 : index
    %c0_0 = arith.constant 0 : index
    %0 = vector.load %arg0[%c0, %c0_0] : memref<48x8xi32, #tpu.memory_space<vmem>>, vector<48x1xi32>
    %c0_1 = arith.constant 0 : index
    %c1 = arith.constant 1 : index
    %1 = vector.load %arg0[%c0_1, %c1] : memref<48x8xi32, #tpu.memory_space<vmem>>, vector<48x1xi32>
    %c0_2 = arith.constant 0 : index
    %c2 = arith.constant 2 : index
    %2 = vector.load %arg0[%c0_2, %c2] : memref<48x8xi32, #tpu.memory_space<vmem>>, vector<48x1xi32>
    %3 = tpu.iota {dimensions = array<i32: 1>} : vector<48x68xi32>
    %4 = vector.broadcast %0 : vector<48x1xi32> to vector<48x68xi32>
    %5 = arith.cmpi eq, %3, %4 : vector<48x68xi32>
    %c50_i32 = arith.constant 50 : i32
    %6 = vector.broadcast %c50_i32 : i32 to vector<48x1xi32>
    %7 = arith.addi %6, %2 : vector<48x1xi32>
    %8 = vector.broadcast %7 : vector<48x1xi32> to vector<48x68xi32>
    %9 = arith.cmpi eq, %3, %8 : vector<48x68xi32>
    %10 = arith.ori %5, %9 : vector<48x68xi1>
    %c66_i32 = arith.constant 66 : i32
    %11 = vector.broadcast %c66_i32 : i32 to vector<48x1xi32>
    %12 = arith.addi %11, %1 : vector<48x1xi32>
    %13 = vector.broadcast %12 : vector<48x1xi32> to vector<48x68xi32>
    %14 = arith.cmpi eq, %3, %13 : vector<48x68xi32>
    %15 = arith.ori %10, %14 : vector<48x68xi1>
    %16 = arith.extui %15 : vector<48x68xi1> to vector<48x68xi32>
    %17 = arith.sitofp %16 : vector<48x68xi32> to vector<48x68xf32>
    %c160 = arith.constant 160 : index
    %c0_3 = arith.constant 0 : index
    %18 = vector.load %arg3[%c160, %c0_3] : memref<228x32xf32, #tpu.memory_space<vmem>>, vector<68x32xf32>
    %cst = arith.constant dense<0.000000e+00> : vector<48x32xf32>
    %19 = tpu.matmul %17, %18, %cst {dimension_numbers = #tpu.dot_dimension_numbers<[1], [0], [0], [1], [0, 0, 1, 1], [], []>} : vector<48x68xf32>, vector<68x32xf32>, vector<48x32xf32> -> vector<48x32xf32>
    %c0_4 = arith.constant 0 : index
    %c0_5 = arith.constant 0 : index
    %c0_6 = arith.constant 0 : index
    %20 = vector.load %arg4[%c0_4, %c0_5, %c0_6] : memref<19x1x128xf32, #tpu.memory_space<vmem>>, vector<1x1x128xf32>
    %21 = vector.shape_cast %20 : vector<1x1x128xf32> to vector<1x128xf32>
    %22 = vector.extract_strided_slice %21 {offsets = [0, 0], sizes = [1, 32], strides = [1, 1]} : vector<1x128xf32> to vector<1x32xf32>
    %c1_7 = arith.constant 1 : index
    %c0_8 = arith.constant 0 : index
    %c0_9 = arith.constant 0 : index
    %23 = vector.load %arg4[%c1_7, %c0_8, %c0_9] : memref<19x1x128xf32, #tpu.memory_space<vmem>>, vector<1x1x128xf32>
    %24 = vector.shape_cast %23 : vector<1x1x128xf32> to vector<1x128xf32>
    %25 = vector.extract_strided_slice %24 {offsets = [0, 0], sizes = [1, 32], strides = [1, 1]} : vector<1x128xf32> to vector<1x32xf32>
    %cst_10 = arith.constant dense<0.000000e+00> : vector<48xf32>
    %26 = vector.multi_reduction <add>, %19, %cst_10 [1] : vector<48x32xf32> to vector<48xf32>
    %27 = vector.shape_cast %26 : vector<48xf32> to vector<48x1xf32>
    %cst_11 = arith.constant 3.200000e+01 : f32
    %28 = vector.broadcast %cst_11 : f32 to vector<48x1xf32>
    %29 = arith.divf %27, %28 : vector<48x1xf32>
    %30 = vector.broadcast %29 : vector<48x1xf32> to vector<48x32xf32>
    %31 = arith.subf %19, %30 : vector<48x32xf32>
    %32 = arith.mulf %31, %31 : vector<48x32xf32>
    %cst_12 = arith.constant dense<0.000000e+00> : vector<48xf32>
    %33 = vector.multi_reduction <add>, %32, %cst_12 [1] : vector<48x32xf32> to vector<48xf32>
    %34 = vector.shape_cast %33 : vector<48xf32> to vector<48x1xf32>
    %cst_13 = arith.constant 3.200000e+01 : f32
    %35 = vector.broadcast %cst_13 : f32 to vector<48x1xf32>
    %36 = arith.divf %34, %35 : vector<48x1xf32>
    %37 = vector.broadcast %29 : vector<48x1xf32> to vector<48x32xf32>
    %38 = arith.subf %19, %37 : vector<48x32xf32>
    %cst_14 = arith.constant 9.99999996E-13 : f32
    %39 = vector.broadcast %cst_14 : f32 to vector<48x1xf32>
    %40 = arith.addf %36, %39 : vector<48x1xf32>
    %41 = math.rsqrt %40 : vector<48x1xf32>
    %42 = vector.broadcast %41 : vector<48x1xf32> to vector<48x32xf32>
    %43 = arith.mulf %38, %42 : vector<48x32xf32>
    %44 = vector.broadcast %22 : vector<1x32xf32> to vector<48x32xf32>
    %45 = arith.mulf %43, %44 : vector<48x32xf32>
    %46 = vector.broadcast %25 : vector<1x32xf32> to vector<48x32xf32>
    %47 = arith.addf %45, %46 : vector<48x32xf32>
    %c0_15 = arith.constant 0 : index
    %c3 = arith.constant 3 : index
    %48 = vector.load %arg0[%c0_15, %c3] : memref<48x8xi32, #tpu.memory_space<vmem>>, vector<48x1xi32>
    %c8_i32 = arith.constant 8 : i32
    %49 = vector.broadcast %c8_i32 : i32 to vector<48x1xi32>
    %50 = arith.muli %48, %49 : vector<48x1xi32>
    %51 = tpu.iota {dimensions = array<i32: 1>} : vector<48x48xi32>
    %52 = vector.broadcast %50 : vector<48x1xi32> to vector<48x48xi32>
    %53 = arith.cmpi sge, %51, %52 : vector<48x48xi32>
    %c8_i32_16 = arith.constant 8 : i32
    %54 = vector.broadcast %c8_i32_16 : i32 to vector<48x1xi32>
    %55 = arith.addi %50, %54 : vector<48x1xi32>
    %56 = vector.broadcast %55 : vector<48x1xi32> to vector<48x48xi32>
    %57 = arith.cmpi slt, %51, %56 : vector<48x48xi32>
    %58 = arith.andi %53, %57 : vector<48x48xi1>
    %c0_17 = arith.constant 0 : index
    %c0_18 = arith.constant 0 : index
    %59 = vector.load %arg1[%c0_17, %c0_18] : memref<1x48xi32, #tpu.memory_space<vmem>>, vector<1x48xi32>
    %c0_i32 = arith.constant 0 : i32
    %60 = vector.broadcast %c0_i32 : i32 to vector<1x48xi32>
    %61 = arith.cmpi sgt, %59, %60 : vector<1x48xi32>
    %62 = vector.broadcast %61 : vector<1x48xi1> to vector<48x48xi1>
    %63 = arith.andi %58, %62 : vector<48x48xi1>
    %cst_19 = arith.constant 0.000000e+00 : f32
    %cst_20 = arith.constant -1.000000e+04 : f32
    %64 = vector.broadcast %cst_19 : f32 to vector<48x48xf32>
    %65 = vector.broadcast %cst_20 : f32 to vector<48x48xf32>
    %66 = arith.select %63, %64, %65 : vector<48x48xi1>, vector<48x48xf32>
    %67 = tpu.iota {dimensions = array<i32: 1>} : vector<48x32xi32>
    %c0_21 = arith.constant 0 : index
    %c0_22 = arith.constant 0 : index
    %c0_23 = arith.constant 0 : index
    %68 = vector.load %arg2[%c0_21, %c0_22, %c0_23] : memref<2x32x192xf32, #tpu.memory_space<vmem>>, vector<1x32x192xf32>
    %69 = vector.shape_cast %68 : vector<1x32x192xf32> to vector<32x192xf32>
    %70 = vector.extract_strided_slice %69 {offsets = [0, 0], sizes = [32, 96], strides = [1, 1]} : vector<32x192xf32> to vector<32x96xf32>
    %cst_24 = arith.constant dense<0.000000e+00> : vector<48x96xf32>
    %71 = tpu.matmul %47, %70, %cst_24 {dimension_numbers = #tpu.dot_dimension_numbers<[1], [0], [0], [1], [0, 0, 1, 1], [], []>} : vector<48x32xf32>, vector<32x96xf32>, vector<48x96xf32> -> vector<48x96xf32>
    %c3_25 = arith.constant 3 : index
    %c0_26 = arith.constant 0 : index
    %c0_27 = arith.constant 0 : index
    %72 = vector.load %arg4[%c3_25, %c0_26, %c0_27] : memref<19x1x128xf32, #tpu.memory_space<vmem>>, vector<1x1x128xf32>
    %73 = vector.shape_cast %72 : vector<1x1x128xf32> to vector<1x128xf32>
    %74 = vector.extract_strided_slice %73 {offsets = [0, 0], sizes = [1, 96], strides = [1, 1]} : vector<1x128xf32> to vector<1x96xf32>
    %75 = vector.broadcast %74 : vector<1x96xf32> to vector<48x96xf32>
    %76 = arith.addf %71, %75 : vector<48x96xf32>
    %77 = vector.extract_strided_slice %76 {offsets = [0, 64], sizes = [48, 32], strides = [1, 1]} : vector<48x96xf32> to vector<48x32xf32>
    %cst_28 = arith.constant 0.000000e+00 : f32
    %78 = vector.broadcast %cst_28 : f32 to vector<48x32xf32>
    %79 = vector.extract_strided_slice %76 {offsets = [0, 0], sizes = [48, 16], strides = [1, 1]} : vector<48x96xf32> to vector<48x16xf32>
    %80 = vector.extract_strided_slice %76 {offsets = [0, 32], sizes = [48, 16], strides = [1, 1]} : vector<48x96xf32> to vector<48x16xf32>
    %cst_29 = arith.constant dense<0.000000e+00> : vector<48x48xf32>
    %81 = tpu.matmul %79, %80, %cst_29 {dimension_numbers = #tpu.dot_dimension_numbers<[1], [1], [0], [0], [0, 0, 1, 0], [], []>} : vector<48x16xf32>, vector<48x16xf32>, vector<48x48xf32> -> vector<48x48xf32>
    %82 = arith.addf %81, %66 : vector<48x48xf32>
    %cst_30 = arith.constant dense<0xFF800000> : vector<48xf32>
    %83 = vector.multi_reduction <maximumf>, %82, %cst_30 [1] : vector<48x48xf32> to vector<48xf32>
    %84 = vector.shape_cast %83 : vector<48xf32> to vector<48x1xf32>
    %85 = vector.broadcast %84 : vector<48x1xf32> to vector<48x48xf32>
    %86 = arith.subf %82, %85 : vector<48x48xf32>
    %87 = math.exp %86 : vector<48x48xf32>
    %cst_31 = arith.constant dense<0.000000e+00> : vector<48xf32>
    %88 = vector.multi_reduction <add>, %87, %cst_31 [1] : vector<48x48xf32> to vector<48xf32>
    %89 = vector.shape_cast %88 : vector<48xf32> to vector<48x1xf32>
    %90 = tpu.reciprocal %89 {approx = true} : vector<48x1xf32> -> vector<48x1xf32>
    %91 = vector.broadcast %90 : vector<48x1xf32> to vector<48x48xf32>
    %92 = arith.mulf %87, %91 : vector<48x48xf32>
    %c0_i32_32 = arith.constant 0 : i32
    %93 = vector.broadcast %c0_i32_32 : i32 to vector<48x32xi32>
    %94 = arith.cmpi sge, %67, %93 : vector<48x32xi32>
    %c16_i32 = arith.constant 16 : i32
    %95 = vector.broadcast %c16_i32 : i32 to vector<48x32xi32>
    %96 = arith.cmpi slt, %67, %95 : vector<48x32xi32>
    %97 = arith.andi %94, %96 : vector<48x32xi1>
    %cst_33 = arith.constant 0.000000e+00 : f32
    %98 = vector.broadcast %cst_33 : f32 to vector<48x32xf32>
    %99 = arith.select %97, %77, %98 : vector<48x32xi1>, vector<48x32xf32>
    %cst_34 = arith.constant dense<0.000000e+00> : vector<48x32xf32>
    %100 = tpu.matmul %92, %99, %cst_34 {dimension_numbers = #tpu.dot_dimension_numbers<[1], [0], [0], [1], [0, 0, 1, 1], [], []>} : vector<48x48xf32>, vector<48x32xf32>, vector<48x32xf32> -> vector<48x32xf32>
    %101 = arith.addf %78, %100 : vector<48x32xf32>
    %102 = vector.extract_strided_slice %76 {offsets = [0, 16], sizes = [48, 16], strides = [1, 1]} : vector<48x96xf32> to vector<48x16xf32>
    %103 = vector.extract_strided_slice %76 {offsets = [0, 48], sizes = [48, 16], strides = [1, 1]} : vector<48x96xf32> to vector<48x16xf32>
    %cst_35 = arith.constant dense<0.000000e+00> : vector<48x48xf32>
    %104 = tpu.matmul %102, %103, %cst_35 {dimension_numbers = #tpu.dot_dimension_numbers<[1], [1], [0], [0], [0, 0, 1, 0], [], []>} : vector<48x16xf32>, vector<48x16xf32>, vector<48x48xf32> -> vector<48x48xf32>
    %105 = arith.addf %104, %66 : vector<48x48xf32>
    %cst_36 = arith.constant dense<0xFF800000> : vector<48xf32>
    %106 = vector.multi_reduction <maximumf>, %105, %cst_36 [1] : vector<48x48xf32> to vector<48xf32>
    %107 = vector.shape_cast %106 : vector<48xf32> to vector<48x1xf32>
    %108 = vector.broadcast %107 : vector<48x1xf32> to vector<48x48xf32>
    %109 = arith.subf %105, %108 : vector<48x48xf32>
    %110 = math.exp %109 : vector<48x48xf32>
    %cst_37 = arith.constant dense<0.000000e+00> : vector<48xf32>
    %111 = vector.multi_reduction <add>, %110, %cst_37 [1] : vector<48x48xf32> to vector<48xf32>
    %112 = vector.shape_cast %111 : vector<48xf32> to vector<48x1xf32>
    %113 = tpu.reciprocal %112 {approx = true} : vector<48x1xf32> -> vector<48x1xf32>
    %114 = vector.broadcast %113 : vector<48x1xf32> to vector<48x48xf32>
    %115 = arith.mulf %110, %114 : vector<48x48xf32>
    %c16_i32_38 = arith.constant 16 : i32
    %116 = vector.broadcast %c16_i32_38 : i32 to vector<48x32xi32>
    %117 = arith.cmpi sge, %67, %116 : vector<48x32xi32>
    %c32_i32 = arith.constant 32 : i32
    %118 = vector.broadcast %c32_i32 : i32 to vector<48x32xi32>
    %119 = arith.cmpi slt, %67, %118 : vector<48x32xi32>
    %120 = arith.andi %117, %119 : vector<48x32xi1>
    %cst_39 = arith.constant 0.000000e+00 : f32
    %121 = vector.broadcast %cst_39 : f32 to vector<48x32xf32>
    %122 = arith.select %120, %77, %121 : vector<48x32xi1>, vector<48x32xf32>
    %cst_40 = arith.constant dense<0.000000e+00> : vector<48x32xf32>
    %123 = tpu.matmul %115, %122, %cst_40 {dimension_numbers = #tpu.dot_dimension_numbers<[1], [0], [0], [1], [0, 0, 1, 1], [], []>} : vector<48x48xf32>, vector<48x32xf32>, vector<48x32xf32> -> vector<48x32xf32>
    %124 = arith.addf %101, %123 : vector<48x32xf32>
    %125 = vector.extract_strided_slice %69 {offsets = [0, 96], sizes = [32, 32], strides = [1, 1]} : vector<32x192xf32> to vector<32x32xf32>
    %cst_41 = arith.constant dense<0.000000e+00> : vector<48x32xf32>
    %126 = tpu.matmul %124, %125, %cst_41 {dimension_numbers = #tpu.dot_dimension_numbers<[1], [0], [0], [1], [0, 0, 1, 1], [], []>} : vector<48x32xf32>, vector<32x32xf32>, vector<48x32xf32> -> vector<48x32xf32>
    %c4 = arith.constant 4 : index
    %c0_42 = arith.constant 0 : index
    %c0_43 = arith.constant 0 : index
    %127 = vector.load %arg4[%c4, %c0_42, %c0_43] : memref<19x1x128xf32, #tpu.memory_space<vmem>>, vector<1x1x128xf32>
    %128 = vector.shape_cast %127 : vector<1x1x128xf32> to vector<1x128xf32>
    %129 = vector.extract_strided_slice %128 {offsets = [0, 0], sizes = [1, 32], strides = [1, 1]} : vector<1x128xf32> to vector<1x32xf32>
    %130 = vector.broadcast %129 : vector<1x32xf32> to vector<48x32xf32>
    %131 = arith.addf %126, %130 : vector<48x32xf32>
    %132 = arith.addf %47, %131 : vector<48x32xf32>
    %c5 = arith.constant 5 : index
    %c0_44 = arith.constant 0 : index
    %c0_45 = arith.constant 0 : index
    %133 = vector.load %arg4[%c5, %c0_44, %c0_45] : memref<19x1x128xf32, #tpu.memory_space<vmem>>, vector<1x1x128xf32>
    %134 = vector.shape_cast %133 : vector<1x1x128xf32> to vector<1x128xf32>
    %135 = vector.extract_strided_slice %134 {offsets = [0, 0], sizes = [1, 32], strides = [1, 1]} : vector<1x128xf32> to vector<1x32xf32>
    %c6 = arith.constant 6 : index
    %c0_46 = arith.constant 0 : index
    %c0_47 = arith.constant 0 : index
    %136 = vector.load %arg4[%c6, %c0_46, %c0_47] : memref<19x1x128xf32, #tpu.memory_space<vmem>>, vector<1x1x128xf32>
    %137 = vector.shape_cast %136 : vector<1x1x128xf32> to vector<1x128xf32>
    %138 = vector.extract_strided_slice %137 {offsets = [0, 0], sizes = [1, 32], strides = [1, 1]} : vector<1x128xf32> to vector<1x32xf32>
    %cst_48 = arith.constant dense<0.000000e+00> : vector<48xf32>
    %139 = vector.multi_reduction <add>, %132, %cst_48 [1] : vector<48x32xf32> to vector<48xf32>
    %140 = vector.shape_cast %139 : vector<48xf32> to vector<48x1xf32>
    %cst_49 = arith.constant 3.200000e+01 : f32
    %141 = vector.broadcast %cst_49 : f32 to vector<48x1xf32>
    %142 = arith.divf %140, %141 : vector<48x1xf32>
    %143 = vector.broadcast %142 : vector<48x1xf32> to vector<48x32xf32>
    %144 = arith.subf %132, %143 : vector<48x32xf32>
    %145 = arith.mulf %144, %144 : vector<48x32xf32>
    %cst_50 = arith.constant dense<0.000000e+00> : vector<48xf32>
    %146 = vector.multi_reduction <add>, %145, %cst_50 [1] : vector<48x32xf32> to vector<48xf32>
    %147 = vector.shape_cast %146 : vector<48xf32> to vector<48x1xf32>
    %cst_51 = arith.constant 3.200000e+01 : f32
    %148 = vector.broadcast %cst_51 : f32 to vector<48x1xf32>
    %149 = arith.divf %147, %148 : vector<48x1xf32>
    %150 = vector.broadcast %142 : vector<48x1xf32> to vector<48x32xf32>
    %151 = arith.subf %132, %150 : vector<48x32xf32>
    %cst_52 = arith.constant 9.99999996E-13 : f32
    %152 = vector.broadcast %cst_52 : f32 to vector<48x1xf32>
    %153 = arith.addf %149, %152 : vector<48x1xf32>
    %154 = math.rsqrt %153 : vector<48x1xf32>
    %155 = vector.broadcast %154 : vector<48x1xf32> to vector<48x32xf32>
    %156 = arith.mulf %151, %155 : vector<48x32xf32>
    %157 = vector.broadcast %135 : vector<1x32xf32> to vector<48x32xf32>
    %158 = arith.mulf %156, %157 : vector<48x32xf32>
    %159 = vector.broadcast %138 : vector<1x32xf32> to vector<48x32xf32>
    %160 = arith.addf %158, %159 : vector<48x32xf32>
    %161 = vector.extract_strided_slice %69 {offsets = [0, 128], sizes = [32, 64], strides = [1, 1]} : vector<32x192xf32> to vector<32x64xf32>
    %cst_53 = arith.constant dense<0.000000e+00> : vector<48x64xf32>
    %162 = tpu.matmul %160, %161, %cst_53 {dimension_numbers = #tpu.dot_dimension_numbers<[1], [0], [0], [1], [0, 0, 1, 1], [], []>} : vector<48x32xf32>, vector<32x64xf32>, vector<48x64xf32> -> vector<48x64xf32>
    %c7 = arith.constant 7 : index
    %c0_54 = arith.constant 0 : index
    %c0_55 = arith.constant 0 : index
    %163 = vector.load %arg4[%c7, %c0_54, %c0_55] : memref<19x1x128xf32, #tpu.memory_space<vmem>>, vector<1x1x128xf32>
    %164 = vector.shape_cast %163 : vector<1x1x128xf32> to vector<1x128xf32>
    %165 = vector.extract_strided_slice %164 {offsets = [0, 0], sizes = [1, 64], strides = [1, 1]} : vector<1x128xf32> to vector<1x64xf32>
    %166 = vector.broadcast %165 : vector<1x64xf32> to vector<48x64xf32>
    %167 = arith.addf %162, %166 : vector<48x64xf32>
    %cst_56 = arith.constant 5.000000e-01 : f32
    %168 = vector.broadcast %cst_56 : f32 to vector<48x64xf32>
    %169 = arith.mulf %168, %167 : vector<48x64xf32>
    %cst_57 = arith.constant 4.471500e-02 : f32
    %170 = vector.broadcast %cst_57 : f32 to vector<48x64xf32>
    %171 = arith.mulf %170, %167 : vector<48x64xf32>
    %172 = arith.mulf %171, %167 : vector<48x64xf32>
    %173 = arith.mulf %172, %167 : vector<48x64xf32>
    %174 = arith.addf %167, %173 : vector<48x64xf32>
    %cst_58 = arith.constant 0.797884583 : f32
    %175 = vector.broadcast %cst_58 : f32 to vector<48x64xf32>
    %176 = arith.mulf %175, %174 : vector<48x64xf32>
    %177 = math.tanh %176 : vector<48x64xf32>
    %cst_59 = arith.constant 1.000000e+00 : f32
    %178 = vector.broadcast %cst_59 : f32 to vector<48x64xf32>
    %179 = arith.addf %178, %177 : vector<48x64xf32>
    %180 = arith.mulf %169, %179 : vector<48x64xf32>
    %c0_60 = arith.constant 0 : index
    %c0_61 = arith.constant 0 : index
    %181 = vector.load %arg3[%c0_60, %c0_61] : memref<228x32xf32, #tpu.memory_space<vmem>>, vector<64x32xf32>
    %cst_62 = arith.constant dense<0.000000e+00> : vector<48x32xf32>
    %182 = tpu.matmul %180, %181, %cst_62 {dimension_numbers = #tpu.dot_dimension_numbers<[1], [0], [0], [1], [0, 0, 1, 1], [], []>} : vector<48x64xf32>, vector<64x32xf32>, vector<48x32xf32> -> vector<48x32xf32>
    %c8 = arith.constant 8 : index
    %c0_63 = arith.constant 0 : index
    %c0_64 = arith.constant 0 : index
    %183 = vector.load %arg4[%c8, %c0_63, %c0_64] : memref<19x1x128xf32, #tpu.memory_space<vmem>>, vector<1x1x128xf32>
    %184 = vector.shape_cast %183 : vector<1x1x128xf32> to vector<1x128xf32>
    %185 = vector.extract_strided_slice %184 {offsets = [0, 0], sizes = [1, 32], strides = [1, 1]} : vector<1x128xf32> to vector<1x32xf32>
    %186 = vector.broadcast %185 : vector<1x32xf32> to vector<48x32xf32>
    %187 = arith.addf %182, %186 : vector<48x32xf32>
    %188 = arith.addf %160, %187 : vector<48x32xf32>
    %c9 = arith.constant 9 : index
    %c0_65 = arith.constant 0 : index
    %c0_66 = arith.constant 0 : index
    %189 = vector.load %arg4[%c9, %c0_65, %c0_66] : memref<19x1x128xf32, #tpu.memory_space<vmem>>, vector<1x1x128xf32>
    %190 = vector.shape_cast %189 : vector<1x1x128xf32> to vector<1x128xf32>
    %191 = vector.extract_strided_slice %190 {offsets = [0, 0], sizes = [1, 32], strides = [1, 1]} : vector<1x128xf32> to vector<1x32xf32>
    %c10 = arith.constant 10 : index
    %c0_67 = arith.constant 0 : index
    %c0_68 = arith.constant 0 : index
    %192 = vector.load %arg4[%c10, %c0_67, %c0_68] : memref<19x1x128xf32, #tpu.memory_space<vmem>>, vector<1x1x128xf32>
    %193 = vector.shape_cast %192 : vector<1x1x128xf32> to vector<1x128xf32>
    %194 = vector.extract_strided_slice %193 {offsets = [0, 0], sizes = [1, 32], strides = [1, 1]} : vector<1x128xf32> to vector<1x32xf32>
    %cst_69 = arith.constant dense<0.000000e+00> : vector<48xf32>
    %195 = vector.multi_reduction <add>, %188, %cst_69 [1] : vector<48x32xf32> to vector<48xf32>
    %196 = vector.shape_cast %195 : vector<48xf32> to vector<48x1xf32>
    %cst_70 = arith.constant 3.200000e+01 : f32
    %197 = vector.broadcast %cst_70 : f32 to vector<48x1xf32>
    %198 = arith.divf %196, %197 : vector<48x1xf32>
    %199 = vector.broadcast %198 : vector<48x1xf32> to vector<48x32xf32>
    %200 = arith.subf %188, %199 : vector<48x32xf32>
    %201 = arith.mulf %200, %200 : vector<48x32xf32>
    %cst_71 = arith.constant dense<0.000000e+00> : vector<48xf32>
    %202 = vector.multi_reduction <add>, %201, %cst_71 [1] : vector<48x32xf32> to vector<48xf32>
    %203 = vector.shape_cast %202 : vector<48xf32> to vector<48x1xf32>
    %cst_72 = arith.constant 3.200000e+01 : f32
    %204 = vector.broadcast %cst_72 : f32 to vector<48x1xf32>
    %205 = arith.divf %203, %204 : vector<48x1xf32>
    %206 = vector.broadcast %198 : vector<48x1xf32> to vector<48x32xf32>
    %207 = arith.subf %188, %206 : vector<48x32xf32>
    %cst_73 = arith.constant 9.99999996E-13 : f32
    %208 = vector.broadcast %cst_73 : f32 to vector<48x1xf32>
    %209 = arith.addf %205, %208 : vector<48x1xf32>
    %210 = math.rsqrt %209 : vector<48x1xf32>
    %211 = vector.broadcast %210 : vector<48x1xf32> to vector<48x32xf32>
    %212 = arith.mulf %207, %211 : vector<48x32xf32>
    %213 = vector.broadcast %191 : vector<1x32xf32> to vector<48x32xf32>
    %214 = arith.mulf %212, %213 : vector<48x32xf32>
    %215 = vector.broadcast %194 : vector<1x32xf32> to vector<48x32xf32>
    %216 = arith.addf %214, %215 : vector<48x32xf32>
    %c1_74 = arith.constant 1 : index
    %c0_75 = arith.constant 0 : index
    %c0_76 = arith.constant 0 : index
    %217 = vector.load %arg2[%c1_74, %c0_75, %c0_76] : memref<2x32x192xf32, #tpu.memory_space<vmem>>, vector<1x32x192xf32>
    %218 = vector.shape_cast %217 : vector<1x32x192xf32> to vector<32x192xf32>
    %219 = vector.extract_strided_slice %218 {offsets = [0, 0], sizes = [32, 96], strides = [1, 1]} : vector<32x192xf32> to vector<32x96xf32>
    %cst_77 = arith.constant dense<0.000000e+00> : vector<48x96xf32>
    %220 = tpu.matmul %216, %219, %cst_77 {dimension_numbers = #tpu.dot_dimension_numbers<[1], [0], [0], [1], [0, 0, 1, 1], [], []>} : vector<48x32xf32>, vector<32x96xf32>, vector<48x96xf32> -> vector<48x96xf32>
    %c11 = arith.constant 11 : index
    %c0_78 = arith.constant 0 : index
    %c0_79 = arith.constant 0 : index
    %221 = vector.load %arg4[%c11, %c0_78, %c0_79] : memref<19x1x128xf32, #tpu.memory_space<vmem>>, vector<1x1x128xf32>
    %222 = vector.shape_cast %221 : vector<1x1x128xf32> to vector<1x128xf32>
    %223 = vector.extract_strided_slice %222 {offsets = [0, 0], sizes = [1, 96], strides = [1, 1]} : vector<1x128xf32> to vector<1x96xf32>
    %224 = vector.broadcast %223 : vector<1x96xf32> to vector<48x96xf32>
    %225 = arith.addf %220, %224 : vector<48x96xf32>
    %226 = vector.extract_strided_slice %225 {offsets = [0, 64], sizes = [48, 32], strides = [1, 1]} : vector<48x96xf32> to vector<48x32xf32>
    %cst_80 = arith.constant 0.000000e+00 : f32
    %227 = vector.broadcast %cst_80 : f32 to vector<48x32xf32>
    %228 = vector.extract_strided_slice %225 {offsets = [0, 0], sizes = [48, 16], strides = [1, 1]} : vector<48x96xf32> to vector<48x16xf32>
    %229 = vector.extract_strided_slice %225 {offsets = [0, 32], sizes = [48, 16], strides = [1, 1]} : vector<48x96xf32> to vector<48x16xf32>
    %cst_81 = arith.constant dense<0.000000e+00> : vector<48x48xf32>
    %230 = tpu.matmul %228, %229, %cst_81 {dimension_numbers = #tpu.dot_dimension_numbers<[1], [1], [0], [0], [0, 0, 1, 0], [], []>} : vector<48x16xf32>, vector<48x16xf32>, vector<48x48xf32> -> vector<48x48xf32>
    %231 = arith.addf %230, %66 : vector<48x48xf32>
    %cst_82 = arith.constant dense<0xFF800000> : vector<48xf32>
    %232 = vector.multi_reduction <maximumf>, %231, %cst_82 [1] : vector<48x48xf32> to vector<48xf32>
    %233 = vector.shape_cast %232 : vector<48xf32> to vector<48x1xf32>
    %234 = vector.broadcast %233 : vector<48x1xf32> to vector<48x48xf32>
    %235 = arith.subf %231, %234 : vector<48x48xf32>
    %236 = math.exp %235 : vector<48x48xf32>
    %cst_83 = arith.constant dense<0.000000e+00> : vector<48xf32>
    %237 = vector.multi_reduction <add>, %236, %cst_83 [1] : vector<48x48xf32> to vector<48xf32>
    %238 = vector.shape_cast %237 : vector<48xf32> to vector<48x1xf32>
    %239 = tpu.reciprocal %238 {approx = true} : vector<48x1xf32> -> vector<48x1xf32>
    %240 = vector.broadcast %239 : vector<48x1xf32> to vector<48x48xf32>
    %241 = arith.mulf %236, %240 : vector<48x48xf32>
    %c0_i32_84 = arith.constant 0 : i32
    %242 = vector.broadcast %c0_i32_84 : i32 to vector<48x32xi32>
    %243 = arith.cmpi sge, %67, %242 : vector<48x32xi32>
    %c16_i32_85 = arith.constant 16 : i32
    %244 = vector.broadcast %c16_i32_85 : i32 to vector<48x32xi32>
    %245 = arith.cmpi slt, %67, %244 : vector<48x32xi32>
    %246 = arith.andi %243, %245 : vector<48x32xi1>
    %cst_86 = arith.constant 0.000000e+00 : f32
    %247 = vector.broadcast %cst_86 : f32 to vector<48x32xf32>
    %248 = arith.select %246, %226, %247 : vector<48x32xi1>, vector<48x32xf32>
    %cst_87 = arith.constant dense<0.000000e+00> : vector<48x32xf32>
    %249 = tpu.matmul %241, %248, %cst_87 {dimension_numbers = #tpu.dot_dimension_numbers<[1], [0], [0], [1], [0, 0, 1, 1], [], []>} : vector<48x48xf32>, vector<48x32xf32>, vector<48x32xf32> -> vector<48x32xf32>
    %250 = arith.addf %227, %249 : vector<48x32xf32>
    %251 = vector.extract_strided_slice %225 {offsets = [0, 16], sizes = [48, 16], strides = [1, 1]} : vector<48x96xf32> to vector<48x16xf32>
    %252 = vector.extract_strided_slice %225 {offsets = [0, 48], sizes = [48, 16], strides = [1, 1]} : vector<48x96xf32> to vector<48x16xf32>
    %cst_88 = arith.constant dense<0.000000e+00> : vector<48x48xf32>
    %253 = tpu.matmul %251, %252, %cst_88 {dimension_numbers = #tpu.dot_dimension_numbers<[1], [1], [0], [0], [0, 0, 1, 0], [], []>} : vector<48x16xf32>, vector<48x16xf32>, vector<48x48xf32> -> vector<48x48xf32>
    %254 = arith.addf %253, %66 : vector<48x48xf32>
    %cst_89 = arith.constant dense<0xFF800000> : vector<48xf32>
    %255 = vector.multi_reduction <maximumf>, %254, %cst_89 [1] : vector<48x48xf32> to vector<48xf32>
    %256 = vector.shape_cast %255 : vector<48xf32> to vector<48x1xf32>
    %257 = vector.broadcast %256 : vector<48x1xf32> to vector<48x48xf32>
    %258 = arith.subf %254, %257 : vector<48x48xf32>
    %259 = math.exp %258 : vector<48x48xf32>
    %cst_90 = arith.constant dense<0.000000e+00> : vector<48xf32>
    %260 = vector.multi_reduction <add>, %259, %cst_90 [1] : vector<48x48xf32> to vector<48xf32>
    %261 = vector.shape_cast %260 : vector<48xf32> to vector<48x1xf32>
    %262 = tpu.reciprocal %261 {approx = true} : vector<48x1xf32> -> vector<48x1xf32>
    %263 = vector.broadcast %262 : vector<48x1xf32> to vector<48x48xf32>
    %264 = arith.mulf %259, %263 : vector<48x48xf32>
    %c16_i32_91 = arith.constant 16 : i32
    %265 = vector.broadcast %c16_i32_91 : i32 to vector<48x32xi32>
    %266 = arith.cmpi sge, %67, %265 : vector<48x32xi32>
    %c32_i32_92 = arith.constant 32 : i32
    %267 = vector.broadcast %c32_i32_92 : i32 to vector<48x32xi32>
    %268 = arith.cmpi slt, %67, %267 : vector<48x32xi32>
    %269 = arith.andi %266, %268 : vector<48x32xi1>
    %cst_93 = arith.constant 0.000000e+00 : f32
    %270 = vector.broadcast %cst_93 : f32 to vector<48x32xf32>
    %271 = arith.select %269, %226, %270 : vector<48x32xi1>, vector<48x32xf32>
    %cst_94 = arith.constant dense<0.000000e+00> : vector<48x32xf32>
    %272 = tpu.matmul %264, %271, %cst_94 {dimension_numbers = #tpu.dot_dimension_numbers<[1], [0], [0], [1], [0, 0, 1, 1], [], []>} : vector<48x48xf32>, vector<48x32xf32>, vector<48x32xf32> -> vector<48x32xf32>
    %273 = arith.addf %250, %272 : vector<48x32xf32>
    %274 = vector.extract_strided_slice %218 {offsets = [0, 96], sizes = [32, 32], strides = [1, 1]} : vector<32x192xf32> to vector<32x32xf32>
    %cst_95 = arith.constant dense<0.000000e+00> : vector<48x32xf32>
    %275 = tpu.matmul %273, %274, %cst_95 {dimension_numbers = #tpu.dot_dimension_numbers<[1], [0], [0], [1], [0, 0, 1, 1], [], []>} : vector<48x32xf32>, vector<32x32xf32>, vector<48x32xf32> -> vector<48x32xf32>
    %c12 = arith.constant 12 : index
    %c0_96 = arith.constant 0 : index
    %c0_97 = arith.constant 0 : index
    %276 = vector.load %arg4[%c12, %c0_96, %c0_97] : memref<19x1x128xf32, #tpu.memory_space<vmem>>, vector<1x1x128xf32>
    %277 = vector.shape_cast %276 : vector<1x1x128xf32> to vector<1x128xf32>
    %278 = vector.extract_strided_slice %277 {offsets = [0, 0], sizes = [1, 32], strides = [1, 1]} : vector<1x128xf32> to vector<1x32xf32>
    %279 = vector.broadcast %278 : vector<1x32xf32> to vector<48x32xf32>
    %280 = arith.addf %275, %279 : vector<48x32xf32>
    %281 = arith.addf %216, %280 : vector<48x32xf32>
    %c13 = arith.constant 13 : index
    %c0_98 = arith.constant 0 : index
    %c0_99 = arith.constant 0 : index
    %282 = vector.load %arg4[%c13, %c0_98, %c0_99] : memref<19x1x128xf32, #tpu.memory_space<vmem>>, vector<1x1x128xf32>
    %283 = vector.shape_cast %282 : vector<1x1x128xf32> to vector<1x128xf32>
    %284 = vector.extract_strided_slice %283 {offsets = [0, 0], sizes = [1, 32], strides = [1, 1]} : vector<1x128xf32> to vector<1x32xf32>
    %c14 = arith.constant 14 : index
    %c0_100 = arith.constant 0 : index
    %c0_101 = arith.constant 0 : index
    %285 = vector.load %arg4[%c14, %c0_100, %c0_101] : memref<19x1x128xf32, #tpu.memory_space<vmem>>, vector<1x1x128xf32>
    %286 = vector.shape_cast %285 : vector<1x1x128xf32> to vector<1x128xf32>
    %287 = vector.extract_strided_slice %286 {offsets = [0, 0], sizes = [1, 32], strides = [1, 1]} : vector<1x128xf32> to vector<1x32xf32>
    %cst_102 = arith.constant dense<0.000000e+00> : vector<48xf32>
    %288 = vector.multi_reduction <add>, %281, %cst_102 [1] : vector<48x32xf32> to vector<48xf32>
    %289 = vector.shape_cast %288 : vector<48xf32> to vector<48x1xf32>
    %cst_103 = arith.constant 3.200000e+01 : f32
    %290 = vector.broadcast %cst_103 : f32 to vector<48x1xf32>
    %291 = arith.divf %289, %290 : vector<48x1xf32>
    %292 = vector.broadcast %291 : vector<48x1xf32> to vector<48x32xf32>
    %293 = arith.subf %281, %292 : vector<48x32xf32>
    %294 = arith.mulf %293, %293 : vector<48x32xf32>
    %cst_104 = arith.constant dense<0.000000e+00> : vector<48xf32>
    %295 = vector.multi_reduction <add>, %294, %cst_104 [1] : vector<48x32xf32> to vector<48xf32>
    %296 = vector.shape_cast %295 : vector<48xf32> to vector<48x1xf32>
    %cst_105 = arith.constant 3.200000e+01 : f32
    %297 = vector.broadcast %cst_105 : f32 to vector<48x1xf32>
    %298 = arith.divf %296, %297 : vector<48x1xf32>
    %299 = vector.broadcast %291 : vector<48x1xf32> to vector<48x32xf32>
    %300 = arith.subf %281, %299 : vector<48x32xf32>
    %cst_106 = arith.constant 9.99999996E-13 : f32
    %301 = vector.broadcast %cst_106 : f32 to vector<48x1xf32>
    %302 = arith.addf %298, %301 : vector<48x1xf32>
    %303 = math.rsqrt %302 : vector<48x1xf32>
    %304 = vector.broadcast %303 : vector<48x1xf32> to vector<48x32xf32>
    %305 = arith.mulf %300, %304 : vector<48x32xf32>
    %306 = vector.broadcast %284 : vector<1x32xf32> to vector<48x32xf32>
    %307 = arith.mulf %305, %306 : vector<48x32xf32>
    %308 = vector.broadcast %287 : vector<1x32xf32> to vector<48x32xf32>
    %309 = arith.addf %307, %308 : vector<48x32xf32>
    %310 = vector.extract_strided_slice %218 {offsets = [0, 128], sizes = [32, 64], strides = [1, 1]} : vector<32x192xf32> to vector<32x64xf32>
    %cst_107 = arith.constant dense<0.000000e+00> : vector<48x64xf32>
    %311 = tpu.matmul %309, %310, %cst_107 {dimension_numbers = #tpu.dot_dimension_numbers<[1], [0], [0], [1], [0, 0, 1, 1], [], []>} : vector<48x32xf32>, vector<32x64xf32>, vector<48x64xf32> -> vector<48x64xf32>
    %c15 = arith.constant 15 : index
    %c0_108 = arith.constant 0 : index
    %c0_109 = arith.constant 0 : index
    %312 = vector.load %arg4[%c15, %c0_108, %c0_109] : memref<19x1x128xf32, #tpu.memory_space<vmem>>, vector<1x1x128xf32>
    %313 = vector.shape_cast %312 : vector<1x1x128xf32> to vector<1x128xf32>
    %314 = vector.extract_strided_slice %313 {offsets = [0, 0], sizes = [1, 64], strides = [1, 1]} : vector<1x128xf32> to vector<1x64xf32>
    %315 = vector.broadcast %314 : vector<1x64xf32> to vector<48x64xf32>
    %316 = arith.addf %311, %315 : vector<48x64xf32>
    %cst_110 = arith.constant 5.000000e-01 : f32
    %317 = vector.broadcast %cst_110 : f32 to vector<48x64xf32>
    %318 = arith.mulf %317, %316 : vector<48x64xf32>
    %cst_111 = arith.constant 4.471500e-02 : f32
    %319 = vector.broadcast %cst_111 : f32 to vector<48x64xf32>
    %320 = arith.mulf %319, %316 : vector<48x64xf32>
    %321 = arith.mulf %320, %316 : vector<48x64xf32>
    %322 = arith.mulf %321, %316 : vector<48x64xf32>
    %323 = arith.addf %316, %322 : vector<48x64xf32>
    %cst_112 = arith.constant 0.797884583 : f32
    %324 = vector.broadcast %cst_112 : f32 to vector<48x64xf32>
    %325 = arith.mulf %324, %323 : vector<48x64xf32>
    %326 = math.tanh %325 : vector<48x64xf32>
    %cst_113 = arith.constant 1.000000e+00 : f32
    %327 = vector.broadcast %cst_113 : f32 to vector<48x64xf32>
    %328 = arith.addf %327, %326 : vector<48x64xf32>
    %329 = arith.mulf %318, %328 : vector<48x64xf32>
    %c64 = arith.constant 64 : index
    %c0_114 = arith.constant 0 : index
    %330 = vector.load %arg3[%c64, %c0_114] : memref<228x32xf32, #tpu.memory_space<vmem>>, vector<64x32xf32>
    %cst_115 = arith.constant dense<0.000000e+00> : vector<48x32xf32>
    %331 = tpu.matmul %329, %330, %cst_115 {dimension_numbers = #tpu.dot_dimension_numbers<[1], [0], [0], [1], [0, 0, 1, 1], [], []>} : vector<48x64xf32>, vector<64x32xf32>, vector<48x32xf32> -> vector<48x32xf32>
    %c16 = arith.constant 16 : index
    %c0_116 = arith.constant 0 : index
    %c0_117 = arith.constant 0 : index
    %332 = vector.load %arg4[%c16, %c0_116, %c0_117] : memref<19x1x128xf32, #tpu.memory_space<vmem>>, vector<1x1x128xf32>
    %333 = vector.shape_cast %332 : vector<1x1x128xf32> to vector<1x128xf32>
    %334 = vector.extract_strided_slice %333 {offsets = [0, 0], sizes = [1, 32], strides = [1, 1]} : vector<1x128xf32> to vector<1x32xf32>
    %335 = vector.broadcast %334 : vector<1x32xf32> to vector<48x32xf32>
    %336 = arith.addf %331, %335 : vector<48x32xf32>
    %337 = arith.addf %309, %336 : vector<48x32xf32>
    %c17 = arith.constant 17 : index
    %c0_118 = arith.constant 0 : index
    %c0_119 = arith.constant 0 : index
    %338 = vector.load %arg4[%c17, %c0_118, %c0_119] : memref<19x1x128xf32, #tpu.memory_space<vmem>>, vector<1x1x128xf32>
    %339 = vector.shape_cast %338 : vector<1x1x128xf32> to vector<1x128xf32>
    %340 = vector.extract_strided_slice %339 {offsets = [0, 0], sizes = [1, 32], strides = [1, 1]} : vector<1x128xf32> to vector<1x32xf32>
    %c18 = arith.constant 18 : index
    %c0_120 = arith.constant 0 : index
    %c0_121 = arith.constant 0 : index
    %341 = vector.load %arg4[%c18, %c0_120, %c0_121] : memref<19x1x128xf32, #tpu.memory_space<vmem>>, vector<1x1x128xf32>
    %342 = vector.shape_cast %341 : vector<1x1x128xf32> to vector<1x128xf32>
    %343 = vector.extract_strided_slice %342 {offsets = [0, 0], sizes = [1, 32], strides = [1, 1]} : vector<1x128xf32> to vector<1x32xf32>
    %cst_122 = arith.constant dense<0.000000e+00> : vector<48xf32>
    %344 = vector.multi_reduction <add>, %337, %cst_122 [1] : vector<48x32xf32> to vector<48xf32>
    %345 = vector.shape_cast %344 : vector<48xf32> to vector<48x1xf32>
    %cst_123 = arith.constant 3.200000e+01 : f32
    %346 = vector.broadcast %cst_123 : f32 to vector<48x1xf32>
    %347 = arith.divf %345, %346 : vector<48x1xf32>
    %348 = vector.broadcast %347 : vector<48x1xf32> to vector<48x32xf32>
    %349 = arith.subf %337, %348 : vector<48x32xf32>
    %350 = arith.mulf %349, %349 : vector<48x32xf32>
    %cst_124 = arith.constant dense<0.000000e+00> : vector<48xf32>
    %351 = vector.multi_reduction <add>, %350, %cst_124 [1] : vector<48x32xf32> to vector<48xf32>
    %352 = vector.shape_cast %351 : vector<48xf32> to vector<48x1xf32>
    %cst_125 = arith.constant 3.200000e+01 : f32
    %353 = vector.broadcast %cst_125 : f32 to vector<48x1xf32>
    %354 = arith.divf %352, %353 : vector<48x1xf32>
    %355 = vector.broadcast %347 : vector<48x1xf32> to vector<48x32xf32>
    %356 = arith.subf %337, %355 : vector<48x32xf32>
    %cst_126 = arith.constant 9.99999996E-13 : f32
    %357 = vector.broadcast %cst_126 : f32 to vector<48x1xf32>
    %358 = arith.addf %354, %357 : vector<48x1xf32>
    %359 = math.rsqrt %358 : vector<48x1xf32>
    %360 = vector.broadcast %359 : vector<48x1xf32> to vector<48x32xf32>
    %361 = arith.mulf %356, %360 : vector<48x32xf32>
    %362 = vector.broadcast %340 : vector<1x32xf32> to vector<48x32xf32>
    %363 = arith.mulf %361, %362 : vector<48x32xf32>
    %364 = vector.broadcast %343 : vector<1x32xf32> to vector<48x32xf32>
    %365 = arith.addf %363, %364 : vector<48x32xf32>
    %c128 = arith.constant 128 : index
    %c0_127 = arith.constant 0 : index
    %366 = vector.load %arg3[%c128, %c0_127] : memref<228x32xf32, #tpu.memory_space<vmem>>, vector<32x32xf32>
    %c2_128 = arith.constant 2 : index
    %c0_129 = arith.constant 0 : index
    %c0_130 = arith.constant 0 : index
    %367 = vector.load %arg4[%c2_128, %c0_129, %c0_130] : memref<19x1x128xf32, #tpu.memory_space<vmem>>, vector<1x1x128xf32>
    %368 = vector.shape_cast %367 : vector<1x1x128xf32> to vector<1x128xf32>
    %369 = vector.extract_strided_slice %368 {offsets = [0, 0], sizes = [1, 32], strides = [1, 1]} : vector<1x128xf32> to vector<1x32xf32>
    %370 = tpu.iota {dimensions = array<i32: 0>} : vector<4x48xi32>
    %371 = tpu.iota {dimensions = array<i32: 1>} : vector<4x48xi32>
    %c8_i32_131 = arith.constant 8 : i32
    %372 = vector.broadcast %c8_i32_131 : i32 to vector<4x48xi32>
    %373 = arith.muli %370, %372 : vector<4x48xi32>
    %374 = arith.cmpi eq, %371, %373 : vector<4x48xi32>
    %375 = arith.extui %374 : vector<4x48xi1> to vector<4x48xi32>
    %376 = arith.sitofp %375 : vector<4x48xi32> to vector<4x48xf32>
    %377 = tpu.iota {dimensions = array<i32: 0>} : vector<2x48xi32>
    %378 = tpu.iota {dimensions = array<i32: 1>} : vector<2x48xi32>
    %c4_i32 = arith.constant 4 : i32
    %379 = vector.broadcast %c4_i32 : i32 to vector<2x48xi32>
    %380 = arith.addi %379, %377 : vector<2x48xi32>
    %c8_i32_132 = arith.constant 8 : i32
    %381 = vector.broadcast %c8_i32_132 : i32 to vector<2x48xi32>
    %382 = arith.muli %380, %381 : vector<2x48xi32>
    %383 = arith.cmpi eq, %378, %382 : vector<2x48xi32>
    %384 = arith.extui %383 : vector<2x48xi1> to vector<2x48xi32>
    %385 = arith.sitofp %384 : vector<2x48xi32> to vector<2x48xf32>
    %cst_133 = arith.constant dense<0.000000e+00> : vector<4x32xf32>
    %386 = tpu.matmul %376, %365, %cst_133 {dimension_numbers = #tpu.dot_dimension_numbers<[1], [0], [0], [1], [0, 0, 1, 1], [], []>} : vector<4x48xf32>, vector<48x32xf32>, vector<4x32xf32> -> vector<4x32xf32>
    %cst_134 = arith.constant dense<0.000000e+00> : vector<4x32xf32>
    %387 = tpu.matmul %386, %366, %cst_134 {dimension_numbers = #tpu.dot_dimension_numbers<[1], [0], [0], [1], [0, 0, 1, 1], [], []>} : vector<4x32xf32>, vector<32x32xf32>, vector<4x32xf32> -> vector<4x32xf32>
    %388 = vector.broadcast %369 : vector<1x32xf32> to vector<4x32xf32>
    %389 = arith.addf %387, %388 : vector<4x32xf32>
    %390 = math.tanh %389 : vector<4x32xf32>
    %cst_135 = arith.constant dense<0.000000e+00> : vector<2x32xf32>
    %391 = tpu.matmul %385, %365, %cst_135 {dimension_numbers = #tpu.dot_dimension_numbers<[1], [0], [0], [1], [0, 0, 1, 1], [], []>} : vector<2x48xf32>, vector<48x32xf32>, vector<2x32xf32> -> vector<2x32xf32>
    %cst_136 = arith.constant dense<0.000000e+00> : vector<2x32xf32>
    %392 = tpu.matmul %391, %366, %cst_136 {dimension_numbers = #tpu.dot_dimension_numbers<[1], [0], [0], [1], [0, 0, 1, 1], [], []>} : vector<2x32xf32>, vector<32x32xf32>, vector<2x32xf32> -> vector<2x32xf32>
    %393 = vector.broadcast %369 : vector<1x32xf32> to vector<2x32xf32>
    %394 = arith.addf %392, %393 : vector<2x32xf32>
    %395 = math.tanh %394 : vector<2x32xf32>
    %cst_137 = arith.constant dense<0.000000e+00> : vector<2x4xf32>
    %396 = tpu.matmul %395, %390, %cst_137 {dimension_numbers = #tpu.dot_dimension_numbers<[1], [1], [0], [0], [0, 0, 1, 0], [], []>} : vector<2x32xf32>, vector<4x32xf32>, vector<2x4xf32> -> vector<2x4xf32>
    %cst_138 = arith.constant dense<0xFF800000> : vector<2xf32>
    %397 = vector.multi_reduction <maximumf>, %396, %cst_138 [1] : vector<2x4xf32> to vector<2xf32>
    %398 = vector.shape_cast %397 : vector<2xf32> to vector<2x1xf32>
    %399 = vector.broadcast %398 : vector<2x1xf32> to vector<2x4xf32>
    %400 = arith.subf %396, %399 : vector<2x4xf32>
    %401 = math.exp %400 : vector<2x4xf32>
    %cst_139 = arith.constant dense<0.000000e+00> : vector<2xf32>
    %402 = vector.multi_reduction <add>, %401, %cst_139 [1] : vector<2x4xf32> to vector<2xf32>
    %403 = vector.shape_cast %402 : vector<2xf32> to vector<2x1xf32>
    %404 = vector.broadcast %403 : vector<2x1xf32> to vector<2x4xf32>
    %405 = arith.divf %401, %404 : vector<2x4xf32>
    %c0_140 = arith.constant 0 : index
    %c4_141 = arith.constant 4 : index
    %406 = vector.load %arg0[%c0_140, %c4_141] : memref<48x8xi32, #tpu.memory_space<vmem>>, vector<4x1xi32>
    %407 = tpu.iota {dimensions = array<i32: 1>} : vector<4x128xi32>
    %408 = vector.broadcast %406 : vector<4x1xi32> to vector<4x128xi32>
    %409 = arith.cmpi eq, %407, %408 : vector<4x128xi32>
    %410 = arith.extui %409 : vector<4x128xi1> to vector<4x128xi32>
    %411 = arith.sitofp %410 : vector<4x128xi32> to vector<4x128xf32>
    %cst_142 = arith.constant dense<0.000000e+00> : vector<2x128xf32>
    %412 = tpu.matmul %405, %411, %cst_142 {dimension_numbers = #tpu.dot_dimension_numbers<[1], [0], [0], [1], [0, 0, 1, 1], [], []>} : vector<2x4xf32>, vector<4x128xf32>, vector<2x128xf32> -> vector<2x128xf32>
    %cst_143 = arith.constant 9.99999997E-7 : f32
    %413 = vector.broadcast %cst_143 : f32 to vector<2x128xf32>
    %414 = arith.addf %413, %412 : vector<2x128xf32>
    %c0_144 = arith.constant 0 : index
    %c5_145 = arith.constant 5 : index
    %415 = vector.load %arg0[%c0_144, %c5_145] : memref<48x8xi32, #tpu.memory_space<vmem>>, vector<2x1xi32>
    %416 = tpu.iota {dimensions = array<i32: 1>} : vector<2x128xi32>
    %417 = vector.broadcast %415 : vector<2x1xi32> to vector<2x128xi32>
    %418 = arith.cmpi eq, %416, %417 : vector<2x128xi32>
    %419 = arith.extui %418 : vector<2x128xi1> to vector<2x128xi32>
    %420 = arith.sitofp %419 : vector<2x128xi32> to vector<2x128xf32>
    %421 = math.log %414 : vector<2x128xf32>
    %422 = arith.mulf %421, %420 : vector<2x128xf32>
    %cst_146 = arith.constant dense<0.000000e+00> : vector<2xf32>
    %423 = vector.multi_reduction <add>, %422, %cst_146 [1] : vector<2x128xf32> to vector<2xf32>
    %424 = vector.shape_cast %423 : vector<2xf32> to vector<2x1xf32>
    %cst_147 = arith.constant dense<0.000000e+00> : vector<1xf32>
    %425 = vector.multi_reduction <add>, %424, %cst_147 [0] : vector<2x1xf32> to vector<1xf32>
    %426 = vector.shape_cast %425 : vector<1xf32> to vector<1x1xf32>
    %cst_148 = arith.constant 0.000000e+00 : f32
    %427 = vector.broadcast %cst_148 : f32 to vector<1x1xf32>
    %428 = arith.subf %427, %426 : vector<1x1xf32>
    %cst_149 = arith.constant 5.000000e-01 : f32
    %429 = vector.broadcast %cst_149 : f32 to vector<1x1xf32>
    %430 = arith.mulf %428, %429 : vector<1x1xf32>
    %431 = vector.shape_cast %430 : vector<1x1xf32> to vector<1x1xf32>
    %432 = vector.broadcast %431 : vector<1x1xf32> to vector<8x128xf32>
    %c0_150 = arith.constant 0 : index
    %c0_151 = arith.constant 0 : index
    %433 = vector.load %arg5[%c0_150, %c0_151] : memref<8x128xf32, #tpu.memory_space<vmem>>, vector<8x128xf32>
    tpu.vector_store %arg5[%c0_150, %c0_151], %432 {strides = array<i32>} : memref<8x128xf32, #tpu.memory_space<vmem>>, vector<8x128xf32>,
    %c0_152 = arith.constant 0 : index
    %c0_153 = arith.constant 0 : index
    %434 = vector.load %arg5[%c0_152, %c0_153] : memref<8x128xf32, #tpu.memory_space<vmem>>, vector<2x128xf32>
    tpu.vector_store %arg5[%c0_152, %c0_153], %414 {strides = array<i32>} : memref<8x128xf32, #tpu.memory_space<vmem>>, vector<2x128xf32>,
    return
  }
}

</mosaic_0001>

<llo_original>
// kernel: forward.1
$region0: #{forward.1}
  #allocation0 [shape = 'u32[]', space=smem, size = 0x4, offset = 0x4, fixed_abs, tag = 'smem constant byte address 0x4 - core index']
  #allocation1 [shape = 'u32[144,128]{1,0:T(1,128)}', space=vmem, size = 0x12000, scoped, tag = 'internal scratch']
  %s0 = inlined_call_operand.vmem [shape: s32[48,8], index: 0, kind: input, shape index: {}]
  %s1 = inlined_call_operand.vmem [shape: s32[1,48], index: 1, kind: input, shape index: {}]
  %s2 = inlined_call_operand.vmem [shape: f32[2,32,192], index: 2, kind: input, shape index: {}]
  %s3 = inlined_call_operand.vmem [shape: f32[228,32], index: 3, kind: input, shape index: {}]
  %s4 = inlined_call_operand.vmem [shape: f32[19,1,128], index: 4, kind: input, shape index: {}]
  %s5 = inlined_call_operand.vmem [shape: f32[8,128], index: 5, kind: output, shape index: {}]
  %s6 = sld [smem:[#allocation0]]
  $region30: #{forward.1} parent=0
    _
  %s8 = ssub.s32 1, %s6
  %s9 = scalar_select 0, %s8, %s6
  // Predicated region
  $region2: #{forward.1} parent=0 // pred_check
    _
  $region3: #{forward.1} parent=0 // pred_check_branch
    %11 = sbr.rel (0) target = $region5
  $region4: #{forward.1} parent=0 // pred_region
    _
  $region5: #{forward.1} parent=0 // pred_fallthru
    _
  // Predicated region
  $region6: #{forward.1} parent=0 // pred_check
    _
  $region7: #{forward.1} parent=0 // pred_check_branch
    %13 = sbr.rel (0) target = $region9
  $region8: #{forward.1} parent=0 // pred_region
    _
  $region9: #{forward.1} parent=0 // pred_fallthru
    _
  // Predicated region
  $region10: #{forward.1} parent=0 // pred_check
    _
  $region11: #{forward.1} parent=0 // pred_check_branch
    %15 = sbr.rel (0) target = $region13
  $region12: #{forward.1} parent=0 // pred_region
    _
  $region13: #{forward.1} parent=0 // pred_fallthru
    _
  // Predicated region
  $region14: #{forward.1} parent=0 // pred_check
    _
  $region15: #{forward.1} parent=0 // pred_check_branch
    %17 = sbr.rel (0) target = $region17
  $region16: #{forward.1} parent=0 // pred_region
    _
  $region17: #{forward.1} parent=0 // pred_fallthru
    _
  // Predicated region
  $region18: #{forward.1} parent=0 // pred_check
    _
  $region19: #{forward.1} parent=0 // pred_check_branch
    %19 = sbr.rel (0) target = $region21
  $region20: #{forward.1} parent=0 // pred_region
    _
  $region21: #{forward.1} parent=0 // pred_fallthru
    _
  %v20 = vld [vmem:[%s0] sm:$0xff]
  %v21 = vld [vmem:[%s0 + $0x8] sm:$0xff]
  %v22 = vld [vmem:[%s0 + $0x10] sm:$0xff]
  %v23 = vld [vmem:[%s0 + $0x18] sm:$0xff]
  %v24 = vld [vmem:[%s0 + $0x20] sm:$0xff]
  %v25 = vld [vmem:[%s0 + $0x28] sm:$0xff]
  %v26 = vlaneseq
  %v27 = vand.u32 %v26, 127
  %28 = vset.pattern.permute.xlu0 0
  %29 = vperm.xlu0 %28, %v20
  %v30 = vpop.permute.xlu0 %29
  %31 = vset.pattern.permute.xlu0 0
  %32 = vperm.xlu0 %31, %v21
  %v33 = vpop.permute.xlu0 %32
  %34 = vset.pattern.permute.xlu0 0
  %35 = vperm.xlu0 %34, %v22
  %v36 = vpop.permute.xlu0 %35
  %37 = vset.pattern.permute.xlu0 0
  %38 = vperm.xlu0 %37, %v23
  %v39 = vpop.permute.xlu0 %38
  %40 = vset.pattern.permute.xlu0 0
  %41 = vperm.xlu0 %40, %v24
  %v42 = vpop.permute.xlu0 %41
  %43 = vset.pattern.permute.xlu0 0
  %44 = vperm.xlu0 %43, %v25
  %v45 = vpop.permute.xlu0 %44
  %vm46 = vcmp.eq.s32.totalorder %v27, %v30
  %vm47 = vcmp.eq.s32.totalorder %v27, %v33
  %vm48 = vcmp.eq.s32.totalorder %v27, %v36
  %vm49 = vcmp.eq.s32.totalorder %v27, %v39
  %vm50 = vcmp.eq.s32.totalorder %v27, %v42
  %vm51 = vcmp.eq.s32.totalorder %v27, %v45
  %v52 = vadd.s32 %v20, 50
  %v53 = vadd.s32 %v21, 50
  %v54 = vadd.s32 %v22, 50
  %v55 = vadd.s32 %v23, 50
  %v56 = vadd.s32 %v24, 50
  %v57 = vadd.s32 %v25, 50
  %58 = vset.pattern.permute.xlu0 2
  %59 = vperm.xlu0 %58, %v52
  %v60 = vpop.permute.xlu0 %59
  %61 = vset.pattern.permute.xlu0 2
  %62 = vperm.xlu0 %61, %v53
  %v63 = vpop.permute.xlu0 %62
  %64 = vset.pattern.permute.xlu0 2
  %65 = vperm.xlu0 %64, %v54
  %v66 = vpop.permute.xlu0 %65
  %67 = vset.pattern.permute.xlu0 2
  %68 = vperm.xlu0 %67, %v55
  %v69 = vpop.permute.xlu0 %68
  %70 = vset.pattern.permute.xlu0 2
  %71 = vperm.xlu0 %70, %v56
  %v72 = vpop.permute.xlu0 %71
  %73 = vset.pattern.permute.xlu0 2
  %74 = vperm.xlu0 %73, %v57
  %v75 = vpop.permute.xlu0 %74
  %vm76 = vcmp.eq.s32.totalorder %v27, %v60
  %vm77 = vcmp.eq.s32.totalorder %v27, %v63
  %vm78 = vcmp.eq.s32.totalorder %v27, %v66
  %vm79 = vcmp.eq.s32.totalorder %v27, %v69
  %vm80 = vcmp.eq.s32.totalorder %v27, %v72
  %vm81 = vcmp.eq.s32.totalorder %v27, %v75
  %vm82 = vmor %vm46, %vm76
  %vm83 = vmor %vm47, %vm77
  %vm84 = vmor %vm48, %vm78
  %vm85 = vmor %vm49, %vm79
  %vm86 = vmor %vm50, %vm80
  %vm87 = vmor %vm51, %vm81
  %v88 = vadd.s32 %v20, 66
  %v89 = vadd.s32 %v21, 66
  %v90 = vadd.s32 %v22, 66
  %v91 = vadd.s32 %v23, 66
  %v92 = vadd.s32 %v24, 66
  %v93 = vadd.s32 %v25, 66
  %94 = vset.pattern.permute.xlu0 1
  %95 = vperm.xlu0 %94, %v88
  %v96 = vpop.permute.xlu0 %95
  %97 = vset.pattern.permute.xlu0 1
  %98 = vperm.xlu0 %97, %v89
  %v99 = vpop.permute.xlu0 %98
  %100 = vset.pattern.permute.xlu0 1
  %101 = vperm.xlu0 %100, %v90
  %v102 = vpop.permute.xlu0 %101
  %103 = vset.pattern.permute.xlu0 1
  %104 = vperm.xlu0 %103, %v91
  %v105 = vpop.permute.xlu0 %104
  %106 = vset.pattern.permute.xlu0 1
  %107 = vperm.xlu0 %106, %v92
  %v108 = vpop.permute.xlu0 %107
  %109 = vset.pattern.permute.xlu0 1
  %110 = vperm.xlu0 %109, %v93
  %v111 = vpop.permute.xlu0 %110
  %vm112 = vcmp.eq.s32.totalorder %v27, %v96
  %vm113 = vcmp.eq.s32.totalorder %v27, %v99
  %vm114 = vcmp.eq.s32.totalorder %v27, %v102
  %vm115 = vcmp.eq.s32.totalorder %v27, %v105
  %vm116 = vcmp.eq.s32.totalorder %v27, %v108
  %vm117 = vcmp.eq.s32.totalorder %v27, %v111
  %vm118 = vmor %vm82, %vm112
  %vm119 = vmor %vm83, %vm113
  %vm120 = vmor %vm84, %vm114
  %vm121 = vmor %vm85, %vm115
  %vm122 = vmor %vm86, %vm116
  %vm123 = vmor %vm87, %vm117
  %v124 = vsel %vm118, 1, 0
  %v125 = vsel %vm119, 1, 0
  %v126 = vsel %vm120, 1, 0
  %v127 = vsel %vm121, 1, 0
  %v128 = vsel %vm122, 1, 0
  %v129 = vsel %vm123, 1, 0
  %v130 = vcvt.s32.f32 %v124
  %v131 = vcvt.s32.f32 %v125
  %v132 = vcvt.s32.f32 %v126
  %v133 = vcvt.s32.f32 %v127
  %v134 = vcvt.s32.f32 %v128
  %v135 = vcvt.s32.f32 %v129
  %v136 = vld [vmem:[%s3 + $0xa0] sm:$0xff]
  %v137 = vld [vmem:[%s3 + $0xa8] sm:$0xff]
  %v138 = vld [vmem:[%s3 + $0xb0] sm:$0xff]
  %v139 = vld [vmem:[%s3 + $0xb8] sm:$0xff]
  %v140 = vld [vmem:[%s3 + $0xc0] sm:$0xff]
  %v141 = vld [vmem:[%s3 + $0xc8] sm:$0xff]
  %v142 = vld [vmem:[%s3 + $0xd0] sm:$0xff]
  %v143 = vld [vmem:[%s3 + $0xd8] sm:$0xff]
  %v144 = vld [vmem:[%s3 + $0xe0] sm:$0xf]
  %vm145 = vcmask 556032
  %v147 = vsel %vm145, %v130, 0
  %v150 = vsel %vm145, %v131, 0
  %v153 = vsel %vm145, %v132, 0
  %v156 = vsel %vm145, %v133, 0
  %v159 = vsel %vm145, %v134, 0
  %v162 = vsel %vm145, %v135, 0
  %vm164 = vcmask 1043456
  %v166 = vsel %vm164, %v144, 0
  %168 = vmatprep.subr.mxu0 0.0
  %169 = vmatpush1.msra.mxu0 0.0
  %170 = vmatprep.subr.mxu0 0.0
  %171 = vmatpush1.msra.mxu0 0.0
  %172 = vmatprep.subr.mxu0 0.0
  %173 = vmatpush1.msra.mxu0 0.0
  %174 = vmatprep.subr.mxu0 0.0
  %175 = vmatpush1.msra.mxu0 0.0
  %176 = vmatprep.subr.mxu0 0.0
  %177 = vmatpush1.msra.mxu0 0.0
  %178 = vmatprep.subr.mxu0 0.0
  %179 = vmatpush1.msra.mxu0 0.0
  %180 = vmatprep.subr.mxu0 0.0
  %181 = vmatpush1.msra.mxu0 0.0
  %182 = vmatprep.subr.mxu0 0.0
  %183 = vmatpush1.msra.mxu0 %v166
  %184 = vmatprep.subr.mxu0 0.0
  %185 = vmatpush1.msra.mxu0 %v143
  %186 = vmatprep.subr.mxu0 0.0
  %187 = vmatpush1.msra.mxu0 %v142
  %188 = vmatprep.subr.mxu0 0.0
  %189 = vmatpush1.msra.mxu0 %v141
  %190 = vmatprep.subr.mxu0 0.0
  %191 = vmatpush1.msra.mxu0 %v140
  %192 = vmatprep.subr.mxu0 0.0
  %193 = vmatpush1.msra.mxu0 %v139
  %194 = vmatprep.subr.mxu0 0.0
  %195 = vmatpush1.msra.mxu0 %v138
  %196 = vmatprep.subr.mxu0 0.0
  %197 = vmatpush1.msra.mxu0 %v137
  %198 = vmatprep.subr.mxu0 0.0
  %199 = vmatpush1.msra.mxu0 %v136
  %200 = vmatprep.subr.mxu0 0.0
  %201 = vmatpush2.msra.mxu0 0.0
  %202 = vmatprep.subr.mxu0 0.0
  %203 = vmatpush2.msra.mxu0 0.0
  %204 = vmatprep.subr.mxu0 0.0
  %205 = vmatpush2.msra.mxu0 0.0
  %206 = vmatprep.subr.mxu0 0.0
  %207 = vmatpush2.msra.mxu0 0.0
  %208 = vmatprep.subr.mxu0 0.0
  %209 = vmatpush2.msra.mxu0 0.0
  %210 = vmatprep.subr.mxu0 0.0
  %211 = vmatpush2.msra.mxu0 0.0
  %212 = vmatprep.subr.mxu0 0.0
  %213 = vmatpush2.msra.mxu0 0.0
  %214 = vmatprep.subr.mxu0 0.0
  %215 = vmatpush2.msra.mxu0 0.0
  %216 = vmatprep.subr.mxu0 0.0
  %217 = vmatpush2.msra.mxu0 0.0
  %218 = vmatprep.subr.mxu0 0.0
  %219 = vmatpush2.msra.mxu0 0.0
  %220 = vmatprep.subr.mxu0 0.0
  %221 = vmatpush2.msra.mxu0 0.0
  %222 = vmatprep.subr.mxu0 0.0
  %223 = vmatpush2.msra.mxu0 0.0
  %224 = vmatprep.subr.mxu0 0.0
  %225 = vmatpush2.msra.mxu0 0.0
  %226 = vmatprep.subr.mxu0 0.0
  %227 = vmatpush2.msra.mxu0 0.0
  %228 = vmatprep.subr.mxu0 0.0
  %229 = vmatpush2.msra.mxu0 0.0
  %230 = vmatprep.subr.mxu0 0.0
  %231 = vmatpush2.msra.mxu0 0.0
  %232 = vmatprep.mubr.f32.mxu0 0.0
  %233 = vmatmul.mubr.f32.gmra.mxu0 %v147
  %v234 = vpop.f32.mrf.mxu0
  %v235 = vadd.f32 0.0, %v234
  %v236 = vpop.f32.mrf.mxu0
  %237 = vmatprep.mubr.f32.mxu0 0.0
  %238 = vmatmul.mubr.f32.gmra.mxu0 %v150
  %v239 = vpop.f32.mrf.mxu0
  %v240 = vadd.f32 0.0, %v239
  %v241 = vpop.f32.mrf.mxu0
  %242 = vmatprep.mubr.f32.mxu0 0.0
  %243 = vmatmul.mubr.f32.gmra.mxu0 %v153
  %v244 = vpop.f32.mrf.mxu0
  %v245 = vadd.f32 0.0, %v244
  %v246 = vpop.f32.mrf.mxu0
  %247 = vmatprep.mubr.f32.mxu0 0.0
  %248 = vmatmul.mubr.f32.gmra.mxu0 %v156
  %v249 = vpop.f32.mrf.mxu0
  %v250 = vadd.f32 0.0, %v249
  %v251 = vpop.f32.mrf.mxu0
  %252 = vmatprep.mubr.f32.mxu0 0.0
  %253 = vmatmul.mubr.f32.gmra.mxu0 %v159
  %v254 = vpop.f32.mrf.mxu0
  %v255 = vadd.f32 0.0, %v254
  %v256 = vpop.f32.mrf.mxu0
  %257 = vmatprep.mubr.f32.mxu0 0.0
  %258 = vmatmul.mubr.f32.gmra.mxu0 %v162
  %v259 = vpop.f32.mrf.mxu0
  %v260 = vadd.f32 0.0, %v259
  %v261 = vpop.f32.mrf.mxu0
  %262 = vdwg.mxu0
  %v263 = vld [vmem:[%s4] sm:$0x1]
  %s264 = scalar_lea.vmem %s4, 1
  %v265 = vld [vmem:[%s264] sm:$0x1]
  %vm266 = vcmask 261120
  %v267 = vsel %vm266, %v235, 0.0
  %268 = vadd.xlane.f32.xlu0 %v267
  %v269 = vpop.xlane.xlu0 %268
  %v270 = vsel %vm266, %v240, 0.0
  %271 = vadd.xlane.f32.xlu0 %v270
  %v272 = vpop.xlane.xlu0 %271
  %v273 = vsel %vm266, %v245, 0.0
  %274 = vadd.xlane.f32.xlu0 %v273
  %v275 = vpop.xlane.xlu0 %274
  %v276 = vsel %vm266, %v250, 0.0
  %277 = vadd.xlane.f32.xlu0 %v276
  %v278 = vpop.xlane.xlu0 %277
  %v279 = vsel %vm266, %v255, 0.0
  %280 = vadd.xlane.f32.xlu0 %v279
  %v281 = vpop.xlane.xlu0 %280
  %v282 = vsel %vm266, %v260, 0.0
  %283 = vadd.xlane.f32.xlu0 %v282
  %v284 = vpop.xlane.xlu0 %283
  %v285 = vrcp.pop 32.0
  %v286 = vmul.f32 %v269, %v285
  %v287 = vmul.f32 %v272, %v285
  %v288 = vmul.f32 %v275, %v285
  %v289 = vmul.f32 %v278, %v285
  %v290 = vmul.f32 %v281, %v285
  %v291 = vmul.f32 %v284, %v285
  %v292 = vsub.f32 %v235, %v286
  %v293 = vsub.f32 %v240, %v287
  %v294 = vsub.f32 %v245, %v288
  %v295 = vsub.f32 %v250, %v289
  %v296 = vsub.f32 %v255, %v290
  %v297 = vsub.f32 %v260, %v291
  %v298 = vmul.f32 %v292, %v292
  %v299 = vmul.f32 %v293, %v293
  %v300 = vmul.f32 %v294, %v294
  %v301 = vmul.f32 %v295, %v295
  %v302 = vmul.f32 %v296, %v296
  %v303 = vmul.f32 %v297, %v297
  %v304 = vsel %vm266, %v298, 0.0
  %305 = vadd.xlane.f32.xlu0 %v304
  %v306 = vpop.xlane.xlu0 %305
  %v307 = vsel %vm266, %v299, 0.0
  %308 = vadd.xlane.f32.xlu0 %v307
  %v309 = vpop.xlane.xlu0 %308
  %v310 = vsel %vm266, %v300, 0.0
  %311 = vadd.xlane.f32.xlu0 %v310
  %v312 = vpop.xlane.xlu0 %311
  %v313 = vsel %vm266, %v301, 0.0
  %314 = vadd.xlane.f32.xlu0 %v313
  %v315 = vpop.xlane.xlu0 %314
  %v316 = vsel %vm266, %v302, 0.0
  %317 = vadd.xlane.f32.xlu0 %v316
  %v318 = vpop.xlane.xlu0 %317
  %v319 = vsel %vm266, %v303, 0.0
  %320 = vadd.xlane.f32.xlu0 %v319
  %v321 = vpop.xlane.xlu0 %320
  %v322 = vmul.f32 %v306, %v285
  %v323 = vmul.f32 %v309, %v285
  %v324 = vmul.f32 %v312, %v285
  %v325 = vmul.f32 %v315, %v285
  %v326 = vmul.f32 %v318, %v285
  %v327 = vmul.f32 %v321, %v285
  %v328 = vadd.f32 %v322, 1e-12
  %v329 = vadd.f32 %v323, 1e-12
  %v330 = vadd.f32 %v324, 1e-12
  %v331 = vadd.f32 %v325, 1e-12
  %v332 = vadd.f32 %v326, 1e-12
  %v333 = vadd.f32 %v327, 1e-12
  %v334 = vrsqrt.pop %v328
  %v335 = vrsqrt.pop %v329
  %v336 = vrsqrt.pop %v330
  %v337 = vrsqrt.pop %v331
  %v338 = vrsqrt.pop %v332
  %v339 = vrsqrt.pop %v333
  %v340 = vmul.f32 %v292, %v334
  %v341 = vmul.f32 %v293, %v335
  %v342 = vmul.f32 %v294, %v336
  %v343 = vmul.f32 %v295, %v337
  %v344 = vmul.f32 %v296, %v338
  %v345 = vmul.f32 %v297, %v339
  %v347 = vlaneseq
  %v348 = vshrl.u32 %v347, 7
  %v349 = vsub.s32 0, %v348
  %v350 = vrot.slane %v263, %v349
  %v352 = vmul.f32 %v340, %v350
  %v353 = vmul.f32 %v341, %v350
  %v354 = vmul.f32 %v342, %v350
  %v355 = vmul.f32 %v343, %v350
  %v356 = vmul.f32 %v344, %v350
  %v357 = vmul.f32 %v345, %v350
  %v359 = vlaneseq
  %v360 = vshrl.u32 %v359, 7
  %v361 = vsub.s32 0, %v360
  %v362 = vrot.slane %v265, %v361
  %v364 = vadd.f32 %v352, %v362
  %v365 = vadd.f32 %v353, %v362
  %v366 = vadd.f32 %v354, %v362
  %v367 = vadd.f32 %v355, %v362
  %v368 = vadd.f32 %v356, %v362
  %v369 = vadd.f32 %v357, %v362
  %v370 = vmul.u32 %v20, 8
  %v371 = vmul.u32 %v21, 8
  %v372 = vmul.u32 %v22, 8
  %v373 = vmul.u32 %v23, 8
  %v374 = vmul.u32 %v24, 8
  %v375 = vmul.u32 %v25, 8
  %376 = vset.pattern.permute.xlu0 3
  %377 = vperm.xlu0 %376, %v370
  %v378 = vpop.permute.xlu0 %377
  %379 = vset.pattern.permute.xlu0 3
  %380 = vperm.xlu0 %379, %v371
  %v381 = vpop.permute.xlu0 %380
  %382 = vset.pattern.permute.xlu0 3
  %383 = vperm.xlu0 %382, %v372
  %v384 = vpop.permute.xlu0 %383
  %385 = vset.pattern.permute.xlu0 3
  %386 = vperm.xlu0 %385, %v373
  %v387 = vpop.permute.xlu0 %386
  %388 = vset.pattern.permute.xlu0 3
  %389 = vperm.xlu0 %388, %v374
  %v390 = vpop.permute.xlu0 %389
  %391 = vset.pattern.permute.xlu0 3
  %392 = vperm.xlu0 %391, %v375
  %v393 = vpop.permute.xlu0 %392
  %vm394 = vcmp.ge.s32.totalorder %v27, %v378
  %vm395 = vcmp.ge.s32.totalorder %v27, %v381
  %vm396 = vcmp.ge.s32.totalorder %v27, %v384
  %vm397 = vcmp.ge.s32.totalorder %v27, %v387
  %vm398 = vcmp.ge.s32.totalorder %v27, %v390
  %vm399 = vcmp.ge.s32.totalorder %v27, %v393
  %v400 = vadd.s32 %v370, 8
  %v401 = vadd.s32 %v371, 8
  %v402 = vadd.s32 %v372, 8
  %v403 = vadd.s32 %v373, 8
  %v404 = vadd.s32 %v374, 8
  %v405 = vadd.s32 %v375, 8
  %406 = vset.pattern.permute.xlu0 3
  %407 = vperm.xlu0 %406, %v400
  %v408 = vpop.permute.xlu0 %407
  %409 = vset.pattern.permute.xlu0 3
  %410 = vperm.xlu0 %409, %v401
  %v411 = vpop.permute.xlu0 %410
  %412 = vset.pattern.permute.xlu0 3
  %413 = vperm.xlu0 %412, %v402
  %v414 = vpop.permute.xlu0 %413
  %415 = vset.pattern.permute.xlu0 3
  %416 = vperm.xlu0 %415, %v403
  %v417 = vpop.permute.xlu0 %416
  %418 = vset.pattern.permute.xlu0 3
  %419 = vperm.xlu0 %418, %v404
  %v420 = vpop.permute.xlu0 %419
  %421 = vset.pattern.permute.xlu0 3
  %422 = vperm.xlu0 %421, %v405
  %v423 = vpop.permute.xlu0 %422
  %vm424 = vcmp.lt.s32.totalorder %v27, %v408
  %vm425 = vcmp.lt.s32.totalorder %v27, %v411
  %vm426 = vcmp.lt.s32.totalorder %v27, %v414
  %vm427 = vcmp.lt.s32.totalorder %v27, %v417
  %vm428 = vcmp.lt.s32.totalorder %v27, %v420
  %vm429 = vcmp.lt.s32.totalorder %v27, %v423
  %vm430 = vmand %vm394, %vm424
  %vm431 = vmand %vm395, %vm425
  %vm432 = vmand %vm396, %vm426
  %vm433 = vmand %vm397, %vm427
  %vm434 = vmand %vm398, %vm428
  %vm435 = vmand %vm399, %vm429
  %v436 = vld [vmem:[%s1] sm:$0x1]
  %vm437 = vcmp.gt.s32.totalorder %v436, 0
  %v438 = vsel %vm437, 1, 0
  %v439 = vlaneseq
  %v440 = vshrl.u32 %v439, 7
  %v441 = vsub.s32 0, %v440
  %v442 = vrot.slane %v438, %v441
  %vm443 = vcmp.eq.s32.totalorder %v442, 1
  %vm444 = vmand %vm430, %vm443
  %vm445 = vmand %vm431, %vm443
  %vm446 = vmand %vm432, %vm443
  %vm447 = vmand %vm433, %vm443
  %vm448 = vmand %vm434, %vm443
  %vm449 = vmand %vm435, %vm443
  %v450 = vsel %vm444, 0.0, -10000.0
  %v451 = vsel %vm445, 0.0, -10000.0
  %v452 = vsel %vm446, 0.0, -10000.0
  %v453 = vsel %vm447, 0.0, -10000.0
  %v454 = vsel %vm448, 0.0, -10000.0
  %v455 = vsel %vm449, 0.0, -10000.0
  %v456 = vld [vmem:[%s2] sm:$0xff]
  %v457 = vld [vmem:[%s2 + $0x8] sm:$0xff]
  %v458 = vld [vmem:[%s2 + $0x10] sm:$0xff]
  %v459 = vld [vmem:[%s2 + $0x18] sm:$0xff]
  %v460 = vld [vmem:[%s2 + $0x20] sm:$0xff]
  %v461 = vld [vmem:[%s2 + $0x28] sm:$0xff]
  %v462 = vld [vmem:[%s2 + $0x30] sm:$0xff]
  %v463 = vld [vmem:[%s2 + $0x38] sm:$0xff]
  %s464 = scalar_lea.vmem %s4, 3
  %v465 = vld [vmem:[%s464] sm:$0x1]
  %v467 = vlaneseq
  %v468 = vshrl.u32 %v467, 7
  %v469 = vsub.s32 0, %v468
  %v470 = vrot.slane %v465, %v469
  %v473 = vsel %vm266, %v364, 0
  %v476 = vsel %vm266, %v365, 0
  %v479 = vsel %vm266, %v366, 0
  %v482 = vsel %vm266, %v367, 0
  %v485 = vsel %vm266, %v368, 0
  %v488 = vsel %vm266, %v369, 0
  %490 = vmatprep.subr.mxu0 0.0
  %491 = vmatpush1.msra.mxu0 0.0
  %492 = vmatprep.subr.mxu0 0.0
  %493 = vmatpush1.msra.mxu0 0.0
  %494 = vmatprep.subr.mxu0 0.0
  %495 = vmatpush1.msra.mxu0 0.0
  %496 = vmatprep.subr.mxu0 0.0
  %497 = vmatpush1.msra.mxu0 0.0
  %498 = vmatprep.subr.mxu0 0.0
  %499 = vmatpush1.msra.mxu0 0.0
  %500 = vmatprep.subr.mxu0 0.0
  %501 = vmatpush1.msra.mxu0 0.0
  %502 = vmatprep.subr.mxu0 0.0
  %503 = vmatpush1.msra.mxu0 0.0
  %504 = vmatprep.subr.mxu0 0.0
  %505 = vmatpush1.msra.mxu0 0.0
  %506 = vmatprep.subr.mxu0 0.0
  %507 = vmatpush1.msra.mxu0 0.0
  %508 = vmatprep.subr.mxu0 0.0
  %509 = vmatpush1.msra.mxu0 0.0
  %510 = vmatprep.subr.mxu0 0.0
  %511 = vmatpush1.msra.mxu0 0.0
  %512 = vmatprep.subr.mxu0 0.0
  %513 = vmatpush1.msra.mxu0 0.0
  %514 = vmatprep.subr.mxu0 0.0
  %515 = vmatpush1.msra.mxu0 %v462
  %516 = vmatprep.subr.mxu0 0.0
  %517 = vmatpush1.msra.mxu0 %v460
  %518 = vmatprep.subr.mxu0 0.0
  %519 = vmatpush1.msra.mxu0 %v458
  %520 = vmatprep.subr.mxu0 0.0
  %521 = vmatpush1.msra.mxu0 %v456
  %522 = vmatprep.subr.mxu0 0.0
  %523 = vmatpush2.msra.mxu0 0.0
  %524 = vmatprep.subr.mxu0 0.0
  %525 = vmatpush2.msra.mxu0 0.0
  %526 = vmatprep.subr.mxu0 0.0
  %527 = vmatpush2.msra.mxu0 0.0
  %528 = vmatprep.subr.mxu0 0.0
  %529 = vmatpush2.msra.mxu0 0.0
  %530 = vmatprep.subr.mxu0 0.0
  %531 = vmatpush2.msra.mxu0 0.0
  %532 = vmatprep.subr.mxu0 0.0
  %533 = vmatpush2.msra.mxu0 0.0
  %534 = vmatprep.subr.mxu0 0.0
  %535 = vmatpush2.msra.mxu0 0.0
  %536 = vmatprep.subr.mxu0 0.0
  %537 = vmatpush2.msra.mxu0 0.0
  %538 = vmatprep.subr.mxu0 0.0
  %539 = vmatpush2.msra.mxu0 0.0
  %540 = vmatprep.subr.mxu0 0.0
  %541 = vmatpush2.msra.mxu0 0.0
  %542 = vmatprep.subr.mxu0 0.0
  %543 = vmatpush2.msra.mxu0 0.0
  %544 = vmatprep.subr.mxu0 0.0
  %545 = vmatpush2.msra.mxu0 0.0
  %546 = vmatprep.subr.mxu0 0.0
  %547 = vmatpush2.msra.mxu0 0.0
  %548 = vmatprep.subr.mxu0 0.0
  %549 = vmatpush2.msra.mxu0 0.0
  %550 = vmatprep.subr.mxu0 0.0
  %551 = vmatpush2.msra.mxu0 0.0
  %552 = vmatprep.subr.mxu0 0.0
  %553 = vmatpush2.msra.mxu0 0.0
  %554 = vmatprep.mubr.f32.mxu0 0.0
  %555 = vmatmul.mubr.f32.gmra.mxu0 %v473
  %v556 = vpop.f32.mrf.mxu0
  %v557 = vadd.f32 %v470, %v556
  %v558 = vpop.f32.mrf.mxu0
  %559 = vmatprep.mubr.f32.mxu0 0.0
  %560 = vmatmul.mubr.f32.gmra.mxu0 %v476
  %v561 = vpop.f32.mrf.mxu0
  %v562 = vadd.f32 %v470, %v561
  %v563 = vpop.f32.mrf.mxu0
  %564 = vmatprep.mubr.f32.mxu0 0.0
  %565 = vmatmul.mubr.f32.gmra.mxu0 %v479
  %v566 = vpop.f32.mrf.mxu0
  %v567 = vadd.f32 %v470, %v566
  %v568 = vpop.f32.mrf.mxu0
  %569 = vmatprep.mubr.f32.mxu0 0.0
  %570 = vmatmul.mubr.f32.gmra.mxu0 %v482
  %v571 = vpop.f32.mrf.mxu0
  %v572 = vadd.f32 %v470, %v571
  %v573 = vpop.f32.mrf.mxu0
  %574 = vmatprep.mubr.f32.mxu0 0.0
  %575 = vmatmul.mubr.f32.gmra.mxu0 %v485
  %v576 = vpop.f32.mrf.mxu0
  %v577 = vadd.f32 %v470, %v576
  %v578 = vpop.f32.mrf.mxu0
  %579 = vmatprep.mubr.f32.mxu0 0.0
  %580 = vmatmul.mubr.f32.gmra.mxu0 %v488
  %v581 = vpop.f32.mrf.mxu0
  %v582 = vadd.f32 %v470, %v581
  %v583 = vpop.f32.mrf.mxu0
  %584 = vdwg.mxu0
  %591 = vrot.lane.b32.xlu0 %v557, 96
  %v592 = vpop.permute.xlu0 %591
  %593 = vrot.lane.b32.xlu0 %v562, 96
  %v594 = vpop.permute.xlu0 %593
  %595 = vrot.lane.b32.xlu0 %v567, 96
  %v596 = vpop.permute.xlu0 %595
  %597 = vrot.lane.b32.xlu0 %v572, 96
  %v598 = vpop.permute.xlu0 %597
  %599 = vrot.lane.b32.xlu0 %v577, 96
  %v600 = vpop.permute.xlu0 %599
  %601 = vrot.lane.b32.xlu0 %v582, 96
  %v602 = vpop.permute.xlu0 %601
  %vm603 = vcmask 130048
  %v604 = vsel %vm603, %v557, 0
  %v606 = vsel %vm603, %v562, 0
  %v608 = vsel %vm603, %v567, 0
  %v610 = vsel %vm603, %v572, 0
  %v612 = vsel %vm603, %v577, 0
  %v614 = vsel %vm603, %v582, 0
  %v616 = vsel %vm603, %v592, 0
  %v618 = vsel %vm603, %v594, 0
  %v620 = vsel %vm603, %v596, 0
  %v622 = vsel %vm603, %v598, 0
  %v624 = vsel %vm603, %v600, 0
  %v626 = vsel %vm603, %v602, 0
  %628 = vmatprep.subr.mxu0 0.0
  %629 = vmatpush1.xpose.msra.mxu0 0.0
  %630 = vmatprep.subr.mxu0 0.0
  %631 = vmatpush1.xpose.msra.mxu0 0.0
  %632 = vmatprep.subr.mxu0 0.0
  %633 = vmatpush1.xpose.msra.mxu0 0.0
  %634 = vmatprep.subr.mxu0 0.0
  %635 = vmatpush1.xpose.msra.mxu0 0.0
  %636 = vmatprep.subr.mxu0 0.0
  %637 = vmatpush1.xpose.msra.mxu0 0.0
  %638 = vmatprep.subr.mxu0 0.0
  %639 = vmatpush1.xpose.msra.mxu0 0.0
  %640 = vmatprep.subr.mxu0 0.0
  %641 = vmatpush1.xpose.msra.mxu0 0.0
  %642 = vmatprep.subr.mxu0 0.0
  %643 = vmatpush1.xpose.msra.mxu0 0.0
  %644 = vmatprep.subr.mxu0 0.0
  %645 = vmatpush1.xpose.msra.mxu0 0.0
  %646 = vmatprep.subr.mxu0 0.0
  %647 = vmatpush1.xpose.msra.mxu0 0.0
  %648 = vmatprep.subr.mxu0 0.0
  %649 = vmatpush1.xpose.msra.mxu0 %v626
  %650 = vmatprep.subr.mxu0 0.0
  %651 = vmatpush1.xpose.msra.mxu0 %v624
  %652 = vmatprep.subr.mxu0 0.0
  %653 = vmatpush1.xpose.msra.mxu0 %v622
  %654 = vmatprep.subr.mxu0 0.0
  %655 = vmatpush1.xpose.msra.mxu0 %v620
  %656 = vmatprep.subr.mxu0 0.0
  %657 = vmatpush1.xpose.msra.mxu0 %v618
  %658 = vmatprep.subr.mxu0 0.0
  %659 = vmatpush1.xpose.msra.mxu0 %v616
  %660 = vmatprep.subr.mxu0 0.0
  %661 = vmatpush2.xpose.msra.mxu0 0.0
  %662 = vmatprep.subr.mxu0 0.0
  %663 = vmatpush2.xpose.msra.mxu0 0.0
  %664 = vmatprep.subr.mxu0 0.0
  %665 = vmatpush2.xpose.msra.mxu0 0.0
  %666 = vmatprep.subr.mxu0 0.0
  %667 = vmatpush2.xpose.msra.mxu0 0.0
  %668 = vmatprep.subr.mxu0 0.0
  %669 = vmatpush2.xpose.msra.mxu0 0.0
  %670 = vmatprep.subr.mxu0 0.0
  %671 = vmatpush2.xpose.msra.mxu0 0.0
  %672 = vmatprep.subr.mxu0 0.0
  %673 = vmatpush2.xpose.msra.mxu0 0.0
  %674 = vmatprep.subr.mxu0 0.0
  %675 = vmatpush2.xpose.msra.mxu0 0.0
  %676 = vmatprep.subr.mxu0 0.0
  %677 = vmatpush2.xpose.msra.mxu0 0.0
  %678 = vmatprep.subr.mxu0 0.0
  %679 = vmatpush2.xpose.msra.mxu0 0.0
  %680 = vmatprep.subr.mxu0 0.0
  %681 = vmatpush2.xpose.msra.mxu0 0.0
  %682 = vmatprep.subr.mxu0 0.0
  %683 = vmatpush2.xpose.msra.mxu0 0.0
  %684 = vmatprep.subr.mxu0 0.0
  %685 = vmatpush2.xpose.msra.mxu0 0.0
  %686 = vmatprep.subr.mxu0 0.0
  %687 = vmatpush2.xpose.msra.mxu0 0.0
  %688 = vmatprep.subr.mxu0 0.0
  %689 = vmatpush2.xpose.msra.mxu0 0.0
  %690 = vmatprep.subr.mxu0 0.0
  %691 = vmatpush2.xpose.msra.mxu0 0.0
  %692 = vmatprep.mubr.f32.mxu0 0.0
  %693 = vmatmul.mubr.f32.gmra.mxu0 %v604
  %v694 = vpop.f32.mrf.mxu0
  %v695 = vadd.f32 %v450, %v694
  %v696 = vpop.f32.mrf.mxu0
  %697 = vmatprep.mubr.f32.mxu0 0.0
  %698 = vmatmul.mubr.f32.gmra.mxu0 %v606
  %v699 = vpop.f32.mrf.mxu0
  %v700 = vadd.f32 %v451, %v699
  %v701 = vpop.f32.mrf.mxu0
  %702 = vmatprep.mubr.f32.mxu0 0.0
  %703 = vmatmul.mubr.f32.gmra.mxu0 %v608
  %v704 = vpop.f32.mrf.mxu0
  %v705 = vadd.f32 %v452, %v704
  %v706 = vpop.f32.mrf.mxu0
  %707 = vmatprep.mubr.f32.mxu0 0.0
  %708 = vmatmul.mubr.f32.gmra.mxu0 %v610
  %v709 = vpop.f32.mrf.mxu0
  %v710 = vadd.f32 %v453, %v709
  %v711 = vpop.f32.mrf.mxu0
  %712 = vmatprep.mubr.f32.mxu0 0.0
  %713 = vmatmul.mubr.f32.gmra.mxu0 %v612
  %v714 = vpop.f32.mrf.mxu0
  %v715 = vadd.f32 %v454, %v714
  %v716 = vpop.f32.mrf.mxu0
  %717 = vmatprep.mubr.f32.mxu0 0.0
  %718 = vmatmul.mubr.f32.gmra.mxu0 %v614
  %v719 = vpop.f32.mrf.mxu0
  %v720 = vadd.f32 %v455, %v719
  %v721 = vpop.f32.mrf.mxu0
  %722 = vdwg.mxu0
  %vm723 = vcmask 392192
  %v724 = vsel %vm723, %v695, -inf
  %725 = vmax.xlane.f32.xlu0 %v724
  %v726 = vpop.xlane.xlu0 %725
  %v727 = vsel %vm723, %v700, -inf
  %728 = vmax.xlane.f32.xlu0 %v727
  %v729 = vpop.xlane.xlu0 %728
  %v730 = vsel %vm723, %v705, -inf
  %731 = vmax.xlane.f32.xlu0 %v730
  %v732 = vpop.xlane.xlu0 %731
  %v733 = vsel %vm723, %v710, -inf
  %734 = vmax.xlane.f32.xlu0 %v733
  %v735 = vpop.xlane.xlu0 %734
  %v736 = vsel %vm723, %v715, -inf
  %737 = vmax.xlane.f32.xlu0 %v736
  %v738 = vpop.xlane.xlu0 %737
  %v739 = vsel %vm723, %v720, -inf
  %740 = vmax.xlane.f32.xlu0 %v739
  %v741 = vpop.xlane.xlu0 %740
  %v742 = vsub.f32 %v695, %v726
  %v743 = vsub.f32 %v700, %v729
  %v744 = vsub.f32 %v705, %v732
  %v745 = vsub.f32 %v710, %v735
  %v746 = vsub.f32 %v715, %v738
  %v747 = vsub.f32 %v720, %v741
  %v748 = vmul.f32 %v742, 1.442695
  %v749 = vpow.pop %v748
  %v750 = vmul.f32 %v743, 1.442695
  %v751 = vpow.pop %v750
  %v752 = vmul.f32 %v744, 1.442695
  %v753 = vpow.pop %v752
  %v754 = vmul.f32 %v745, 1.442695
  %v755 = vpow.pop %v754
  %v756 = vmul.f32 %v746, 1.442695
  %v757 = vpow.pop %v756
  %v758 = vmul.f32 %v747, 1.442695
  %v759 = vpow.pop %v758
  %v760 = vsel %vm723, %v749, 0.0
  %761 = vadd.xlane.f32.xlu0 %v760
  %v762 = vpop.xlane.xlu0 %761
  %v763 = vsel %vm723, %v751, 0.0
  %764 = vadd.xlane.f32.xlu0 %v763
  %v765 = vpop.xlane.xlu0 %764
  %v766 = vsel %vm723, %v753, 0.0
  %767 = vadd.xlane.f32.xlu0 %v766
  %v768 = vpop.xlane.xlu0 %767
  %v769 = vsel %vm723, %v755, 0.0
  %770 = vadd.xlane.f32.xlu0 %v769
  %v771 = vpop.xlane.xlu0 %770
  %v772 = vsel %vm723, %v757, 0.0
  %773 = vadd.xlane.f32.xlu0 %v772
  %v774 = vpop.xlane.xlu0 %773
  %v775 = vsel %vm723, %v759, 0.0
  %776 = vadd.xlane.f32.xlu0 %v775
  %v777 = vpop.xlane.xlu0 %776
  %v778 = vrcp.pop %v762
  %v779 = vrcp.pop %v765
  %v780 = vrcp.pop %v768
  %v781 = vrcp.pop %v771
  %v782 = vrcp.pop %v774
  %v783 = vrcp.pop %v777
  %v784 = vmul.f32 %v749, %v778
  %v785 = vmul.f32 %v751, %v779
  %v786 = vmul.f32 %v753, %v780
  %v787 = vmul.f32 %v755, %v781
  %v788 = vmul.f32 %v757, %v782
  %v789 = vmul.f32 %v759, %v783
  %vm790 = vcmp.ge.s32.totalorder %v27, 0
  %vm791 = vcmp.lt.s32.totalorder %v27, 16
  %vm792 = vmand %vm790, %vm791
  %793 = vrot.lane.b32.xlu0 %v557, 64
  %v794 = vpop.permute.xlu0 %793
  %795 = vrot.lane.b32.xlu0 %v562, 64
  %v796 = vpop.permute.xlu0 %795
  %797 = vrot.lane.b32.xlu0 %v567, 64
  %v798 = vpop.permute.xlu0 %797
  %799 = vrot.lane.b32.xlu0 %v572, 64
  %v800 = vpop.permute.xlu0 %799
  %801 = vrot.lane.b32.xlu0 %v577, 64
  %v802 = vpop.permute.xlu0 %801
  %803 = vrot.lane.b32.xlu0 %v582, 64
  %v804 = vpop.permute.xlu0 %803
  %v811 = vsel %vm792, %v794, 0.0
  %v812 = vsel %vm792, %v796, 0.0
  %v813 = vsel %vm792, %v798, 0.0
  %v814 = vsel %vm792, %v800, 0.0
  %v815 = vsel %vm792, %v802, 0.0
  %v816 = vsel %vm792, %v804, 0.0
  %817 = vrot.lane.b32.xlu0 %v557, 112
  %v818 = vpop.permute.xlu0 %817
  %819 = vrot.lane.b32.xlu0 %v562, 112
  %v820 = vpop.permute.xlu0 %819
  %821 = vrot.lane.b32.xlu0 %v567, 112
  %v822 = vpop.permute.xlu0 %821
  %823 = vrot.lane.b32.xlu0 %v572, 112
  %v824 = vpop.permute.xlu0 %823
  %825 = vrot.lane.b32.xlu0 %v577, 112
  %v826 = vpop.permute.xlu0 %825
  %827 = vrot.lane.b32.xlu0 %v582, 112
  %v828 = vpop.permute.xlu0 %827
  %829 = vrot.lane.b32.xlu0 %v557, 80
  %v830 = vpop.permute.xlu0 %829
  %831 = vrot.lane.b32.xlu0 %v562, 80
  %v832 = vpop.permute.xlu0 %831
  %833 = vrot.lane.b32.xlu0 %v567, 80
  %v834 = vpop.permute.xlu0 %833
  %835 = vrot.lane.b32.xlu0 %v572, 80
  %v836 = vpop.permute.xlu0 %835
  %837 = vrot.lane.b32.xlu0 %v577, 80
  %v838 = vpop.permute.xlu0 %837
  %839 = vrot.lane.b32.xlu0 %v582, 80
  %v840 = vpop.permute.xlu0 %839
  %v841 = vsel %vm603, %v818, 0
  %v843 = vsel %vm603, %v820, 0
  %v845 = vsel %vm603, %v822, 0
  %v847 = vsel %vm603, %v824, 0
  %v849 = vsel %vm603, %v826, 0
  %v851 = vsel %vm603, %v828, 0
  %v853 = vsel %vm603, %v830, 0
  %v855 = vsel %vm603, %v832, 0
  %v857 = vsel %vm603, %v834, 0
  %v859 = vsel %vm603, %v836, 0
  %v861 = vsel %vm603, %v838, 0
  %v863 = vsel %vm603, %v840, 0
  %865 = vmatprep.subr.mxu0 0.0
  %866 = vmatpush1.xpose.msra.mxu0 0.0
  %867 = vmatprep.subr.mxu0 0.0
  %868 = vmatpush1.xpose.msra.mxu0 0.0
  %869 = vmatprep.subr.mxu0 0.0
  %870 = vmatpush1.xpose.msra.mxu0 0.0
  %871 = vmatprep.subr.mxu0 0.0
  %872 = vmatpush1.xpose.msra.mxu0 0.0
  %873 = vmatprep.subr.mxu0 0.0
  %874 = vmatpush1.xpose.msra.mxu0 0.0
  %875 = vmatprep.subr.mxu0 0.0
  %876 = vmatpush1.xpose.msra.mxu0 0.0
  %877 = vmatprep.subr.mxu0 0.0
  %878 = vmatpush1.xpose.msra.mxu0 0.0
  %879 = vmatprep.subr.mxu0 0.0
  %880 = vmatpush1.xpose.msra.mxu0 0.0
  %881 = vmatprep.subr.mxu0 0.0
  %882 = vmatpush1.xpose.msra.mxu0 0.0
  %883 = vmatprep.subr.mxu0 0.0
  %884 = vmatpush1.xpose.msra.mxu0 0.0
  %885 = vmatprep.subr.mxu0 0.0
  %886 = vmatpush1.xpose.msra.mxu0 %v863
  %887 = vmatprep.subr.mxu0 0.0
  %888 = vmatpush1.xpose.msra.mxu0 %v861
  %889 = vmatprep.subr.mxu0 0.0
  %890 = vmatpush1.xpose.msra.mxu0 %v859
  %891 = vmatprep.subr.mxu0 0.0
  %892 = vmatpush1.xpose.msra.mxu0 %v857
  %893 = vmatprep.subr.mxu0 0.0
  %894 = vmatpush1.xpose.msra.mxu0 %v855
  %895 = vmatprep.subr.mxu0 0.0
  %896 = vmatpush1.xpose.msra.mxu0 %v853
  %897 = vmatprep.subr.mxu0 0.0
  %898 = vmatpush2.xpose.msra.mxu0 0.0
  %899 = vmatprep.subr.mxu0 0.0
  %900 = vmatpush2.xpose.msra.mxu0 0.0
  %901 = vmatprep.subr.mxu0 0.0
  %902 = vmatpush2.xpose.msra.mxu0 0.0
  %903 = vmatprep.subr.mxu0 0.0
  %904 = vmatpush2.xpose.msra.mxu0 0.0
  %905 = vmatprep.subr.mxu0 0.0
  %906 = vmatpush2.xpose.msra.mxu0 0.0
  %907 = vmatprep.subr.mxu0 0.0
  %908 = vmatpush2.xpose.msra.mxu0 0.0
  %909 = vmatprep.subr.mxu0 0.0
  %910 = vmatpush2.xpose.msra.mxu0 0.0
  %911 = vmatprep.subr.mxu0 0.0
  %912 = vmatpush2.xpose.msra.mxu0 0.0
  %913 = vmatprep.subr.mxu0 0.0
  %914 = vmatpush2.xpose.msra.mxu0 0.0
  %915 = vmatprep.subr.mxu0 0.0
  %916 = vmatpush2.xpose.msra.mxu0 0.0
  %917 = vmatprep.subr.mxu0 0.0
  %918 = vmatpush2.xpose.msra.mxu0 0.0
  %919 = vmatprep.subr.mxu0 0.0
  %920 = vmatpush2.xpose.msra.mxu0 0.0
  %921 = vmatprep.subr.mxu0 0.0
  %922 = vmatpush2.xpose.msra.mxu0 0.0
  %923 = vmatprep.subr.mxu0 0.0
  %924 = vmatpush2.xpose.msra.mxu0 0.0
  %925 = vmatprep.subr.mxu0 0.0
  %926 = vmatpush2.xpose.msra.mxu0 0.0
  %927 = vmatprep.subr.mxu0 0.0
  %928 = vmatpush2.xpose.msra.mxu0 0.0
  %929 = vmatprep.mubr.f32.mxu0 0.0
  %930 = vmatmul.mubr.f32.gmra.mxu0 %v841
  %v931 = vpop.f32.mrf.mxu0
  %v932 = vadd.f32 %v450, %v931
  %v933 = vpop.f32.mrf.mxu0
  %934 = vmatprep.mubr.f32.mxu0 0.0
  %935 = vmatmul.mubr.f32.gmra.mxu0 %v843
  %v936 = vpop.f32.mrf.mxu0
  %v937 = vadd.f32 %v451, %v936
  %v938 = vpop.f32.mrf.mxu0
  %939 = vmatprep.mubr.f32.mxu0 0.0
  %940 = vmatmul.mubr.f32.gmra.mxu0 %v845
  %v941 = vpop.f32.mrf.mxu0
  %v942 = vadd.f32 %v452, %v941
  %v943 = vpop.f32.mrf.mxu0
  %944 = vmatprep.mubr.f32.mxu0 0.0
  %945 = vmatmul.mubr.f32.gmra.mxu0 %v847
  %v946 = vpop.f32.mrf.mxu0
  %v947 = vadd.f32 %v453, %v946
  %v948 = vpop.f32.mrf.mxu0
  %949 = vmatprep.mubr.f32.mxu0 0.0
  %950 = vmatmul.mubr.f32.gmra.mxu0 %v849
  %v951 = vpop.f32.mrf.mxu0
  %v952 = vadd.f32 %v454, %v951
  %v953 = vpop.f32.mrf.mxu0
  %954 = vmatprep.mubr.f32.mxu0 0.0
  %955 = vmatmul.mubr.f32.gmra.mxu0 %v851
  %v956 = vpop.f32.mrf.mxu0
  %v957 = vadd.f32 %v455, %v956
  %v958 = vpop.f32.mrf.mxu0
  %959 = vdwg.mxu0
  %v960 = vsel %vm723, %v932, -inf
  %961 = vmax.xlane.f32.xlu0 %v960
  %v962 = vpop.xlane.xlu0 %961
  %v963 = vsel %vm723, %v937, -inf
  %964 = vmax.xlane.f32.xlu0 %v963
  %v965 = vpop.xlane.xlu0 %964
  %v966 = vsel %vm723, %v942, -inf
  %967 = vmax.xlane.f32.xlu0 %v966
  %v968 = vpop.xlane.xlu0 %967
  %v969 = vsel %vm723, %v947, -inf
  %970 = vmax.xlane.f32.xlu0 %v969
  %v971 = vpop.xlane.xlu0 %970
  %v972 = vsel %vm723, %v952, -inf
  %973 = vmax.xlane.f32.xlu0 %v972
  %v974 = vpop.xlane.xlu0 %973
  %v975 = vsel %vm723, %v957, -inf
  %976 = vmax.xlane.f32.xlu0 %v975
  %v977 = vpop.xlane.xlu0 %976
  %v978 = vsub.f32 %v932, %v962
  %v979 = vsub.f32 %v937, %v965
  %v980 = vsub.f32 %v942, %v968
  %v981 = vsub.f32 %v947, %v971
  %v982 = vsub.f32 %v952, %v974
  %v983 = vsub.f32 %v957, %v977
  %v984 = vmul.f32 %v978, 1.442695
  %v985 = vpow.pop %v984
  %v986 = vmul.f32 %v979, 1.442695
  %v987 = vpow.pop %v986
  %v988 = vmul.f32 %v980, 1.442695
  %v989 = vpow.pop %v988
  %v990 = vmul.f32 %v981, 1.442695
  %v991 = vpow.pop %v990
  %v992 = vmul.f32 %v982, 1.442695
  %v993 = vpow.pop %v992
  %v994 = vmul.f32 %v983, 1.442695
  %v995 = vpow.pop %v994
  %v996 = vsel %vm723, %v985, 0.0
  %997 = vadd.xlane.f32.xlu0 %v996
  %v998 = vpop.xlane.xlu0 %997
  %v999 = vsel %vm723, %v987, 0.0
  %1000 = vadd.xlane.f32.xlu0 %v999
  %v1001 = vpop.xlane.xlu0 %1000
  %v1002 = vsel %vm723, %v989, 0.0
  %1003 = vadd.xlane.f32.xlu0 %v1002
  %v1004 = vpop.xlane.xlu0 %1003
  %v1005 = vsel %vm723, %v991, 0.0
  %1006 = vadd.xlane.f32.xlu0 %v1005
  %v1007 = vpop.xlane.xlu0 %1006
  %v1008 = vsel %vm723, %v993, 0.0
  %1009 = vadd.xlane.f32.xlu0 %v1008
  %v1010 = vpop.xlane.xlu0 %1009
  %v1011 = vsel %vm723, %v995, 0.0
  %1012 = vadd.xlane.f32.xlu0 %v1011
  %v1013 = vpop.xlane.xlu0 %1012
  %v1014 = vrcp.pop %v998
  %v1015 = vrcp.pop %v1001
  %v1016 = vrcp.pop %v1004
  %v1017 = vrcp.pop %v1007
  %v1018 = vrcp.pop %v1010
  %v1019 = vrcp.pop %v1013
  %v1020 = vmul.f32 %v985, %v1014
  %v1021 = vmul.f32 %v987, %v1015
  %v1022 = vmul.f32 %v989, %v1016
  %v1023 = vmul.f32 %v991, %v1017
  %v1024 = vmul.f32 %v993, %v1018
  %v1025 = vmul.f32 %v995, %v1019
  %vm1026 = vcmp.ge.s32.totalorder %v27, 16
  %vm1027 = vcmp.lt.s32.totalorder %v27, 32
  %vm1028 = vmand %vm1026, %vm1027
  %v1029 = vsel %vm1028, %v794, 0.0
  %v1030 = vsel %vm1028, %v796, 0.0
  %v1031 = vsel %vm1028, %v798, 0.0
  %v1032 = vsel %vm1028, %v800, 0.0
  %v1033 = vsel %vm1028, %v802, 0.0
  %v1034 = vsel %vm1028, %v804, 0.0
  %v1036 = vsel %vm723, %v1020, 0
  %v1039 = vsel %vm723, %v1021, 0
  %v1042 = vsel %vm723, %v1022, 0
  %v1045 = vsel %vm723, %v1023, 0
  %v1048 = vsel %vm723, %v1024, 0
  %v1051 = vsel %vm723, %v1025, 0
  %1053 = vmatprep.subr.mxu0 0.0
  %1054 = vmatpush1.msra.mxu0 0.0
  %1055 = vmatprep.subr.mxu0 0.0
  %1056 = vmatpush1.msra.mxu0 0.0
  %1057 = vmatprep.subr.mxu0 0.0
  %1058 = vmatpush1.msra.mxu0 0.0
  %1059 = vmatprep.subr.mxu0 0.0
  %1060 = vmatpush1.msra.mxu0 0.0
  %1061 = vmatprep.subr.mxu0 0.0
  %1062 = vmatpush1.msra.mxu0 0.0
  %1063 = vmatprep.subr.mxu0 0.0
  %1064 = vmatpush1.msra.mxu0 0.0
  %1065 = vmatprep.subr.mxu0 0.0
  %1066 = vmatpush1.msra.mxu0 0.0
  %1067 = vmatprep.subr.mxu0 0.0
  %1068 = vmatpush1.msra.mxu0 0.0
  %1069 = vmatprep.subr.mxu0 0.0
  %1070 = vmatpush1.msra.mxu0 0.0
  %1071 = vmatprep.subr.mxu0 0.0
  %1072 = vmatpush1.msra.mxu0 0.0
  %1073 = vmatprep.subr.mxu0 0.0
  %1074 = vmatpush1.msra.mxu0 %v1034
  %1075 = vmatprep.subr.mxu0 0.0
  %1076 = vmatpush1.msra.mxu0 %v1033
  %1077 = vmatprep.subr.mxu0 0.0
  %1078 = vmatpush1.msra.mxu0 %v1032
  %1079 = vmatprep.subr.mxu0 0.0
  %1080 = vmatpush1.msra.mxu0 %v1031
  %1081 = vmatprep.subr.mxu0 0.0
  %1082 = vmatpush1.msra.mxu0 %v1030
  %1083 = vmatprep.subr.mxu0 0.0
  %1084 = vmatpush1.msra.mxu0 %v1029
  %1085 = vmatprep.subr.mxu0 0.0
  %1086 = vmatpush2.msra.mxu0 0.0
  %1087 = vmatprep.subr.mxu0 0.0
  %1088 = vmatpush2.msra.mxu0 0.0
  %1089 = vmatprep.subr.mxu0 0.0
  %1090 = vmatpush2.msra.mxu0 0.0
  %1091 = vmatprep.subr.mxu0 0.0
  %1092 = vmatpush2.msra.mxu0 0.0
  %1093 = vmatprep.subr.mxu0 0.0
  %1094 = vmatpush2.msra.mxu0 0.0
  %1095 = vmatprep.subr.mxu0 0.0
  %1096 = vmatpush2.msra.mxu0 0.0
  %1097 = vmatprep.subr.mxu0 0.0
  %1098 = vmatpush2.msra.mxu0 0.0
  %1099 = vmatprep.subr.mxu0 0.0
  %1100 = vmatpush2.msra.mxu0 0.0
  %1101 = vmatprep.subr.mxu0 0.0
  %1102 = vmatpush2.msra.mxu0 0.0
  %1103 = vmatprep.subr.mxu0 0.0
  %1104 = vmatpush2.msra.mxu0 0.0
  %1105 = vmatprep.subr.mxu0 0.0
  %1106 = vmatpush2.msra.mxu0 0.0
  %1107 = vmatprep.subr.mxu0 0.0
  %1108 = vmatpush2.msra.mxu0 0.0
  %1109 = vmatprep.subr.mxu0 0.0
  %1110 = vmatpush2.msra.mxu0 0.0
  %1111 = vmatprep.subr.mxu0 0.0
  %1112 = vmatpush2.msra.mxu0 0.0
  %1113 = vmatprep.subr.mxu0 0.0
  %1114 = vmatpush2.msra.mxu0 0.0
  %1115 = vmatprep.subr.mxu0 0.0
  %1116 = vmatpush2.msra.mxu0 0.0
  %1117 = vmatprep.mubr.f32.mxu0 0.0
  %1118 = vmatmul.mubr.f32.gmra.mxu0 %v1036
  %v1119 = vpop.f32.mrf.mxu0
  %v1120 = vadd.f32 0.0, %v1119
  %v1121 = vpop.f32.mrf.mxu0
  %1122 = vmatprep.mubr.f32.mxu0 0.0
  %1123 = vmatmul.mubr.f32.gmra.mxu0 %v1039
  %v1124 = vpop.f32.mrf.mxu0
  %v1125 = vadd.f32 0.0, %v1124
  %v1126 = vpop.f32.mrf.mxu0
  %1127 = vmatprep.mubr.f32.mxu0 0.0
  %1128 = vmatmul.mubr.f32.gmra.mxu0 %v1042
  %v1129 = vpop.f32.mrf.mxu0
  %v1130 = vadd.f32 0.0, %v1129
  %v1131 = vpop.f32.mrf.mxu0
  %1132 = vmatprep.mubr.f32.mxu0 0.0
  %1133 = vmatmul.mubr.f32.gmra.mxu0 %v1045
  %v1134 = vpop.f32.mrf.mxu0
  %v1135 = vadd.f32 0.0, %v1134
  %v1136 = vpop.f32.mrf.mxu0
  %1137 = vmatprep.mubr.f32.mxu0 0.0
  %1138 = vmatmul.mubr.f32.gmra.mxu0 %v1048
  %v1139 = vpop.f32.mrf.mxu0
  %v1140 = vadd.f32 0.0, %v1139
  %v1141 = vpop.f32.mrf.mxu0
  %1142 = vmatprep.mubr.f32.mxu0 0.0
  %1143 = vmatmul.mubr.f32.gmra.mxu0 %v1051
  %v1144 = vpop.f32.mrf.mxu0
  %v1145 = vadd.f32 0.0, %v1144
  %v1146 = vpop.f32.mrf.mxu0
  %1147 = vdwg.mxu0
  %v1149 = vsel %vm723, %v784, 0
  %v1152 = vsel %vm723, %v785, 0
  %v1155 = vsel %vm723, %v786, 0
  %v1158 = vsel %vm723, %v787, 0
  %v1161 = vsel %vm723, %v788, 0
  %v1164 = vsel %vm723, %v789, 0
  %1166 = vmatprep.subr.mxu0 0.0
  %1167 = vmatpush1.msra.mxu0 0.0
  %1168 = vmatprep.subr.mxu0 0.0
  %1169 = vmatpush1.msra.mxu0 0.0
  %1170 = vmatprep.subr.mxu0 0.0
  %1171 = vmatpush1.msra.mxu0 0.0
  %1172 = vmatprep.subr.mxu0 0.0
  %1173 = vmatpush1.msra.mxu0 0.0
  %1174 = vmatprep.subr.mxu0 0.0
  %1175 = vmatpush1.msra.mxu0 0.0
  %1176 = vmatprep.subr.mxu0 0.0
  %1177 = vmatpush1.msra.mxu0 0.0
  %1178 = vmatprep.subr.mxu0 0.0
  %1179 = vmatpush1.msra.mxu0 0.0
  %1180 = vmatprep.subr.mxu0 0.0
  %1181 = vmatpush1.msra.mxu0 0.0
  %1182 = vmatprep.subr.mxu0 0.0
  %1183 = vmatpush1.msra.mxu0 0.0
  %1184 = vmatprep.subr.mxu0 0.0
  %1185 = vmatpush1.msra.mxu0 0.0
  %1186 = vmatprep.subr.mxu0 0.0
  %1187 = vmatpush1.msra.mxu0 %v816
  %1188 = vmatprep.subr.mxu0 0.0
  %1189 = vmatpush1.msra.mxu0 %v815
  %1190 = vmatprep.subr.mxu0 0.0
  %1191 = vmatpush1.msra.mxu0 %v814
  %1192 = vmatprep.subr.mxu0 0.0
  %1193 = vmatpush1.msra.mxu0 %v813
  %1194 = vmatprep.subr.mxu0 0.0
  %1195 = vmatpush1.msra.mxu0 %v812
  %1196 = vmatprep.subr.mxu0 0.0
  %1197 = vmatpush1.msra.mxu0 %v811
  %1198 = vmatprep.subr.mxu0 0.0
  %1199 = vmatpush2.msra.mxu0 0.0
  %1200 = vmatprep.subr.mxu0 0.0
  %1201 = vmatpush2.msra.mxu0 0.0
  %1202 = vmatprep.subr.mxu0 0.0
  %1203 = vmatpush2.msra.mxu0 0.0
  %1204 = vmatprep.subr.mxu0 0.0
  %1205 = vmatpush2.msra.mxu0 0.0
  %1206 = vmatprep.subr.mxu0 0.0
  %1207 = vmatpush2.msra.mxu0 0.0
  %1208 = vmatprep.subr.mxu0 0.0
  %1209 = vmatpush2.msra.mxu0 0.0
  %1210 = vmatprep.subr.mxu0 0.0
  %1211 = vmatpush2.msra.mxu0 0.0
  %1212 = vmatprep.subr.mxu0 0.0
  %1213 = vmatpush2.msra.mxu0 0.0
  %1214 = vmatprep.subr.mxu0 0.0
  %1215 = vmatpush2.msra.mxu0 0.0
  %1216 = vmatprep.subr.mxu0 0.0
  %1217 = vmatpush2.msra.mxu0 0.0
  %1218 = vmatprep.subr.mxu0 0.0
  %1219 = vmatpush2.msra.mxu0 0.0
  %1220 = vmatprep.subr.mxu0 0.0
  %1221 = vmatpush2.msra.mxu0 0.0
  %1222 = vmatprep.subr.mxu0 0.0
  %1223 = vmatpush2.msra.mxu0 0.0
  %1224 = vmatprep.subr.mxu0 0.0
  %1225 = vmatpush2.msra.mxu0 0.0
  %1226 = vmatprep.subr.mxu0 0.0
  %1227 = vmatpush2.msra.mxu0 0.0
  %1228 = vmatprep.subr.mxu0 0.0
  %1229 = vmatpush2.msra.mxu0 0.0
  %1230 = vmatprep.mubr.f32.mxu0 0.0
  %1231 = vmatmul.mubr.f32.gmra.mxu0 %v1149
  %v1232 = vpop.f32.mrf.mxu0
  %v1233 = vadd.f32 %v1120, %v1232
  %v1234 = vpop.f32.mrf.mxu0
  %1235 = vmatprep.mubr.f32.mxu0 0.0
  %1236 = vmatmul.mubr.f32.gmra.mxu0 %v1152
  %v1237 = vpop.f32.mrf.mxu0
  %v1238 = vadd.f32 %v1125, %v1237
  %v1239 = vpop.f32.mrf.mxu0
  %1240 = vmatprep.mubr.f32.mxu0 0.0
  %1241 = vmatmul.mubr.f32.gmra.mxu0 %v1155
  %v1242 = vpop.f32.mrf.mxu0
  %v1243 = vadd.f32 %v1130, %v1242
  %v1244 = vpop.f32.mrf.mxu0
  %1245 = vmatprep.mubr.f32.mxu0 0.0
  %1246 = vmatmul.mubr.f32.gmra.mxu0 %v1158
  %v1247 = vpop.f32.mrf.mxu0
  %v1248 = vadd.f32 %v1135, %v1247
  %v1249 = vpop.f32.mrf.mxu0
  %1250 = vmatprep.mubr.f32.mxu0 0.0
  %1251 = vmatmul.mubr.f32.gmra.mxu0 %v1161
  %v1252 = vpop.f32.mrf.mxu0
  %v1253 = vadd.f32 %v1140, %v1252
  %v1254 = vpop.f32.mrf.mxu0
  %1255 = vmatprep.mubr.f32.mxu0 0.0
  %1256 = vmatmul.mubr.f32.gmra.mxu0 %v1164
  %v1257 = vpop.f32.mrf.mxu0
  %v1258 = vadd.f32 %v1145, %v1257
  %v1259 = vpop.f32.mrf.mxu0
  %1260 = vdwg.mxu0
  %s1261 = scalar_lea.vmem %s4, 4
  %v1262 = vld [vmem:[%s1261] sm:$0x1]
  %v1264 = vlaneseq
  %v1265 = vshrl.u32 %v1264, 7
  %v1266 = vsub.s32 0, %v1265
  %v1267 = vrot.slane %v1262, %v1266
  %1273 = vrot.lane.b32.xlu0 %v456, 32
  %v1274 = vpop.permute.xlu0 %1273
  %1275 = vrot.lane.b32.xlu0 %v458, 32
  %v1276 = vpop.permute.xlu0 %1275
  %1277 = vrot.lane.b32.xlu0 %v460, 32
  %v1278 = vpop.permute.xlu0 %1277
  %1279 = vrot.lane.b32.xlu0 %v462, 32
  %v1280 = vpop.permute.xlu0 %1279
  %v1286 = vsel %vm266, %v1233, 0
  %v1289 = vsel %vm266, %v1238, 0
  %v1292 = vsel %vm266, %v1243, 0
  %v1295 = vsel %vm266, %v1248, 0
  %v1298 = vsel %vm266, %v1253, 0
  %v1301 = vsel %vm266, %v1258, 0
  %1303 = vmatprep.subr.mxu0 0.0
  %1304 = vmatpush1.msra.mxu0 0.0
  %1305 = vmatprep.subr.mxu0 0.0
  %1306 = vmatpush1.msra.mxu0 0.0
  %1307 = vmatprep.subr.mxu0 0.0
  %1308 = vmatpush1.msra.mxu0 0.0
  %1309 = vmatprep.subr.mxu0 0.0
  %1310 = vmatpush1.msra.mxu0 0.0
  %1311 = vmatprep.subr.mxu0 0.0
  %1312 = vmatpush1.msra.mxu0 0.0
  %1313 = vmatprep.subr.mxu0 0.0
  %1314 = vmatpush1.msra.mxu0 0.0
  %1315 = vmatprep.subr.mxu0 0.0
  %1316 = vmatpush1.msra.mxu0 0.0
  %1317 = vmatprep.subr.mxu0 0.0
  %1318 = vmatpush1.msra.mxu0 0.0
  %1319 = vmatprep.subr.mxu0 0.0
  %1320 = vmatpush1.msra.mxu0 0.0
  %1321 = vmatprep.subr.mxu0 0.0
  %1322 = vmatpush1.msra.mxu0 0.0
  %1323 = vmatprep.subr.mxu0 0.0
  %1324 = vmatpush1.msra.mxu0 0.0
  %1325 = vmatprep.subr.mxu0 0.0
  %1326 = vmatpush1.msra.mxu0 0.0
  %1327 = vmatprep.subr.mxu0 0.0
  %1328 = vmatpush1.msra.mxu0 %v1280
  %1329 = vmatprep.subr.mxu0 0.0
  %1330 = vmatpush1.msra.mxu0 %v1278
  %1331 = vmatprep.subr.mxu0 0.0
  %1332 = vmatpush1.msra.mxu0 %v1276
  %1333 = vmatprep.subr.mxu0 0.0
  %1334 = vmatpush1.msra.mxu0 %v1274
  %1335 = vmatprep.subr.mxu0 0.0
  %1336 = vmatpush2.msra.mxu0 0.0
  %1337 = vmatprep.subr.mxu0 0.0
  %1338 = vmatpush2.msra.mxu0 0.0
  %1339 = vmatprep.subr.mxu0 0.0
  %1340 = vmatpush2.msra.mxu0 0.0
  %1341 = vmatprep.subr.mxu0 0.0
  %1342 = vmatpush2.msra.mxu0 0.0
  %1343 = vmatprep.subr.mxu0 0.0
  %1344 = vmatpush2.msra.mxu0 0.0
  %1345 = vmatprep.subr.mxu0 0.0
  %1346 = vmatpush2.msra.mxu0 0.0
  %1347 = vmatprep.subr.mxu0 0.0
  %1348 = vmatpush2.msra.mxu0 0.0
  %1349 = vmatprep.subr.mxu0 0.0
  %1350 = vmatpush2.msra.mxu0 0.0
  %1351 = vmatprep.subr.mxu0 0.0
  %1352 = vmatpush2.msra.mxu0 0.0
  %1353 = vmatprep.subr.mxu0 0.0
  %1354 = vmatpush2.msra.mxu0 0.0
  %1355 = vmatprep.subr.mxu0 0.0
  %1356 = vmatpush2.msra.mxu0 0.0
  %1357 = vmatprep.subr.mxu0 0.0
  %1358 = vmatpush2.msra.mxu0 0.0
  %1359 = vmatprep.subr.mxu0 0.0
  %1360 = vmatpush2.msra.mxu0 0.0
  %1361 = vmatprep.subr.mxu0 0.0
  %1362 = vmatpush2.msra.mxu0 0.0
  %1363 = vmatprep.subr.mxu0 0.0
  %1364 = vmatpush2.msra.mxu0 0.0
  %1365 = vmatprep.subr.mxu0 0.0
  %1366 = vmatpush2.msra.mxu0 0.0
  %1367 = vmatprep.mubr.f32.mxu0 0.0
  %1368 = vmatmul.mubr.f32.gmra.mxu0 %v1286
  %v1369 = vpop.f32.mrf.mxu0
  %v1370 = vadd.f32 %v1267, %v1369
  %v1371 = vpop.f32.mrf.mxu0
  %1372 = vmatprep.mubr.f32.mxu0 0.0
  %1373 = vmatmul.mubr.f32.gmra.mxu0 %v1289
  %v1374 = vpop.f32.mrf.mxu0
  %v1375 = vadd.f32 %v1267, %v1374
  %v1376 = vpop.f32.mrf.mxu0
  %1377 = vmatprep.mubr.f32.mxu0 0.0
  %1378 = vmatmul.mubr.f32.gmra.mxu0 %v1292
  %v1379 = vpop.f32.mrf.mxu0
  %v1380 = vadd.f32 %v1267, %v1379
  %v1381 = vpop.f32.mrf.mxu0
  %1382 = vmatprep.mubr.f32.mxu0 0.0
  %1383 = vmatmul.mubr.f32.gmra.mxu0 %v1295
  %v1384 = vpop.f32.mrf.mxu0
  %v1385 = vadd.f32 %v1267, %v1384
  %v1386 = vpop.f32.mrf.mxu0
  %1387 = vmatprep.mubr.f32.mxu0 0.0
  %1388 = vmatmul.mubr.f32.gmra.mxu0 %v1298
  %v1389 = vpop.f32.mrf.mxu0
  %v1390 = vadd.f32 %v1267, %v1389
  %v1391 = vpop.f32.mrf.mxu0
  %1392 = vmatprep.mubr.f32.mxu0 0.0
  %1393 = vmatmul.mubr.f32.gmra.mxu0 %v1301
  %v1394 = vpop.f32.mrf.mxu0
  %v1395 = vadd.f32 %v1267, %v1394
  %v1396 = vpop.f32.mrf.mxu0
  %1397 = vdwg.mxu0
  %v1398 = vadd.f32 %v364, %v1370
  %v1399 = vadd.f32 %v365, %v1375
  %v1400 = vadd.f32 %v366, %v1380
  %v1401 = vadd.f32 %v367, %v1385
  %v1402 = vadd.f32 %v368, %v1390
  %v1403 = vadd.f32 %v369, %v1395
  %s1404 = scalar_lea.vmem %s4, 5
  %v1405 = vld [vmem:[%s1404] sm:$0x1]
  %s1406 = scalar_lea.vmem %s4, 6
  %v1407 = vld [vmem:[%s1406] sm:$0x1]
  %v1408 = vsel %vm266, %v1398, 0.0
  %1409 = vadd.xlane.f32.xlu0 %v1408
  %v1410 = vpop.xlane.xlu0 %1409
  %v1411 = vsel %vm266, %v1399, 0.0
  %1412 = vadd.xlane.f32.xlu0 %v1411
  %v1413 = vpop.xlane.xlu0 %1412
  %v1414 = vsel %vm266, %v1400, 0.0
  %1415 = vadd.xlane.f32.xlu0 %v1414
  %v1416 = vpop.xlane.xlu0 %1415
  %v1417 = vsel %vm266, %v1401, 0.0
  %1418 = vadd.xlane.f32.xlu0 %v1417
  %v1419 = vpop.xlane.xlu0 %1418
  %v1420 = vsel %vm266, %v1402, 0.0
  %1421 = vadd.xlane.f32.xlu0 %v1420
  %v1422 = vpop.xlane.xlu0 %1421
  %v1423 = vsel %vm266, %v1403, 0.0
  %1424 = vadd.xlane.f32.xlu0 %v1423
  %v1425 = vpop.xlane.xlu0 %1424
  %v1426 = vmul.f32 %v1410, %v285
  %v1427 = vmul.f32 %v1413, %v285
  %v1428 = vmul.f32 %v1416, %v285
  %v1429 = vmul.f32 %v1419, %v285
  %v1430 = vmul.f32 %v1422, %v285
  %v1431 = vmul.f32 %v1425, %v285
  %v1432 = vsub.f32 %v1398, %v1426
  %v1433 = vsub.f32 %v1399, %v1427
  %v1434 = vsub.f32 %v1400, %v1428
  %v1435 = vsub.f32 %v1401, %v1429
  %v1436 = vsub.f32 %v1402, %v1430
  %v1437 = vsub.f32 %v1403, %v1431
  %v1438 = vmul.f32 %v1432, %v1432
  %v1439 = vmul.f32 %v1433, %v1433
  %v1440 = vmul.f32 %v1434, %v1434
  %v1441 = vmul.f32 %v1435, %v1435
  %v1442 = vmul.f32 %v1436, %v1436
  %v1443 = vmul.f32 %v1437, %v1437
  %v1444 = vsel %vm266, %v1438, 0.0
  %1445 = vadd.xlane.f32.xlu0 %v1444
  %v1446 = vpop.xlane.xlu0 %1445
  %v1447 = vsel %vm266, %v1439, 0.0
  %1448 = vadd.xlane.f32.xlu0 %v1447
  %v1449 = vpop.xlane.xlu0 %1448
  %v1450 = vsel %vm266, %v1440, 0.0
  %1451 = vadd.xlane.f32.xlu0 %v1450
  %v1452 = vpop.xlane.xlu0 %1451
  %v1453 = vsel %vm266, %v1441, 0.0
  %1454 = vadd.xlane.f32.xlu0 %v1453
  %v1455 = vpop.xlane.xlu0 %1454
  %v1456 = vsel %vm266, %v1442, 0.0
  %1457 = vadd.xlane.f32.xlu0 %v1456
  %v1458 = vpop.xlane.xlu0 %1457
  %v1459 = vsel %vm266, %v1443, 0.0
  %1460 = vadd.xlane.f32.xlu0 %v1459
  %v1461 = vpop.xlane.xlu0 %1460
  %v1462 = vmul.f32 %v1446, %v285
  %v1463 = vmul.f32 %v1449, %v285
  %v1464 = vmul.f32 %v1452, %v285
  %v1465 = vmul.f32 %v1455, %v285
  %v1466 = vmul.f32 %v1458, %v285
  %v1467 = vmul.f32 %v1461, %v285
  %v1468 = vadd.f32 %v1462, 1e-12
  %v1469 = vadd.f32 %v1463, 1e-12
  %v1470 = vadd.f32 %v1464, 1e-12
  %v1471 = vadd.f32 %v1465, 1e-12
  %v1472 = vadd.f32 %v1466, 1e-12
  %v1473 = vadd.f32 %v1467, 1e-12
  %v1474 = vrsqrt.pop %v1468
  %v1475 = vrsqrt.pop %v1469
  %v1476 = vrsqrt.pop %v1470
  %v1477 = vrsqrt.pop %v1471
  %v1478 = vrsqrt.pop %v1472
  %v1479 = vrsqrt.pop %v1473
  %v1480 = vmul.f32 %v1432, %v1474
  %v1481 = vmul.f32 %v1433, %v1475
  %v1482 = vmul.f32 %v1434, %v1476
  %v1483 = vmul.f32 %v1435, %v1477
  %v1484 = vmul.f32 %v1436, %v1478
  %v1485 = vmul.f32 %v1437, %v1479
  %v1487 = vlaneseq
  %v1488 = vshrl.u32 %v1487, 7
  %v1489 = vsub.s32 0, %v1488
  %v1490 = vrot.slane %v1405, %v1489
  %v1492 = vmul.f32 %v1480, %v1490
  %v1493 = vmul.f32 %v1481, %v1490
  %v1494 = vmul.f32 %v1482, %v1490
  %v1495 = vmul.f32 %v1483, %v1490
  %v1496 = vmul.f32 %v1484, %v1490
  %v1497 = vmul.f32 %v1485, %v1490
  %v1499 = vlaneseq
  %v1500 = vshrl.u32 %v1499, 7
  %v1501 = vsub.s32 0, %v1500
  %v1502 = vrot.slane %v1407, %v1501
  %v1504 = vadd.f32 %v1492, %v1502
  %v1505 = vadd.f32 %v1493, %v1502
  %v1506 = vadd.f32 %v1494, %v1502
  %v1507 = vadd.f32 %v1495, %v1502
  %v1508 = vadd.f32 %v1496, %v1502
  %v1509 = vadd.f32 %v1497, %v1502
  %s1510 = scalar_lea.vmem %s4, 7
  %v1511 = vld [vmem:[%s1510] sm:$0x1]
  %v1513 = vlaneseq
  %v1514 = vshrl.u32 %v1513, 7
  %v1515 = vsub.s32 0, %v1514
  %v1516 = vrot.slane %v1511, %v1515
  %v1519 = vsel %vm266, %v1504, 0
  %v1522 = vsel %vm266, %v1505, 0
  %v1525 = vsel %vm266, %v1506, 0
  %v1528 = vsel %vm266, %v1507, 0
  %v1531 = vsel %vm266, %v1508, 0
  %v1534 = vsel %vm266, %v1509, 0
  %1536 = vmatprep.subr.mxu0 0.0
  %1537 = vmatpush1.msra.mxu0 0.0
  %1538 = vmatprep.subr.mxu0 0.0
  %1539 = vmatpush1.msra.mxu0 0.0
  %1540 = vmatprep.subr.mxu0 0.0
  %1541 = vmatpush1.msra.mxu0 0.0
  %1542 = vmatprep.subr.mxu0 0.0
  %1543 = vmatpush1.msra.mxu0 0.0
  %1544 = vmatprep.subr.mxu0 0.0
  %1545 = vmatpush1.msra.mxu0 0.0
  %1546 = vmatprep.subr.mxu0 0.0
  %1547 = vmatpush1.msra.mxu0 0.0
  %1548 = vmatprep.subr.mxu0 0.0
  %1549 = vmatpush1.msra.mxu0 0.0
  %1550 = vmatprep.subr.mxu0 0.0
  %1551 = vmatpush1.msra.mxu0 0.0
  %1552 = vmatprep.subr.mxu0 0.0
  %1553 = vmatpush1.msra.mxu0 0.0
  %1554 = vmatprep.subr.mxu0 0.0
  %1555 = vmatpush1.msra.mxu0 0.0
  %1556 = vmatprep.subr.mxu0 0.0
  %1557 = vmatpush1.msra.mxu0 0.0
  %1558 = vmatprep.subr.mxu0 0.0
  %1559 = vmatpush1.msra.mxu0 0.0
  %1560 = vmatprep.subr.mxu0 0.0
  %1561 = vmatpush1.msra.mxu0 %v463
  %1562 = vmatprep.subr.mxu0 0.0
  %1563 = vmatpush1.msra.mxu0 %v461
  %1564 = vmatprep.subr.mxu0 0.0
  %1565 = vmatpush1.msra.mxu0 %v459
  %1566 = vmatprep.subr.mxu0 0.0
  %1567 = vmatpush1.msra.mxu0 %v457
  %1568 = vmatprep.subr.mxu0 0.0
  %1569 = vmatpush2.msra.mxu0 0.0
  %1570 = vmatprep.subr.mxu0 0.0
  %1571 = vmatpush2.msra.mxu0 0.0
  %1572 = vmatprep.subr.mxu0 0.0
  %1573 = vmatpush2.msra.mxu0 0.0
  %1574 = vmatprep.subr.mxu0 0.0
  %1575 = vmatpush2.msra.mxu0 0.0
  %1576 = vmatprep.subr.mxu0 0.0
  %1577 = vmatpush2.msra.mxu0 0.0
  %1578 = vmatprep.subr.mxu0 0.0
  %1579 = vmatpush2.msra.mxu0 0.0
  %1580 = vmatprep.subr.mxu0 0.0
  %1581 = vmatpush2.msra.mxu0 0.0
  %1582 = vmatprep.subr.mxu0 0.0
  %1583 = vmatpush2.msra.mxu0 0.0
  %1584 = vmatprep.subr.mxu0 0.0
  %1585 = vmatpush2.msra.mxu0 0.0
  %1586 = vmatprep.subr.mxu0 0.0
  %1587 = vmatpush2.msra.mxu0 0.0
  %1588 = vmatprep.subr.mxu0 0.0
  %1589 = vmatpush2.msra.mxu0 0.0
  %1590 = vmatprep.subr.mxu0 0.0
  %1591 = vmatpush2.msra.mxu0 0.0
  %1592 = vmatprep.subr.mxu0 0.0
  %1593 = vmatpush2.msra.mxu0 0.0
  %1594 = vmatprep.subr.mxu0 0.0
  %1595 = vmatpush2.msra.mxu0 0.0
  %1596 = vmatprep.subr.mxu0 0.0
  %1597 = vmatpush2.msra.mxu0 0.0
  %1598 = vmatprep.subr.mxu0 0.0
  %1599 = vmatpush2.msra.mxu0 0.0
  %1600 = vmatprep.mubr.f32.mxu0 0.0
  %1601 = vmatmul.mubr.f32.gmra.mxu0 %v1519
  %v1602 = vpop.f32.mrf.mxu0
  %v1603 = vadd.f32 %v1516, %v1602
  %v1604 = vpop.f32.mrf.mxu0
  %1605 = vmatprep.mubr.f32.mxu0 0.0
  %1606 = vmatmul.mubr.f32.gmra.mxu0 %v1522
  %v1607 = vpop.f32.mrf.mxu0
  %v1608 = vadd.f32 %v1516, %v1607
  %v1609 = vpop.f32.mrf.mxu0
  %1610 = vmatprep.mubr.f32.mxu0 0.0
  %1611 = vmatmul.mubr.f32.gmra.mxu0 %v1525
  %v1612 = vpop.f32.mrf.mxu0
  %v1613 = vadd.f32 %v1516, %v1612
  %v1614 = vpop.f32.mrf.mxu0
  %1615 = vmatprep.mubr.f32.mxu0 0.0
  %1616 = vmatmul.mubr.f32.gmra.mxu0 %v1528
  %v1617 = vpop.f32.mrf.mxu0
  %v1618 = vadd.f32 %v1516, %v1617
  %v1619 = vpop.f32.mrf.mxu0
  %1620 = vmatprep.mubr.f32.mxu0 0.0
  %1621 = vmatmul.mubr.f32.gmra.mxu0 %v1531
  %v1622 = vpop.f32.mrf.mxu0
  %v1623 = vadd.f32 %v1516, %v1622
  %v1624 = vpop.f32.mrf.mxu0
  %1625 = vmatprep.mubr.f32.mxu0 0.0
  %1626 = vmatmul.mubr.f32.gmra.mxu0 %v1534
  %v1627 = vpop.f32.mrf.mxu0
  %v1628 = vadd.f32 %v1516, %v1627
  %v1629 = vpop.f32.mrf.mxu0
  %1630 = vdwg.mxu0
  %v1631 = vmul.f32 %v1603, 0.5
  %v1632 = vmul.f32 %v1608, 0.5
  %v1633 = vmul.f32 %v1613, 0.5
  %v1634 = vmul.f32 %v1618, 0.5
  %v1635 = vmul.f32 %v1623, 0.5
  %v1636 = vmul.f32 %v1628, 0.5
  %v1637 = vmul.f32 %v1603, 0.044715
  %v1638 = vmul.f32 %v1608, 0.044715
  %v1639 = vmul.f32 %v1613, 0.044715
  %v1640 = vmul.f32 %v1618, 0.044715
  %v1641 = vmul.f32 %v1623, 0.044715
  %v1642 = vmul.f32 %v1628, 0.044715
  %v1643 = vmul.f32 %v1637, %v1603
  %v1644 = vmul.f32 %v1638, %v1608
  %v1645 = vmul.f32 %v1639, %v1613
  %v1646 = vmul.f32 %v1640, %v1618
  %v1647 = vmul.f32 %v1641, %v1623
  %v1648 = vmul.f32 %v1642, %v1628
  %v1649 = vmul.f32 %v1643, %v1603
  %v1650 = vmul.f32 %v1644, %v1608
  %v1651 = vmul.f32 %v1645, %v1613
  %v1652 = vmul.f32 %v1646, %v1618
  %v1653 = vmul.f32 %v1647, %v1623
  %v1654 = vmul.f32 %v1648, %v1628
  %v1655 = vadd.f32 %v1603, %v1649
  %v1656 = vadd.f32 %v1608, %v1650
  %v1657 = vadd.f32 %v1613, %v1651
  %v1658 = vadd.f32 %v1618, %v1652
  %v1659 = vadd.f32 %v1623, %v1653
  %v1660 = vadd.f32 %v1628, %v1654
  %v1661 = vmul.f32 %v1655, 0.7978846
  %v1662 = vmul.f32 %v1656, 0.7978846
  %v1663 = vmul.f32 %v1657, 0.7978846
  %v1664 = vmul.f32 %v1658, 0.7978846
  %v1665 = vmul.f32 %v1659, 0.7978846
  %v1666 = vmul.f32 %v1660, 0.7978846
  %v1667 = vtanh.pop %v1661
  %v1668 = vtanh.pop %v1662
  %v1669 = vtanh.pop %v1663
  %v1670 = vtanh.pop %v1664
  %v1671 = vtanh.pop %v1665
  %v1672 = vtanh.pop %v1666
  %v1673 = vadd.f32 %v1667, 1.0
  %v1674 = vadd.f32 %v1668, 1.0
  %v1675 = vadd.f32 %v1669, 1.0
  %v1676 = vadd.f32 %v1670, 1.0
  %v1677 = vadd.f32 %v1671, 1.0
  %v1678 = vadd.f32 %v1672, 1.0
  %v1679 = vmul.f32 %v1631, %v1673
  %v1680 = vmul.f32 %v1632, %v1674
  %v1681 = vmul.f32 %v1633, %v1675
  %v1682 = vmul.f32 %v1634, %v1676
  %v1683 = vmul.f32 %v1635, %v1677
  %v1684 = vmul.f32 %v1636, %v1678
  %v1685 = vld [vmem:[%s3] sm:$0xff]
  %v1686 = vld [vmem:[%s3 + $0x8] sm:$0xff]
  %v1687 = vld [vmem:[%s3 + $0x10] sm:$0xff]
  %v1688 = vld [vmem:[%s3 + $0x18] sm:$0xff]
  %v1689 = vld [vmem:[%s3 + $0x20] sm:$0xff]
  %v1690 = vld [vmem:[%s3 + $0x28] sm:$0xff]
  %v1691 = vld [vmem:[%s3 + $0x30] sm:$0xff]
  %v1692 = vld [vmem:[%s3 + $0x38] sm:$0xff]
  %s1693 = scalar_lea.vmem %s4, 8
  %v1694 = vld [vmem:[%s1693] sm:$0x1]
  %v1696 = vlaneseq
  %v1697 = vshrl.u32 %v1696, 7
  %v1698 = vsub.s32 0, %v1697
  %v1699 = vrot.slane %v1694, %v1698
  %vm1701 = vcmask 523264
  %v1703 = vsel %vm1701, %v1679, 0
  %v1706 = vsel %vm1701, %v1680, 0
  %v1709 = vsel %vm1701, %v1681, 0
  %v1712 = vsel %vm1701, %v1682, 0
  %v1715 = vsel %vm1701, %v1683, 0
  %v1718 = vsel %vm1701, %v1684, 0
  %1720 = vmatprep.subr.mxu0 0.0
  %1721 = vmatpush1.msra.mxu0 0.0
  %1722 = vmatprep.subr.mxu0 0.0
  %1723 = vmatpush1.msra.mxu0 0.0
  %1724 = vmatprep.subr.mxu0 0.0
  %1725 = vmatpush1.msra.mxu0 0.0
  %1726 = vmatprep.subr.mxu0 0.0
  %1727 = vmatpush1.msra.mxu0 0.0
  %1728 = vmatprep.subr.mxu0 0.0
  %1729 = vmatpush1.msra.mxu0 0.0
  %1730 = vmatprep.subr.mxu0 0.0
  %1731 = vmatpush1.msra.mxu0 0.0
  %1732 = vmatprep.subr.mxu0 0.0
  %1733 = vmatpush1.msra.mxu0 0.0
  %1734 = vmatprep.subr.mxu0 0.0
  %1735 = vmatpush1.msra.mxu0 0.0
  %1736 = vmatprep.subr.mxu0 0.0
  %1737 = vmatpush1.msra.mxu0 %v1692
  %1738 = vmatprep.subr.mxu0 0.0
  %1739 = vmatpush1.msra.mxu0 %v1691
  %1740 = vmatprep.subr.mxu0 0.0
  %1741 = vmatpush1.msra.mxu0 %v1690
  %1742 = vmatprep.subr.mxu0 0.0
  %1743 = vmatpush1.msra.mxu0 %v1689
  %1744 = vmatprep.subr.mxu0 0.0
  %1745 = vmatpush1.msra.mxu0 %v1688
  %1746 = vmatprep.subr.mxu0 0.0
  %1747 = vmatpush1.msra.mxu0 %v1687
  %1748 = vmatprep.subr.mxu0 0.0
  %1749 = vmatpush1.msra.mxu0 %v1686
  %1750 = vmatprep.subr.mxu0 0.0
  %1751 = vmatpush1.msra.mxu0 %v1685
  %1752 = vmatprep.subr.mxu0 0.0
  %1753 = vmatpush2.msra.mxu0 0.0
  %1754 = vmatprep.subr.mxu0 0.0
  %1755 = vmatpush2.msra.mxu0 0.0
  %1756 = vmatprep.subr.mxu0 0.0
  %1757 = vmatpush2.msra.mxu0 0.0
  %1758 = vmatprep.subr.mxu0 0.0
  %1759 = vmatpush2.msra.mxu0 0.0
  %1760 = vmatprep.subr.mxu0 0.0
  %1761 = vmatpush2.msra.mxu0 0.0
  %1762 = vmatprep.subr.mxu0 0.0
  %1763 = vmatpush2.msra.mxu0 0.0
  %1764 = vmatprep.subr.mxu0 0.0
  %1765 = vmatpush2.msra.mxu0 0.0
  %1766 = vmatprep.subr.mxu0 0.0
  %1767 = vmatpush2.msra.mxu0 0.0
  %1768 = vmatprep.subr.mxu0 0.0
  %1769 = vmatpush2.msra.mxu0 0.0
  %1770 = vmatprep.subr.mxu0 0.0
  %1771 = vmatpush2.msra.mxu0 0.0
  %1772 = vmatprep.subr.mxu0 0.0
  %1773 = vmatpush2.msra.mxu0 0.0
  %1774 = vmatprep.subr.mxu0 0.0
  %1775 = vmatpush2.msra.mxu0 0.0
  %1776 = vmatprep.subr.mxu0 0.0
  %1777 = vmatpush2.msra.mxu0 0.0
  %1778 = vmatprep.subr.mxu0 0.0
  %1779 = vmatpush2.msra.mxu0 0.0
  %1780 = vmatprep.subr.mxu0 0.0
  %1781 = vmatpush2.msra.mxu0 0.0
  %1782 = vmatprep.subr.mxu0 0.0
  %1783 = vmatpush2.msra.mxu0 0.0
  %1784 = vmatprep.mubr.f32.mxu0 0.0
  %1785 = vmatmul.mubr.f32.gmra.mxu0 %v1703
  %v1786 = vpop.f32.mrf.mxu0
  %v1787 = vadd.f32 %v1699, %v1786
  %v1788 = vpop.f32.mrf.mxu0
  %1789 = vmatprep.mubr.f32.mxu0 0.0
  %1790 = vmatmul.mubr.f32.gmra.mxu0 %v1706
  %v1791 = vpop.f32.mrf.mxu0
  %v1792 = vadd.f32 %v1699, %v1791
  %v1793 = vpop.f32.mrf.mxu0
  %1794 = vmatprep.mubr.f32.mxu0 0.0
  %1795 = vmatmul.mubr.f32.gmra.mxu0 %v1709
  %v1796 = vpop.f32.mrf.mxu0
  %v1797 = vadd.f32 %v1699, %v1796
  %v1798 = vpop.f32.mrf.mxu0
  %1799 = vmatprep.mubr.f32.mxu0 0.0
  %1800 = vmatmul.mubr.f32.gmra.mxu0 %v1712
  %v1801 = vpop.f32.mrf.mxu0
  %v1802 = vadd.f32 %v1699, %v1801
  %v1803 = vpop.f32.mrf.mxu0
  %1804 = vmatprep.mubr.f32.mxu0 0.0
  %1805 = vmatmul.mubr.f32.gmra.mxu0 %v1715
  %v1806 = vpop.f32.mrf.mxu0
  %v1807 = vadd.f32 %v1699, %v1806
  %v1808 = vpop.f32.mrf.mxu0
  %1809 = vmatprep.mubr.f32.mxu0 0.0
  %1810 = vmatmul.mubr.f32.gmra.mxu0 %v1718
  %v1811 = vpop.f32.mrf.mxu0
  %v1812 = vadd.f32 %v1699, %v1811
  %v1813 = vpop.f32.mrf.mxu0
  %1814 = vdwg.mxu0
  %v1815 = vadd.f32 %v1504, %v1787
  %v1816 = vadd.f32 %v1505, %v1792
  %v1817 = vadd.f32 %v1506, %v1797
  %v1818 = vadd.f32 %v1507, %v1802
  %v1819 = vadd.f32 %v1508, %v1807
  %v1820 = vadd.f32 %v1509, %v1812
  %s1821 = scalar_lea.vmem %s4, 9
  %v1822 = vld [vmem:[%s1821] sm:$0x1]
  %s1823 = scalar_lea.vmem %s4, 10
  %v1824 = vld [vmem:[%s1823] sm:$0x1]
  %v1825 = vsel %vm266, %v1815, 0.0
  %1826 = vadd.xlane.f32.xlu0 %v1825
  %v1827 = vpop.xlane.xlu0 %1826
  %v1828 = vsel %vm266, %v1816, 0.0
  %1829 = vadd.xlane.f32.xlu0 %v1828
  %v1830 = vpop.xlane.xlu0 %1829
  %v1831 = vsel %vm266, %v1817, 0.0
  %1832 = vadd.xlane.f32.xlu0 %v1831
  %v1833 = vpop.xlane.xlu0 %1832
  %v1834 = vsel %vm266, %v1818, 0.0
  %1835 = vadd.xlane.f32.xlu0 %v1834
  %v1836 = vpop.xlane.xlu0 %1835
  %v1837 = vsel %vm266, %v1819, 0.0
  %1838 = vadd.xlane.f32.xlu0 %v1837
  %v1839 = vpop.xlane.xlu0 %1838
  %v1840 = vsel %vm266, %v1820, 0.0
  %1841 = vadd.xlane.f32.xlu0 %v1840
  %v1842 = vpop.xlane.xlu0 %1841
  %v1843 = vmul.f32 %v1827, %v285
  %v1844 = vmul.f32 %v1830, %v285
  %v1845 = vmul.f32 %v1833, %v285
  %v1846 = vmul.f32 %v1836, %v285
  %v1847 = vmul.f32 %v1839, %v285
  %v1848 = vmul.f32 %v1842, %v285
  %v1849 = vsub.f32 %v1815, %v1843
  %v1850 = vsub.f32 %v1816, %v1844
  %v1851 = vsub.f32 %v1817, %v1845
  %v1852 = vsub.f32 %v1818, %v1846
  %v1853 = vsub.f32 %v1819, %v1847
  %v1854 = vsub.f32 %v1820, %v1848
  %v1855 = vmul.f32 %v1849, %v1849
  %v1856 = vmul.f32 %v1850, %v1850
  %v1857 = vmul.f32 %v1851, %v1851
  %v1858 = vmul.f32 %v1852, %v1852
  %v1859 = vmul.f32 %v1853, %v1853
  %v1860 = vmul.f32 %v1854, %v1854
  %v1861 = vsel %vm266, %v1855, 0.0
  %1862 = vadd.xlane.f32.xlu0 %v1861
  %v1863 = vpop.xlane.xlu0 %1862
  %v1864 = vsel %vm266, %v1856, 0.0
  %1865 = vadd.xlane.f32.xlu0 %v1864
  %v1866 = vpop.xlane.xlu0 %1865
  %v1867 = vsel %vm266, %v1857, 0.0
  %1868 = vadd.xlane.f32.xlu0 %v1867
  %v1869 = vpop.xlane.xlu0 %1868
  %v1870 = vsel %vm266, %v1858, 0.0
  %1871 = vadd.xlane.f32.xlu0 %v1870
  %v1872 = vpop.xlane.xlu0 %1871
  %v1873 = vsel %vm266, %v1859, 0.0
  %1874 = vadd.xlane.f32.xlu0 %v1873
  %v1875 = vpop.xlane.xlu0 %1874
  %v1876 = vsel %vm266, %v1860, 0.0
  %1877 = vadd.xlane.f32.xlu0 %v1876
  %v1878 = vpop.xlane.xlu0 %1877
  %v1879 = vmul.f32 %v1863, %v285
  %v1880 = vmul.f32 %v1866, %v285
  %v1881 = vmul.f32 %v1869, %v285
  %v1882 = vmul.f32 %v1872, %v285
  %v1883 = vmul.f32 %v1875, %v285
  %v1884 = vmul.f32 %v1878, %v285
  %v1885 = vadd.f32 %v1879, 1e-12
  %v1886 = vadd.f32 %v1880, 1e-12
  %v1887 = vadd.f32 %v1881, 1e-12
  %v1888 = vadd.f32 %v1882, 1e-12
  %v1889 = vadd.f32 %v1883, 1e-12
  %v1890 = vadd.f32 %v1884, 1e-12
  %v1891 = vrsqrt.pop %v1885
  %v1892 = vrsqrt.pop %v1886
  %v1893 = vrsqrt.pop %v1887
  %v1894 = vrsqrt.pop %v1888
  %v1895 = vrsqrt.pop %v1889
  %v1896 = vrsqrt.pop %v1890
  %v1897 = vmul.f32 %v1849, %v1891
  %v1898 = vmul.f32 %v1850, %v1892
  %v1899 = vmul.f32 %v1851, %v1893
  %v1900 = vmul.f32 %v1852, %v1894
  %v1901 = vmul.f32 %v1853, %v1895
  %v1902 = vmul.f32 %v1854, %v1896
  %v1904 = vlaneseq
  %v1905 = vshrl.u32 %v1904, 7
  %v1906 = vsub.s32 0, %v1905
  %v1907 = vrot.slane %v1822, %v1906
  %v1909 = vmul.f32 %v1897, %v1907
  %v1910 = vmul.f32 %v1898, %v1907
  %v1911 = vmul.f32 %v1899, %v1907
  %v1912 = vmul.f32 %v1900, %v1907
  %v1913 = vmul.f32 %v1901, %v1907
  %v1914 = vmul.f32 %v1902, %v1907
  %v1916 = vlaneseq
  %v1917 = vshrl.u32 %v1916, 7
  %v1918 = vsub.s32 0, %v1917
  %v1919 = vrot.slane %v1824, %v1918
  %v1921 = vadd.f32 %v1909, %v1919
  %v1922 = vadd.f32 %v1910, %v1919
  %v1923 = vadd.f32 %v1911, %v1919
  %v1924 = vadd.f32 %v1912, %v1919
  %v1925 = vadd.f32 %v1913, %v1919
  %v1926 = vadd.f32 %v1914, %v1919
  %s1927 = scalar_lea.vmem %s2, 64
  %v1928 = vld [vmem:[%s1927] sm:$0xff]
  %v1929 = vld [vmem:[%s1927 + $0x8] sm:$0xff]
  %v1930 = vld [vmem:[%s1927 + $0x10] sm:$0xff]
  %v1931 = vld [vmem:[%s1927 + $0x18] sm:$0xff]
  %v1932 = vld [vmem:[%s1927 + $0x20] sm:$0xff]
  %v1933 = vld [vmem:[%s1927 + $0x28] sm:$0xff]
  %v1934 = vld [vmem:[%s1927 + $0x30] sm:$0xff]
  %v1935 = vld [vmem:[%s1927 + $0x38] sm:$0xff]
  %s1936 = scalar_lea.vmem %s4, 11
  %v1937 = vld [vmem:[%s1936] sm:$0x1]
  %v1939 = vlaneseq
  %v1940 = vshrl.u32 %v1939, 7
  %v1941 = vsub.s32 0, %v1940
  %v1942 = vrot.slane %v1937, %v1941
  %v1945 = vsel %vm266, %v1921, 0
  %v1948 = vsel %vm266, %v1922, 0
  %v1951 = vsel %vm266, %v1923, 0
  %v1954 = vsel %vm266, %v1924, 0
  %v1957 = vsel %vm266, %v1925, 0
  %v1960 = vsel %vm266, %v1926, 0
  %1962 = vmatprep.subr.mxu0 0.0
  %1963 = vmatpush1.msra.mxu0 0.0
  %1964 = vmatprep.subr.mxu0 0.0
  %1965 = vmatpush1.msra.mxu0 0.0
  %1966 = vmatprep.subr.mxu0 0.0
  %1967 = vmatpush1.msra.mxu0 0.0
  %1968 = vmatprep.subr.mxu0 0.0
  %1969 = vmatpush1.msra.mxu0 0.0
  %1970 = vmatprep.subr.mxu0 0.0
  %1971 = vmatpush1.msra.mxu0 0.0
  %1972 = vmatprep.subr.mxu0 0.0
  %1973 = vmatpush1.msra.mxu0 0.0
  %1974 = vmatprep.subr.mxu0 0.0
  %1975 = vmatpush1.msra.mxu0 0.0
  %1976 = vmatprep.subr.mxu0 0.0
  %1977 = vmatpush1.msra.mxu0 0.0
  %1978 = vmatprep.subr.mxu0 0.0
  %1979 = vmatpush1.msra.mxu0 0.0
  %1980 = vmatprep.subr.mxu0 0.0
  %1981 = vmatpush1.msra.mxu0 0.0
  %1982 = vmatprep.subr.mxu0 0.0
  %1983 = vmatpush1.msra.mxu0 0.0
  %1984 = vmatprep.subr.mxu0 0.0
  %1985 = vmatpush1.msra.mxu0 0.0
  %1986 = vmatprep.subr.mxu0 0.0
  %1987 = vmatpush1.msra.mxu0 %v1934
  %1988 = vmatprep.subr.mxu0 0.0
  %1989 = vmatpush1.msra.mxu0 %v1932
  %1990 = vmatprep.subr.mxu0 0.0
  %1991 = vmatpush1.msra.mxu0 %v1930
  %1992 = vmatprep.subr.mxu0 0.0
  %1993 = vmatpush1.msra.mxu0 %v1928
  %1994 = vmatprep.subr.mxu0 0.0
  %1995 = vmatpush2.msra.mxu0 0.0
  %1996 = vmatprep.subr.mxu0 0.0
  %1997 = vmatpush2.msra.mxu0 0.0
  %1998 = vmatprep.subr.mxu0 0.0
  %1999 = vmatpush2.msra.mxu0 0.0
  %2000 = vmatprep.subr.mxu0 0.0
  %2001 = vmatpush2.msra.mxu0 0.0
  %2002 = vmatprep.subr.mxu0 0.0
  %2003 = vmatpush2.msra.mxu0 0.0
  %2004 = vmatprep.subr.mxu0 0.0
  %2005 = vmatpush2.msra.mxu0 0.0
  %2006 = vmatprep.subr.mxu0 0.0
  %2007 = vmatpush2.msra.mxu0 0.0
  %2008 = vmatprep.subr.mxu0 0.0
  %2009 = vmatpush2.msra.mxu0 0.0
  %2010 = vmatprep.subr.mxu0 0.0
  %2011 = vmatpush2.msra.mxu0 0.0
  %2012 = vmatprep.subr.mxu0 0.0
  %2013 = vmatpush2.msra.mxu0 0.0
  %2014 = vmatprep.subr.mxu0 0.0
  %2015 = vmatpush2.msra.mxu0 0.0
  %2016 = vmatprep.subr.mxu0 0.0
  %2017 = vmatpush2.msra.mxu0 0.0
  %2018 = vmatprep.subr.mxu0 0.0
  %2019 = vmatpush2.msra.mxu0 0.0
  %2020 = vmatprep.subr.mxu0 0.0
  %2021 = vmatpush2.msra.mxu0 0.0
  %2022 = vmatprep.subr.mxu0 0.0
  %2023 = vmatpush2.msra.mxu0 0.0
  %2024 = vmatprep.subr.mxu0 0.0
  %2025 = vmatpush2.msra.mxu0 0.0
  %2026 = vmatprep.mubr.f32.mxu0 0.0
  %2027 = vmatmul.mubr.f32.gmra.mxu0 %v1945
  %v2028 = vpop.f32.mrf.mxu0
  %v2029 = vadd.f32 %v1942, %v2028
  %v2030 = vpop.f32.mrf.mxu0
  %2031 = vmatprep.mubr.f32.mxu0 0.0
  %2032 = vmatmul.mubr.f32.gmra.mxu0 %v1948
  %v2033 = vpop.f32.mrf.mxu0
  %v2034 = vadd.f32 %v1942, %v2033
  %v2035 = vpop.f32.mrf.mxu0
  %2036 = vmatprep.mubr.f32.mxu0 0.0
  %2037 = vmatmul.mubr.f32.gmra.mxu0 %v1951
  %v2038 = vpop.f32.mrf.mxu0
  %v2039 = vadd.f32 %v1942, %v2038
  %v2040 = vpop.f32.mrf.mxu0
  %2041 = vmatprep.mubr.f32.mxu0 0.0
  %2042 = vmatmul.mubr.f32.gmra.mxu0 %v1954
  %v2043 = vpop.f32.mrf.mxu0
  %v2044 = vadd.f32 %v1942, %v2043
  %v2045 = vpop.f32.mrf.mxu0
  %2046 = vmatprep.mubr.f32.mxu0 0.0
  %2047 = vmatmul.mubr.f32.gmra.mxu0 %v1957
  %v2048 = vpop.f32.mrf.mxu0
  %v2049 = vadd.f32 %v1942, %v2048
  %v2050 = vpop.f32.mrf.mxu0
  %2051 = vmatprep.mubr.f32.mxu0 0.0
  %2052 = vmatmul.mubr.f32.gmra.mxu0 %v1960
  %v2053 = vpop.f32.mrf.mxu0
  %v2054 = vadd.f32 %v1942, %v2053
  %v2055 = vpop.f32.mrf.mxu0
  %2056 = vdwg.mxu0
  %2063 = vrot.lane.b32.xlu0 %v2029, 96
  %v2064 = vpop.permute.xlu0 %2063
  %2065 = vrot.lane.b32.xlu0 %v2034, 96
  %v2066 = vpop.permute.xlu0 %2065
  %2067 = vrot.lane.b32.xlu0 %v2039, 96
  %v2068 = vpop.permute.xlu0 %2067
  %2069 = vrot.lane.b32.xlu0 %v2044, 96
  %v2070 = vpop.permute.xlu0 %2069
  %2071 = vrot.lane.b32.xlu0 %v2049, 96
  %v2072 = vpop.permute.xlu0 %2071
  %2073 = vrot.lane.b32.xlu0 %v2054, 96
  %v2074 = vpop.permute.xlu0 %2073
  %v2075 = vsel %vm603, %v2029, 0
  %v2077 = vsel %vm603, %v2034, 0
  %v2079 = vsel %vm603, %v2039, 0
  %v2081 = vsel %vm603, %v2044, 0
  %v2083 = vsel %vm603, %v2049, 0
  %v2085 = vsel %vm603, %v2054, 0
  %v2087 = vsel %vm603, %v2064, 0
  %v2089 = vsel %vm603, %v2066, 0
  %v2091 = vsel %vm603, %v2068, 0
  %v2093 = vsel %vm603, %v2070, 0
  %v2095 = vsel %vm603, %v2072, 0
  %v2097 = vsel %vm603, %v2074, 0
  %2099 = vmatprep.subr.mxu0 0.0
  %2100 = vmatpush1.xpose.msra.mxu0 0.0
  %2101 = vmatprep.subr.mxu0 0.0
  %2102 = vmatpush1.xpose.msra.mxu0 0.0
  %2103 = vmatprep.subr.mxu0 0.0
  %2104 = vmatpush1.xpose.msra.mxu0 0.0
  %2105 = vmatprep.subr.mxu0 0.0
  %2106 = vmatpush1.xpose.msra.mxu0 0.0
  %2107 = vmatprep.subr.mxu0 0.0
  %2108 = vmatpush1.xpose.msra.mxu0 0.0
  %2109 = vmatprep.subr.mxu0 0.0
  %2110 = vmatpush1.xpose.msra.mxu0 0.0
  %2111 = vmatprep.subr.mxu0 0.0
  %2112 = vmatpush1.xpose.msra.mxu0 0.0
  %2113 = vmatprep.subr.mxu0 0.0
  %2114 = vmatpush1.xpose.msra.mxu0 0.0
  %2115 = vmatprep.subr.mxu0 0.0
  %2116 = vmatpush1.xpose.msra.mxu0 0.0
  %2117 = vmatprep.subr.mxu0 0.0
  %2118 = vmatpush1.xpose.msra.mxu0 0.0
  %2119 = vmatprep.subr.mxu0 0.0
  %2120 = vmatpush1.xpose.msra.mxu0 %v2097
  %2121 = vmatprep.subr.mxu0 0.0
  %2122 = vmatpush1.xpose.msra.mxu0 %v2095
  %2123 = vmatprep.subr.mxu0 0.0
  %2124 = vmatpush1.xpose.msra.mxu0 %v2093
  %2125 = vmatprep.subr.mxu0 0.0
  %2126 = vmatpush1.xpose.msra.mxu0 %v2091
  %2127 = vmatprep.subr.mxu0 0.0
  %2128 = vmatpush1.xpose.msra.mxu0 %v2089
  %2129 = vmatprep.subr.mxu0 0.0
  %2130 = vmatpush1.xpose.msra.mxu0 %v2087
  %2131 = vmatprep.subr.mxu0 0.0
  %2132 = vmatpush2.xpose.msra.mxu0 0.0
  %2133 = vmatprep.subr.mxu0 0.0
  %2134 = vmatpush2.xpose.msra.mxu0 0.0
  %2135 = vmatprep.subr.mxu0 0.0
  %2136 = vmatpush2.xpose.msra.mxu0 0.0
  %2137 = vmatprep.subr.mxu0 0.0
  %2138 = vmatpush2.xpose.msra.mxu0 0.0
  %2139 = vmatprep.subr.mxu0 0.0
  %2140 = vmatpush2.xpose.msra.mxu0 0.0
  %2141 = vmatprep.subr.mxu0 0.0
  %2142 = vmatpush2.xpose.msra.mxu0 0.0
  %2143 = vmatprep.subr.mxu0 0.0
  %2144 = vmatpush2.xpose.msra.mxu0 0.0
  %2145 = vmatprep.subr.mxu0 0.0
  %2146 = vmatpush2.xpose.msra.mxu0 0.0
  %2147 = vmatprep.subr.mxu0 0.0
  %2148 = vmatpush2.xpose.msra.mxu0 0.0
  %2149 = vmatprep.subr.mxu0 0.0
  %2150 = vmatpush2.xpose.msra.mxu0 0.0
  %2151 = vmatprep.subr.mxu0 0.0
  %2152 = vmatpush2.xpose.msra.mxu0 0.0
  %2153 = vmatprep.subr.mxu0 0.0
  %2154 = vmatpush2.xpose.msra.mxu0 0.0
  %2155 = vmatprep.subr.mxu0 0.0
  %2156 = vmatpush2.xpose.msra.mxu0 0.0
  %2157 = vmatprep.subr.mxu0 0.0
  %2158 = vmatpush2.xpose.msra.mxu0 0.0
  %2159 = vmatprep.subr.mxu0 0.0
  %2160 = vmatpush2.xpose.msra.mxu0 0.0
  %2161 = vmatprep.subr.mxu0 0.0
  %2162 = vmatpush2.xpose.msra.mxu0 0.0
  %2163 = vmatprep.mubr.f32.mxu0 0.0
  %2164 = vmatmul.mubr.f32.gmra.mxu0 %v2075
  %v2165 = vpop.f32.mrf.mxu0
  %v2166 = vadd.f32 %v450, %v2165
  %v2167 = vpop.f32.mrf.mxu0
  %2168 = vmatprep.mubr.f32.mxu0 0.0
  %2169 = vmatmul.mubr.f32.gmra.mxu0 %v2077
  %v2170 = vpop.f32.mrf.mxu0
  %v2171 = vadd.f32 %v451, %v2170
  %v2172 = vpop.f32.mrf.mxu0
  %2173 = vmatprep.mubr.f32.mxu0 0.0
  %2174 = vmatmul.mubr.f32.gmra.mxu0 %v2079
  %v2175 = vpop.f32.mrf.mxu0
  %v2176 = vadd.f32 %v452, %v2175
  %v2177 = vpop.f32.mrf.mxu0
  %2178 = vmatprep.mubr.f32.mxu0 0.0
  %2179 = vmatmul.mubr.f32.gmra.mxu0 %v2081
  %v2180 = vpop.f32.mrf.mxu0
  %v2181 = vadd.f32 %v453, %v2180
  %v2182 = vpop.f32.mrf.mxu0
  %2183 = vmatprep.mubr.f32.mxu0 0.0
  %2184 = vmatmul.mubr.f32.gmra.mxu0 %v2083
  %v2185 = vpop.f32.mrf.mxu0
  %v2186 = vadd.f32 %v454, %v2185
  %v2187 = vpop.f32.mrf.mxu0
  %2188 = vmatprep.mubr.f32.mxu0 0.0
  %2189 = vmatmul.mubr.f32.gmra.mxu0 %v2085
  %v2190 = vpop.f32.mrf.mxu0
  %v2191 = vadd.f32 %v455, %v2190
  %v2192 = vpop.f32.mrf.mxu0
  %2193 = vdwg.mxu0
  %v2194 = vsel %vm723, %v2166, -inf
  %2195 = vmax.xlane.f32.xlu0 %v2194
  %v2196 = vpop.xlane.xlu0 %2195
  %v2197 = vsel %vm723, %v2171, -inf
  %2198 = vmax.xlane.f32.xlu0 %v2197
  %v2199 = vpop.xlane.xlu0 %2198
  %v2200 = vsel %vm723, %v2176, -inf
  %2201 = vmax.xlane.f32.xlu0 %v2200
  %v2202 = vpop.xlane.xlu0 %2201
  %v2203 = vsel %vm723, %v2181, -inf
  %2204 = vmax.xlane.f32.xlu0 %v2203
  %v2205 = vpop.xlane.xlu0 %2204
  %v2206 = vsel %vm723, %v2186, -inf
  %2207 = vmax.xlane.f32.xlu0 %v2206
  %v2208 = vpop.xlane.xlu0 %2207
  %v2209 = vsel %vm723, %v2191, -inf
  %2210 = vmax.xlane.f32.xlu0 %v2209
  %v2211 = vpop.xlane.xlu0 %2210
  %v2212 = vsub.f32 %v2166, %v2196
  %v2213 = vsub.f32 %v2171, %v2199
  %v2214 = vsub.f32 %v2176, %v2202
  %v2215 = vsub.f32 %v2181, %v2205
  %v2216 = vsub.f32 %v2186, %v2208
  %v2217 = vsub.f32 %v2191, %v2211
  %v2218 = vmul.f32 %v2212, 1.442695
  %v2219 = vpow.pop %v2218
  %v2220 = vmul.f32 %v2213, 1.442695
  %v2221 = vpow.pop %v2220
  %v2222 = vmul.f32 %v2214, 1.442695
  %v2223 = vpow.pop %v2222
  %v2224 = vmul.f32 %v2215, 1.442695
  %v2225 = vpow.pop %v2224
  %v2226 = vmul.f32 %v2216, 1.442695
  %v2227 = vpow.pop %v2226
  %v2228 = vmul.f32 %v2217, 1.442695
  %v2229 = vpow.pop %v2228
  %v2230 = vsel %vm723, %v2219, 0.0
  %2231 = vadd.xlane.f32.xlu0 %v2230
  %v2232 = vpop.xlane.xlu0 %2231
  %v2233 = vsel %vm723, %v2221, 0.0
  %2234 = vadd.xlane.f32.xlu0 %v2233
  %v2235 = vpop.xlane.xlu0 %2234
  %v2236 = vsel %vm723, %v2223, 0.0
  %2237 = vadd.xlane.f32.xlu0 %v2236
  %v2238 = vpop.xlane.xlu0 %2237
  %v2239 = vsel %vm723, %v2225, 0.0
  %2240 = vadd.xlane.f32.xlu0 %v2239
  %v2241 = vpop.xlane.xlu0 %2240
  %v2242 = vsel %vm723, %v2227, 0.0
  %2243 = vadd.xlane.f32.xlu0 %v2242
  %v2244 = vpop.xlane.xlu0 %2243
  %v2245 = vsel %vm723, %v2229, 0.0
  %2246 = vadd.xlane.f32.xlu0 %v2245
  %v2247 = vpop.xlane.xlu0 %2246
  %v2248 = vrcp.pop %v2232
  %v2249 = vrcp.pop %v2235
  %v2250 = vrcp.pop %v2238
  %v2251 = vrcp.pop %v2241
  %v2252 = vrcp.pop %v2244
  %v2253 = vrcp.pop %v2247
  %v2254 = vmul.f32 %v2219, %v2248
  %v2255 = vmul.f32 %v2221, %v2249
  %v2256 = vmul.f32 %v2223, %v2250
  %v2257 = vmul.f32 %v2225, %v2251
  %v2258 = vmul.f32 %v2227, %v2252
  %v2259 = vmul.f32 %v2229, %v2253
  %2260 = vrot.lane.b32.xlu0 %v2029, 64
  %v2261 = vpop.permute.xlu0 %2260
  %2262 = vrot.lane.b32.xlu0 %v2034, 64
  %v2263 = vpop.permute.xlu0 %2262
  %2264 = vrot.lane.b32.xlu0 %v2039, 64
  %v2265 = vpop.permute.xlu0 %2264
  %2266 = vrot.lane.b32.xlu0 %v2044, 64
  %v2267 = vpop.permute.xlu0 %2266
  %2268 = vrot.lane.b32.xlu0 %v2049, 64
  %v2269 = vpop.permute.xlu0 %2268
  %2270 = vrot.lane.b32.xlu0 %v2054, 64
  %v2271 = vpop.permute.xlu0 %2270
  %v2278 = vsel %vm792, %v2261, 0.0
  %v2279 = vsel %vm792, %v2263, 0.0
  %v2280 = vsel %vm792, %v2265, 0.0
  %v2281 = vsel %vm792, %v2267, 0.0
  %v2282 = vsel %vm792, %v2269, 0.0
  %v2283 = vsel %vm792, %v2271, 0.0
  %2284 = vrot.lane.b32.xlu0 %v2029, 112
  %v2285 = vpop.permute.xlu0 %2284
  %2286 = vrot.lane.b32.xlu0 %v2034, 112
  %v2287 = vpop.permute.xlu0 %2286
  %2288 = vrot.lane.b32.xlu0 %v2039, 112
  %v2289 = vpop.permute.xlu0 %2288
  %2290 = vrot.lane.b32.xlu0 %v2044, 112
  %v2291 = vpop.permute.xlu0 %2290
  %2292 = vrot.lane.b32.xlu0 %v2049, 112
  %v2293 = vpop.permute.xlu0 %2292
  %2294 = vrot.lane.b32.xlu0 %v2054, 112
  %v2295 = vpop.permute.xlu0 %2294
  %2296 = vrot.lane.b32.xlu0 %v2029, 80
  %v2297 = vpop.permute.xlu0 %2296
  %2298 = vrot.lane.b32.xlu0 %v2034, 80
  %v2299 = vpop.permute.xlu0 %2298
  %2300 = vrot.lane.b32.xlu0 %v2039, 80
  %v2301 = vpop.permute.xlu0 %2300
  %2302 = vrot.lane.b32.xlu0 %v2044, 80
  %v2303 = vpop.permute.xlu0 %2302
  %2304 = vrot.lane.b32.xlu0 %v2049, 80
  %v2305 = vpop.permute.xlu0 %2304
  %2306 = vrot.lane.b32.xlu0 %v2054, 80
  %v2307 = vpop.permute.xlu0 %2306
  %v2308 = vsel %vm603, %v2285, 0
  %v2310 = vsel %vm603, %v2287, 0
  %v2312 = vsel %vm603, %v2289, 0
  %v2314 = vsel %vm603, %v2291, 0
  %v2316 = vsel %vm603, %v2293, 0
  %v2318 = vsel %vm603, %v2295, 0
  %v2320 = vsel %vm603, %v2297, 0
  %v2322 = vsel %vm603, %v2299, 0
  %v2324 = vsel %vm603, %v2301, 0
  %v2326 = vsel %vm603, %v2303, 0
  %v2328 = vsel %vm603, %v2305, 0
  %v2330 = vsel %vm603, %v2307, 0
  %2332 = vmatprep.subr.mxu0 0.0
  %2333 = vmatpush1.xpose.msra.mxu0 0.0
  %2334 = vmatprep.subr.mxu0 0.0
  %2335 = vmatpush1.xpose.msra.mxu0 0.0
  %2336 = vmatprep.subr.mxu0 0.0
  %2337 = vmatpush1.xpose.msra.mxu0 0.0
  %2338 = vmatprep.subr.mxu0 0.0
  %2339 = vmatpush1.xpose.msra.mxu0 0.0
  %2340 = vmatprep.subr.mxu0 0.0
  %2341 = vmatpush1.xpose.msra.mxu0 0.0
  %2342 = vmatprep.subr.mxu0 0.0
  %2343 = vmatpush1.xpose.msra.mxu0 0.0
  %2344 = vmatprep.subr.mxu0 0.0
  %2345 = vmatpush1.xpose.msra.mxu0 0.0
  %2346 = vmatprep.subr.mxu0 0.0
  %2347 = vmatpush1.xpose.msra.mxu0 0.0
  %2348 = vmatprep.subr.mxu0 0.0
  %2349 = vmatpush1.xpose.msra.mxu0 0.0
  %2350 = vmatprep.subr.mxu0 0.0
  %2351 = vmatpush1.xpose.msra.mxu0 0.0
  %2352 = vmatprep.subr.mxu0 0.0
  %2353 = vmatpush1.xpose.msra.mxu0 %v2330
  %2354 = vmatprep.subr.mxu0 0.0
  %2355 = vmatpush1.xpose.msra.mxu0 %v2328
  %2356 = vmatprep.subr.mxu0 0.0
  %2357 = vmatpush1.xpose.msra.mxu0 %v2326
  %2358 = vmatprep.subr.mxu0 0.0
  %2359 = vmatpush1.xpose.msra.mxu0 %v2324
  %2360 = vmatprep.subr.mxu0 0.0
  %2361 = vmatpush1.xpose.msra.mxu0 %v2322
  %2362 = vmatprep.subr.mxu0 0.0
  %2363 = vmatpush1.xpose.msra.mxu0 %v2320
  %2364 = vmatprep.subr.mxu0 0.0
  %2365 = vmatpush2.xpose.msra.mxu0 0.0
  %2366 = vmatprep.subr.mxu0 0.0
  %2367 = vmatpush2.xpose.msra.mxu0 0.0
  %2368 = vmatprep.subr.mxu0 0.0
  %2369 = vmatpush2.xpose.msra.mxu0 0.0
  %2370 = vmatprep.subr.mxu0 0.0
  %2371 = vmatpush2.xpose.msra.mxu0 0.0
  %2372 = vmatprep.subr.mxu0 0.0
  %2373 = vmatpush2.xpose.msra.mxu0 0.0
  %2374 = vmatprep.subr.mxu0 0.0
  %2375 = vmatpush2.xpose.msra.mxu0 0.0
  %2376 = vmatprep.subr.mxu0 0.0
  %2377 = vmatpush2.xpose.msra.mxu0 0.0
  %2378 = vmatprep.subr.mxu0 0.0
  %2379 = vmatpush2.xpose.msra.mxu0 0.0
  %2380 = vmatprep.subr.mxu0 0.0
  %2381 = vmatpush2.xpose.msra.mxu0 0.0
  %2382 = vmatprep.subr.mxu0 0.0
  %2383 = vmatpush2.xpose.msra.mxu0 0.0
  %2384 = vmatprep.subr.mxu0 0.0
  %2385 = vmatpush2.xpose.msra.mxu0 0.0
  %2386 = vmatprep.subr.mxu0 0.0
  %2387 = vmatpush2.xpose.msra.mxu0 0.0
  %2388 = vmatprep.subr.mxu0 0.0
  %2389 = vmatpush2.xpose.msra.mxu0 0.0
  %2390 = vmatprep.subr.mxu0 0.0
  %2391 = vmatpush2.xpose.msra.mxu0 0.0
  %2392 = vmatprep.subr.mxu0 0.0
  %2393 = vmatpush2.xpose.msra.mxu0 0.0
  %2394 = vmatprep.subr.mxu0 0.0
  %2395 = vmatpush2.xpose.msra.mxu0 0.0
  %2396 = vmatprep.mubr.f32.mxu0 0.0
  %2397 = vmatmul.mubr.f32.gmra.mxu0 %v2308
  %v2398 = vpop.f32.mrf.mxu0
  %v2399 = vadd.f32 %v450, %v2398
  %v2400 = vpop.f32.mrf.mxu0
  %2401 = vmatprep.mubr.f32.mxu0 0.0
  %2402 = vmatmul.mubr.f32.gmra.mxu0 %v2310
  %v2403 = vpop.f32.mrf.mxu0
  %v2404 = vadd.f32 %v451, %v2403
  %v2405 = vpop.f32.mrf.mxu0
  %2406 = vmatprep.mubr.f32.mxu0 0.0
  %2407 = vmatmul.mubr.f32.gmra.mxu0 %v2312
  %v2408 = vpop.f32.mrf.mxu0
  %v2409 = vadd.f32 %v452, %v2408
  %v2410 = vpop.f32.mrf.mxu0
  %2411 = vmatprep.mubr.f32.mxu0 0.0
  %2412 = vmatmul.mubr.f32.gmra.mxu0 %v2314
  %v2413 = vpop.f32.mrf.mxu0
  %v2414 = vadd.f32 %v453, %v2413
  %v2415 = vpop.f32.mrf.mxu0
  %2416 = vmatprep.mubr.f32.mxu0 0.0
  %2417 = vmatmul.mubr.f32.gmra.mxu0 %v2316
  %v2418 = vpop.f32.mrf.mxu0
  %v2419 = vadd.f32 %v454, %v2418
  %v2420 = vpop.f32.mrf.mxu0
  %2421 = vmatprep.mubr.f32.mxu0 0.0
  %2422 = vmatmul.mubr.f32.gmra.mxu0 %v2318
  %v2423 = vpop.f32.mrf.mxu0
  %v2424 = vadd.f32 %v455, %v2423
  %v2425 = vpop.f32.mrf.mxu0
  %2426 = vdwg.mxu0
  %v2427 = vsel %vm723, %v2399, -inf
  %2428 = vmax.xlane.f32.xlu0 %v2427
  %v2429 = vpop.xlane.xlu0 %2428
  %v2430 = vsel %vm723, %v2404, -inf
  %2431 = vmax.xlane.f32.xlu0 %v2430
  %v2432 = vpop.xlane.xlu0 %2431
  %v2433 = vsel %vm723, %v2409, -inf
  %2434 = vmax.xlane.f32.xlu0 %v2433
  %v2435 = vpop.xlane.xlu0 %2434
  %v2436 = vsel %vm723, %v2414, -inf
  %2437 = vmax.xlane.f32.xlu0 %v2436
  %v2438 = vpop.xlane.xlu0 %2437
  %v2439 = vsel %vm723, %v2419, -inf
  %2440 = vmax.xlane.f32.xlu0 %v2439
  %v2441 = vpop.xlane.xlu0 %2440
  %v2442 = vsel %vm723, %v2424, -inf
  %2443 = vmax.xlane.f32.xlu0 %v2442
  %v2444 = vpop.xlane.xlu0 %2443
  %v2445 = vsub.f32 %v2399, %v2429
  %v2446 = vsub.f32 %v2404, %v2432
  %v2447 = vsub.f32 %v2409, %v2435
  %v2448 = vsub.f32 %v2414, %v2438
  %v2449 = vsub.f32 %v2419, %v2441
  %v2450 = vsub.f32 %v2424, %v2444
  %v2451 = vmul.f32 %v2445, 1.442695
  %v2452 = vpow.pop %v2451
  %v2453 = vmul.f32 %v2446, 1.442695
  %v2454 = vpow.pop %v2453
  %v2455 = vmul.f32 %v2447, 1.442695
  %v2456 = vpow.pop %v2455
  %v2457 = vmul.f32 %v2448, 1.442695
  %v2458 = vpow.pop %v2457
  %v2459 = vmul.f32 %v2449, 1.442695
  %v2460 = vpow.pop %v2459
  %v2461 = vmul.f32 %v2450, 1.442695
  %v2462 = vpow.pop %v2461
  %v2463 = vsel %vm723, %v2452, 0.0
  %2464 = vadd.xlane.f32.xlu0 %v2463
  %v2465 = vpop.xlane.xlu0 %2464
  %v2466 = vsel %vm723, %v2454, 0.0
  %2467 = vadd.xlane.f32.xlu0 %v2466
  %v2468 = vpop.xlane.xlu0 %2467
  %v2469 = vsel %vm723, %v2456, 0.0
  %2470 = vadd.xlane.f32.xlu0 %v2469
  %v2471 = vpop.xlane.xlu0 %2470
  %v2472 = vsel %vm723, %v2458, 0.0
  %2473 = vadd.xlane.f32.xlu0 %v2472
  %v2474 = vpop.xlane.xlu0 %2473
  %v2475 = vsel %vm723, %v2460, 0.0
  %2476 = vadd.xlane.f32.xlu0 %v2475
  %v2477 = vpop.xlane.xlu0 %2476
  %v2478 = vsel %vm723, %v2462, 0.0
  %2479 = vadd.xlane.f32.xlu0 %v2478
  %v2480 = vpop.xlane.xlu0 %2479
  %v2481 = vrcp.pop %v2465
  %v2482 = vrcp.pop %v2468
  %v2483 = vrcp.pop %v2471
  %v2484 = vrcp.pop %v2474
  %v2485 = vrcp.pop %v2477
  %v2486 = vrcp.pop %v2480
  %v2487 = vmul.f32 %v2452, %v2481
  %v2488 = vmul.f32 %v2454, %v2482
  %v2489 = vmul.f32 %v2456, %v2483
  %v2490 = vmul.f32 %v2458, %v2484
  %v2491 = vmul.f32 %v2460, %v2485
  %v2492 = vmul.f32 %v2462, %v2486
  %v2493 = vsel %vm1028, %v2261, 0.0
  %v2494 = vsel %vm1028, %v2263, 0.0
  %v2495 = vsel %vm1028, %v2265, 0.0
  %v2496 = vsel %vm1028, %v2267, 0.0
  %v2497 = vsel %vm1028, %v2269, 0.0
  %v2498 = vsel %vm1028, %v2271, 0.0
  %v2500 = vsel %vm723, %v2487, 0
  %v2503 = vsel %vm723, %v2488, 0
  %v2506 = vsel %vm723, %v2489, 0
  %v2509 = vsel %vm723, %v2490, 0
  %v2512 = vsel %vm723, %v2491, 0
  %v2515 = vsel %vm723, %v2492, 0
  %2517 = vmatprep.subr.mxu0 0.0
  %2518 = vmatpush1.msra.mxu0 0.0
  %2519 = vmatprep.subr.mxu0 0.0
  %2520 = vmatpush1.msra.mxu0 0.0
  %2521 = vmatprep.subr.mxu0 0.0
  %2522 = vmatpush1.msra.mxu0 0.0
  %2523 = vmatprep.subr.mxu0 0.0
  %2524 = vmatpush1.msra.mxu0 0.0
  %2525 = vmatprep.subr.mxu0 0.0
  %2526 = vmatpush1.msra.mxu0 0.0
  %2527 = vmatprep.subr.mxu0 0.0
  %2528 = vmatpush1.msra.mxu0 0.0
  %2529 = vmatprep.subr.mxu0 0.0
  %2530 = vmatpush1.msra.mxu0 0.0
  %2531 = vmatprep.subr.mxu0 0.0
  %2532 = vmatpush1.msra.mxu0 0.0
  %2533 = vmatprep.subr.mxu0 0.0
  %2534 = vmatpush1.msra.mxu0 0.0
  %2535 = vmatprep.subr.mxu0 0.0
  %2536 = vmatpush1.msra.mxu0 0.0
  %2537 = vmatprep.subr.mxu0 0.0
  %2538 = vmatpush1.msra.mxu0 %v2498
  %2539 = vmatprep.subr.mxu0 0.0
  %2540 = vmatpush1.msra.mxu0 %v2497
  %2541 = vmatprep.subr.mxu0 0.0
  %2542 = vmatpush1.msra.mxu0 %v2496
  %2543 = vmatprep.subr.mxu0 0.0
  %2544 = vmatpush1.msra.mxu0 %v2495
  %2545 = vmatprep.subr.mxu0 0.0
  %2546 = vmatpush1.msra.mxu0 %v2494
  %2547 = vmatprep.subr.mxu0 0.0
  %2548 = vmatpush1.msra.mxu0 %v2493
  %2549 = vmatprep.subr.mxu0 0.0
  %2550 = vmatpush2.msra.mxu0 0.0
  %2551 = vmatprep.subr.mxu0 0.0
  %2552 = vmatpush2.msra.mxu0 0.0
  %2553 = vmatprep.subr.mxu0 0.0
  %2554 = vmatpush2.msra.mxu0 0.0
  %2555 = vmatprep.subr.mxu0 0.0
  %2556 = vmatpush2.msra.mxu0 0.0
  %2557 = vmatprep.subr.mxu0 0.0
  %2558 = vmatpush2.msra.mxu0 0.0
  %2559 = vmatprep.subr.mxu0 0.0
  %2560 = vmatpush2.msra.mxu0 0.0
  %2561 = vmatprep.subr.mxu0 0.0
  %2562 = vmatpush2.msra.mxu0 0.0
  %2563 = vmatprep.subr.mxu0 0.0
  %2564 = vmatpush2.msra.mxu0 0.0
  %2565 = vmatprep.subr.mxu0 0.0
  %2566 = vmatpush2.msra.mxu0 0.0
  %2567 = vmatprep.subr.mxu0 0.0
  %2568 = vmatpush2.msra.mxu0 0.0
  %2569 = vmatprep.subr.mxu0 0.0
  %2570 = vmatpush2.msra.mxu0 0.0
  %2571 = vmatprep.subr.mxu0 0.0
  %2572 = vmatpush2.msra.mxu0 0.0
  %2573 = vmatprep.subr.mxu0 0.0
  %2574 = vmatpush2.msra.mxu0 0.0
  %2575 = vmatprep.subr.mxu0 0.0
  %2576 = vmatpush2.msra.mxu0 0.0
  %2577 = vmatprep.subr.mxu0 0.0
  %2578 = vmatpush2.msra.mxu0 0.0
  %2579 = vmatprep.subr.mxu0 0.0
  %2580 = vmatpush2.msra.mxu0 0.0
  %2581 = vmatprep.mubr.f32.mxu0 0.0
  %2582 = vmatmul.mubr.f32.gmra.mxu0 %v2500
  %v2583 = vpop.f32.mrf.mxu0
  %v2584 = vadd.f32 0.0, %v2583
  %v2585 = vpop.f32.mrf.mxu0
  %2586 = vmatprep.mubr.f32.mxu0 0.0
  %2587 = vmatmul.mubr.f32.gmra.mxu0 %v2503
  %v2588 = vpop.f32.mrf.mxu0
  %v2589 = vadd.f32 0.0, %v2588
  %v2590 = vpop.f32.mrf.mxu0
  %2591 = vmatprep.mubr.f32.mxu0 0.0
  %2592 = vmatmul.mubr.f32.gmra.mxu0 %v2506
  %v2593 = vpop.f32.mrf.mxu0
  %v2594 = vadd.f32 0.0, %v2593
  %v2595 = vpop.f32.mrf.mxu0
  %2596 = vmatprep.mubr.f32.mxu0 0.0
  %2597 = vmatmul.mubr.f32.gmra.mxu0 %v2509
  %v2598 = vpop.f32.mrf.mxu0
  %v2599 = vadd.f32 0.0, %v2598
  %v2600 = vpop.f32.mrf.mxu0
  %2601 = vmatprep.mubr.f32.mxu0 0.0
  %2602 = vmatmul.mubr.f32.gmra.mxu0 %v2512
  %v2603 = vpop.f32.mrf.mxu0
  %v2604 = vadd.f32 0.0, %v2603
  %v2605 = vpop.f32.mrf.mxu0
  %2606 = vmatprep.mubr.f32.mxu0 0.0
  %2607 = vmatmul.mubr.f32.gmra.mxu0 %v2515
  %v2608 = vpop.f32.mrf.mxu0
  %v2609 = vadd.f32 0.0, %v2608
  %v2610 = vpop.f32.mrf.mxu0
  %2611 = vdwg.mxu0
  %v2613 = vsel %vm723, %v2254, 0
  %v2616 = vsel %vm723, %v2255, 0
  %v2619 = vsel %vm723, %v2256, 0
  %v2622 = vsel %vm723, %v2257, 0
  %v2625 = vsel %vm723, %v2258, 0
  %v2628 = vsel %vm723, %v2259, 0
  %2630 = vmatprep.subr.mxu0 0.0
  %2631 = vmatpush1.msra.mxu0 0.0
  %2632 = vmatprep.subr.mxu0 0.0
  %2633 = vmatpush1.msra.mxu0 0.0
  %2634 = vmatprep.subr.mxu0 0.0
  %2635 = vmatpush1.msra.mxu0 0.0
  %2636 = vmatprep.subr.mxu0 0.0
  %2637 = vmatpush1.msra.mxu0 0.0
  %2638 = vmatprep.subr.mxu0 0.0
  %2639 = vmatpush1.msra.mxu0 0.0
  %2640 = vmatprep.subr.mxu0 0.0
  %2641 = vmatpush1.msra.mxu0 0.0
  %2642 = vmatprep.subr.mxu0 0.0
  %2643 = vmatpush1.msra.mxu0 0.0
  %2644 = vmatprep.subr.mxu0 0.0
  %2645 = vmatpush1.msra.mxu0 0.0
  %2646 = vmatprep.subr.mxu0 0.0
  %2647 = vmatpush1.msra.mxu0 0.0
  %2648 = vmatprep.subr.mxu0 0.0
  %2649 = vmatpush1.msra.mxu0 0.0
  %2650 = vmatprep.subr.mxu0 0.0
  %2651 = vmatpush1.msra.mxu0 %v2283
  %2652 = vmatprep.subr.mxu0 0.0
  %2653 = vmatpush1.msra.mxu0 %v2282
  %2654 = vmatprep.subr.mxu0 0.0
  %2655 = vmatpush1.msra.mxu0 %v2281
  %2656 = vmatprep.subr.mxu0 0.0
  %2657 = vmatpush1.msra.mxu0 %v2280
  %2658 = vmatprep.subr.mxu0 0.0
  %2659 = vmatpush1.msra.mxu0 %v2279
  %2660 = vmatprep.subr.mxu0 0.0
  %2661 = vmatpush1.msra.mxu0 %v2278
  %2662 = vmatprep.subr.mxu0 0.0
  %2663 = vmatpush2.msra.mxu0 0.0
  %2664 = vmatprep.subr.mxu0 0.0
  %2665 = vmatpush2.msra.mxu0 0.0
  %2666 = vmatprep.subr.mxu0 0.0
  %2667 = vmatpush2.msra.mxu0 0.0
  %2668 = vmatprep.subr.mxu0 0.0
  %2669 = vmatpush2.msra.mxu0 0.0
  %2670 = vmatprep.subr.mxu0 0.0
  %2671 = vmatpush2.msra.mxu0 0.0
  %2672 = vmatprep.subr.mxu0 0.0
  %2673 = vmatpush2.msra.mxu0 0.0
  %2674 = vmatprep.subr.mxu0 0.0
  %2675 = vmatpush2.msra.mxu0 0.0
  %2676 = vmatprep.subr.mxu0 0.0
  %2677 = vmatpush2.msra.mxu0 0.0
  %2678 = vmatprep.subr.mxu0 0.0
  %2679 = vmatpush2.msra.mxu0 0.0
  %2680 = vmatprep.subr.mxu0 0.0
  %2681 = vmatpush2.msra.mxu0 0.0
  %2682 = vmatprep.subr.mxu0 0.0
  %2683 = vmatpush2.msra.mxu0 0.0
  %2684 = vmatprep.subr.mxu0 0.0
  %2685 = vmatpush2.msra.mxu0 0.0
  %2686 = vmatprep.subr.mxu0 0.0
  %2687 = vmatpush2.msra.mxu0 0.0
  %2688 = vmatprep.subr.mxu0 0.0
  %2689 = vmatpush2.msra.mxu0 0.0
  %2690 = vmatprep.subr.mxu0 0.0
  %2691 = vmatpush2.msra.mxu0 0.0
  %2692 = vmatprep.subr.mxu0 0.0
  %2693 = vmatpush2.msra.mxu0 0.0
  %2694 = vmatprep.mubr.f32.mxu0 0.0
  %2695 = vmatmul.mubr.f32.gmra.mxu0 %v2613
  %v2696 = vpop.f32.mrf.mxu0
  %v2697 = vadd.f32 %v2584, %v2696
  %v2698 = vpop.f32.mrf.mxu0
  %2699 = vmatprep.mubr.f32.mxu0 0.0
  %2700 = vmatmul.mubr.f32.gmra.mxu0 %v2616
  %v2701 = vpop.f32.mrf.mxu0
  %v2702 = vadd.f32 %v2589, %v2701
  %v2703 = vpop.f32.mrf.mxu0
  %2704 = vmatprep.mubr.f32.mxu0 0.0
  %2705 = vmatmul.mubr.f32.gmra.mxu0 %v2619
  %v2706 = vpop.f32.mrf.mxu0
  %v2707 = vadd.f32 %v2594, %v2706
  %v2708 = vpop.f32.mrf.mxu0
  %2709 = vmatprep.mubr.f32.mxu0 0.0
  %2710 = vmatmul.mubr.f32.gmra.mxu0 %v2622
  %v2711 = vpop.f32.mrf.mxu0
  %v2712 = vadd.f32 %v2599, %v2711
  %v2713 = vpop.f32.mrf.mxu0
  %2714 = vmatprep.mubr.f32.mxu0 0.0
  %2715 = vmatmul.mubr.f32.gmra.mxu0 %v2625
  %v2716 = vpop.f32.mrf.mxu0
  %v2717 = vadd.f32 %v2604, %v2716
  %v2718 = vpop.f32.mrf.mxu0
  %2719 = vmatprep.mubr.f32.mxu0 0.0
  %2720 = vmatmul.mubr.f32.gmra.mxu0 %v2628
  %v2721 = vpop.f32.mrf.mxu0
  %v2722 = vadd.f32 %v2609, %v2721
  %v2723 = vpop.f32.mrf.mxu0
  %2724 = vdwg.mxu0
  %s2725 = scalar_lea.vmem %s4, 12
  %v2726 = vld [vmem:[%s2725] sm:$0x1]
  %v2728 = vlaneseq
  %v2729 = vshrl.u32 %v2728, 7
  %v2730 = vsub.s32 0, %v2729
  %v2731 = vrot.slane %v2726, %v2730
  %2737 = vrot.lane.b32.xlu0 %v1928, 32
  %v2738 = vpop.permute.xlu0 %2737
  %2739 = vrot.lane.b32.xlu0 %v1930, 32
  %v2740 = vpop.permute.xlu0 %2739
  %2741 = vrot.lane.b32.xlu0 %v1932, 32
  %v2742 = vpop.permute.xlu0 %2741
  %2743 = vrot.lane.b32.xlu0 %v1934, 32
  %v2744 = vpop.permute.xlu0 %2743
  %v2750 = vsel %vm266, %v2697, 0
  %v2753 = vsel %vm266, %v2702, 0
  %v2756 = vsel %vm266, %v2707, 0
  %v2759 = vsel %vm266, %v2712, 0
  %v2762 = vsel %vm266, %v2717, 0
  %v2765 = vsel %vm266, %v2722, 0
  %2767 = vmatprep.subr.mxu0 0.0
  %2768 = vmatpush1.msra.mxu0 0.0
  %2769 = vmatprep.subr.mxu0 0.0
  %2770 = vmatpush1.msra.mxu0 0.0
  %2771 = vmatprep.subr.mxu0 0.0
  %2772 = vmatpush1.msra.mxu0 0.0
  %2773 = vmatprep.subr.mxu0 0.0
  %2774 = vmatpush1.msra.mxu0 0.0
  %2775 = vmatprep.subr.mxu0 0.0
  %2776 = vmatpush1.msra.mxu0 0.0
  %2777 = vmatprep.subr.mxu0 0.0
  %2778 = vmatpush1.msra.mxu0 0.0
  %2779 = vmatprep.subr.mxu0 0.0
  %2780 = vmatpush1.msra.mxu0 0.0
  %2781 = vmatprep.subr.mxu0 0.0
  %2782 = vmatpush1.msra.mxu0 0.0
  %2783 = vmatprep.subr.mxu0 0.0
  %2784 = vmatpush1.msra.mxu0 0.0
  %2785 = vmatprep.subr.mxu0 0.0
  %2786 = vmatpush1.msra.mxu0 0.0
  %2787 = vmatprep.subr.mxu0 0.0
  %2788 = vmatpush1.msra.mxu0 0.0
  %2789 = vmatprep.subr.mxu0 0.0
  %2790 = vmatpush1.msra.mxu0 0.0
  %2791 = vmatprep.subr.mxu0 0.0
  %2792 = vmatpush1.msra.mxu0 %v2744
  %2793 = vmatprep.subr.mxu0 0.0
  %2794 = vmatpush1.msra.mxu0 %v2742
  %2795 = vmatprep.subr.mxu0 0.0
  %2796 = vmatpush1.msra.mxu0 %v2740
  %2797 = vmatprep.subr.mxu0 0.0
  %2798 = vmatpush1.msra.mxu0 %v2738
  %2799 = vmatprep.subr.mxu0 0.0
  %2800 = vmatpush2.msra.mxu0 0.0
  %2801 = vmatprep.subr.mxu0 0.0
  %2802 = vmatpush2.msra.mxu0 0.0
  %2803 = vmatprep.subr.mxu0 0.0
  %2804 = vmatpush2.msra.mxu0 0.0
  %2805 = vmatprep.subr.mxu0 0.0
  %2806 = vmatpush2.msra.mxu0 0.0
  %2807 = vmatprep.subr.mxu0 0.0
  %2808 = vmatpush2.msra.mxu0 0.0
  %2809 = vmatprep.subr.mxu0 0.0
  %2810 = vmatpush2.msra.mxu0 0.0
  %2811 = vmatprep.subr.mxu0 0.0
  %2812 = vmatpush2.msra.mxu0 0.0
  %2813 = vmatprep.subr.mxu0 0.0
  %2814 = vmatpush2.msra.mxu0 0.0
  %2815 = vmatprep.subr.mxu0 0.0
  %2816 = vmatpush2.msra.mxu0 0.0
  %2817 = vmatprep.subr.mxu0 0.0
  %2818 = vmatpush2.msra.mxu0 0.0
  %2819 = vmatprep.subr.mxu0 0.0
  %2820 = vmatpush2.msra.mxu0 0.0
  %2821 = vmatprep.subr.mxu0 0.0
  %2822 = vmatpush2.msra.mxu0 0.0
  %2823 = vmatprep.subr.mxu0 0.0
  %2824 = vmatpush2.msra.mxu0 0.0
  %2825 = vmatprep.subr.mxu0 0.0
  %2826 = vmatpush2.msra.mxu0 0.0
  %2827 = vmatprep.subr.mxu0 0.0
  %2828 = vmatpush2.msra.mxu0 0.0
  %2829 = vmatprep.subr.mxu0 0.0
  %2830 = vmatpush2.msra.mxu0 0.0
  %2831 = vmatprep.mubr.f32.mxu0 0.0
  %2832 = vmatmul.mubr.f32.gmra.mxu0 %v2750
  %v2833 = vpop.f32.mrf.mxu0
  %v2834 = vadd.f32 %v2731, %v2833
  %v2835 = vpop.f32.mrf.mxu0
  %2836 = vmatprep.mubr.f32.mxu0 0.0
  %2837 = vmatmul.mubr.f32.gmra.mxu0 %v2753
  %v2838 = vpop.f32.mrf.mxu0
  %v2839 = vadd.f32 %v2731, %v2838
  %v2840 = vpop.f32.mrf.mxu0
  %2841 = vmatprep.mubr.f32.mxu0 0.0
  %2842 = vmatmul.mubr.f32.gmra.mxu0 %v2756
  %v2843 = vpop.f32.mrf.mxu0
  %v2844 = vadd.f32 %v2731, %v2843
  %v2845 = vpop.f32.mrf.mxu0
  %2846 = vmatprep.mubr.f32.mxu0 0.0
  %2847 = vmatmul.mubr.f32.gmra.mxu0 %v2759
  %v2848 = vpop.f32.mrf.mxu0
  %v2849 = vadd.f32 %v2731, %v2848
  %v2850 = vpop.f32.mrf.mxu0
  %2851 = vmatprep.mubr.f32.mxu0 0.0
  %2852 = vmatmul.mubr.f32.gmra.mxu0 %v2762
  %v2853 = vpop.f32.mrf.mxu0
  %v2854 = vadd.f32 %v2731, %v2853
  %v2855 = vpop.f32.mrf.mxu0
  %2856 = vmatprep.mubr.f32.mxu0 0.0
  %2857 = vmatmul.mubr.f32.gmra.mxu0 %v2765
  %v2858 = vpop.f32.mrf.mxu0
  %v2859 = vadd.f32 %v2731, %v2858
  %v2860 = vpop.f32.mrf.mxu0
  %2861 = vdwg.mxu0
  %v2862 = vadd.f32 %v1921, %v2834
  %v2863 = vadd.f32 %v1922, %v2839
  %v2864 = vadd.f32 %v1923, %v2844
  %v2865 = vadd.f32 %v1924, %v2849
  %v2866 = vadd.f32 %v1925, %v2854
  %v2867 = vadd.f32 %v1926, %v2859
  %s2868 = scalar_lea.vmem %s4, 13
  %v2869 = vld [vmem:[%s2868] sm:$0x1]
  %s2870 = scalar_lea.vmem %s4, 14
  %v2871 = vld [vmem:[%s2870] sm:$0x1]
  %v2872 = vsel %vm266, %v2862, 0.0
  %2873 = vadd.xlane.f32.xlu0 %v2872
  %v2874 = vpop.xlane.xlu0 %2873
  %v2875 = vsel %vm266, %v2863, 0.0
  %2876 = vadd.xlane.f32.xlu0 %v2875
  %v2877 = vpop.xlane.xlu0 %2876
  %v2878 = vsel %vm266, %v2864, 0.0
  %2879 = vadd.xlane.f32.xlu0 %v2878
  %v2880 = vpop.xlane.xlu0 %2879
  %v2881 = vsel %vm266, %v2865, 0.0
  %2882 = vadd.xlane.f32.xlu0 %v2881
  %v2883 = vpop.xlane.xlu0 %2882
  %v2884 = vsel %vm266, %v2866, 0.0
  %2885 = vadd.xlane.f32.xlu0 %v2884
  %v2886 = vpop.xlane.xlu0 %2885
  %v2887 = vsel %vm266, %v2867, 0.0
  %2888 = vadd.xlane.f32.xlu0 %v2887
  %v2889 = vpop.xlane.xlu0 %2888
  %v2890 = vmul.f32 %v2874, %v285
  %v2891 = vmul.f32 %v2877, %v285
  %v2892 = vmul.f32 %v2880, %v285
  %v2893 = vmul.f32 %v2883, %v285
  %v2894 = vmul.f32 %v2886, %v285
  %v2895 = vmul.f32 %v2889, %v285
  %v2896 = vsub.f32 %v2862, %v2890
  %v2897 = vsub.f32 %v2863, %v2891
  %v2898 = vsub.f32 %v2864, %v2892
  %v2899 = vsub.f32 %v2865, %v2893
  %v2900 = vsub.f32 %v2866, %v2894
  %v2901 = vsub.f32 %v2867, %v2895
  %v2902 = vmul.f32 %v2896, %v2896
  %v2903 = vmul.f32 %v2897, %v2897
  %v2904 = vmul.f32 %v2898, %v2898
  %v2905 = vmul.f32 %v2899, %v2899
  %v2906 = vmul.f32 %v2900, %v2900
  %v2907 = vmul.f32 %v2901, %v2901
  %v2908 = vsel %vm266, %v2902, 0.0
  %2909 = vadd.xlane.f32.xlu0 %v2908
  %v2910 = vpop.xlane.xlu0 %2909
  %v2911 = vsel %vm266, %v2903, 0.0
  %2912 = vadd.xlane.f32.xlu0 %v2911
  %v2913 = vpop.xlane.xlu0 %2912
  %v2914 = vsel %vm266, %v2904, 0.0
  %2915 = vadd.xlane.f32.xlu0 %v2914
  %v2916 = vpop.xlane.xlu0 %2915
  %v2917 = vsel %vm266, %v2905, 0.0
  %2918 = vadd.xlane.f32.xlu0 %v2917
  %v2919 = vpop.xlane.xlu0 %2918
  %v2920 = vsel %vm266, %v2906, 0.0
  %2921 = vadd.xlane.f32.xlu0 %v2920
  %v2922 = vpop.xlane.xlu0 %2921
  %v2923 = vsel %vm266, %v2907, 0.0
  %2924 = vadd.xlane.f32.xlu0 %v2923
  %v2925 = vpop.xlane.xlu0 %2924
  %v2926 = vmul.f32 %v2910, %v285
  %v2927 = vmul.f32 %v2913, %v285
  %v2928 = vmul.f32 %v2916, %v285
  %v2929 = vmul.f32 %v2919, %v285
  %v2930 = vmul.f32 %v2922, %v285
  %v2931 = vmul.f32 %v2925, %v285
  %v2932 = vadd.f32 %v2926, 1e-12
  %v2933 = vadd.f32 %v2927, 1e-12
  %v2934 = vadd.f32 %v2928, 1e-12
  %v2935 = vadd.f32 %v2929, 1e-12
  %v2936 = vadd.f32 %v2930, 1e-12
  %v2937 = vadd.f32 %v2931, 1e-12
  %v2938 = vrsqrt.pop %v2932
  %v2939 = vrsqrt.pop %v2933
  %v2940 = vrsqrt.pop %v2934
  %v2941 = vrsqrt.pop %v2935
  %v2942 = vrsqrt.pop %v2936
  %v2943 = vrsqrt.pop %v2937
  %v2944 = vmul.f32 %v2896, %v2938
  %v2945 = vmul.f32 %v2897, %v2939
  %v2946 = vmul.f32 %v2898, %v2940
  %v2947 = vmul.f32 %v2899, %v2941
  %v2948 = vmul.f32 %v2900, %v2942
  %v2949 = vmul.f32 %v2901, %v2943
  %v2951 = vlaneseq
  %v2952 = vshrl.u32 %v2951, 7
  %v2953 = vsub.s32 0, %v2952
  %v2954 = vrot.slane %v2869, %v2953
  %v2956 = vmul.f32 %v2944, %v2954
  %v2957 = vmul.f32 %v2945, %v2954
  %v2958 = vmul.f32 %v2946, %v2954
  %v2959 = vmul.f32 %v2947, %v2954
  %v2960 = vmul.f32 %v2948, %v2954
  %v2961 = vmul.f32 %v2949, %v2954
  %v2963 = vlaneseq
  %v2964 = vshrl.u32 %v2963, 7
  %v2965 = vsub.s32 0, %v2964
  %v2966 = vrot.slane %v2871, %v2965
  %v2968 = vadd.f32 %v2956, %v2966
  %v2969 = vadd.f32 %v2957, %v2966
  %v2970 = vadd.f32 %v2958, %v2966
  %v2971 = vadd.f32 %v2959, %v2966
  %v2972 = vadd.f32 %v2960, %v2966
  %v2973 = vadd.f32 %v2961, %v2966
  %s2974 = scalar_lea.vmem %s4, 15
  %v2975 = vld [vmem:[%s2974] sm:$0x1]
  %v2977 = vlaneseq
  %v2978 = vshrl.u32 %v2977, 7
  %v2979 = vsub.s32 0, %v2978
  %v2980 = vrot.slane %v2975, %v2979
  %v2983 = vsel %vm266, %v2968, 0
  %v2986 = vsel %vm266, %v2969, 0
  %v2989 = vsel %vm266, %v2970, 0
  %v2992 = vsel %vm266, %v2971, 0
  %v2995 = vsel %vm266, %v2972, 0
  %v2998 = vsel %vm266, %v2973, 0
  %3000 = vmatprep.subr.mxu0 0.0
  %3001 = vmatpush1.msra.mxu0 0.0
  %3002 = vmatprep.subr.mxu0 0.0
  %3003 = vmatpush1.msra.mxu0 0.0
  %3004 = vmatprep.subr.mxu0 0.0
  %3005 = vmatpush1.msra.mxu0 0.0
  %3006 = vmatprep.subr.mxu0 0.0
  %3007 = vmatpush1.msra.mxu0 0.0
  %3008 = vmatprep.subr.mxu0 0.0
  %3009 = vmatpush1.msra.mxu0 0.0
  %3010 = vmatprep.subr.mxu0 0.0
  %3011 = vmatpush1.msra.mxu0 0.0
  %3012 = vmatprep.subr.mxu0 0.0
  %3013 = vmatpush1.msra.mxu0 0.0
  %3014 = vmatprep.subr.mxu0 0.0
  %3015 = vmatpush1.msra.mxu0 0.0
  %3016 = vmatprep.subr.mxu0 0.0
  %3017 = vmatpush1.msra.mxu0 0.0
  %3018 = vmatprep.subr.mxu0 0.0
  %3019 = vmatpush1.msra.mxu0 0.0
  %3020 = vmatprep.subr.mxu0 0.0
  %3021 = vmatpush1.msra.mxu0 0.0
  %3022 = vmatprep.subr.mxu0 0.0
  %3023 = vmatpush1.msra.mxu0 0.0
  %3024 = vmatprep.subr.mxu0 0.0
  %3025 = vmatpush1.msra.mxu0 %v1935
  %3026 = vmatprep.subr.mxu0 0.0
  %3027 = vmatpush1.msra.mxu0 %v1933
  %3028 = vmatprep.subr.mxu0 0.0
  %3029 = vmatpush1.msra.mxu0 %v1931
  %3030 = vmatprep.subr.mxu0 0.0
  %3031 = vmatpush1.msra.mxu0 %v1929
  %3032 = vmatprep.subr.mxu0 0.0
  %3033 = vmatpush2.msra.mxu0 0.0
  %3034 = vmatprep.subr.mxu0 0.0
  %3035 = vmatpush2.msra.mxu0 0.0
  %3036 = vmatprep.subr.mxu0 0.0
  %3037 = vmatpush2.msra.mxu0 0.0
  %3038 = vmatprep.subr.mxu0 0.0
  %3039 = vmatpush2.msra.mxu0 0.0
  %3040 = vmatprep.subr.mxu0 0.0
  %3041 = vmatpush2.msra.mxu0 0.0
  %3042 = vmatprep.subr.mxu0 0.0
  %3043 = vmatpush2.msra.mxu0 0.0
  %3044 = vmatprep.subr.mxu0 0.0
  %3045 = vmatpush2.msra.mxu0 0.0
  %3046 = vmatprep.subr.mxu0 0.0
  %3047 = vmatpush2.msra.mxu0 0.0
  %3048 = vmatprep.subr.mxu0 0.0
  %3049 = vmatpush2.msra.mxu0 0.0
  %3050 = vmatprep.subr.mxu0 0.0
  %3051 = vmatpush2.msra.mxu0 0.0
  %3052 = vmatprep.subr.mxu0 0.0
  %3053 = vmatpush2.msra.mxu0 0.0
  %3054 = vmatprep.subr.mxu0 0.0
  %3055 = vmatpush2.msra.mxu0 0.0
  %3056 = vmatprep.subr.mxu0 0.0
  %3057 = vmatpush2.msra.mxu0 0.0
  %3058 = vmatprep.subr.mxu0 0.0
  %3059 = vmatpush2.msra.mxu0 0.0
  %3060 = vmatprep.subr.mxu0 0.0
  %3061 = vmatpush2.msra.mxu0 0.0
  %3062 = vmatprep.subr.mxu0 0.0
  %3063 = vmatpush2.msra.mxu0 0.0
  %3064 = vmatprep.mubr.f32.mxu0 0.0
  %3065 = vmatmul.mubr.f32.gmra.mxu0 %v2983
  %v3066 = vpop.f32.mrf.mxu0
  %v3067 = vadd.f32 %v2980, %v3066
  %v3068 = vpop.f32.mrf.mxu0
  %3069 = vmatprep.mubr.f32.mxu0 0.0
  %3070 = vmatmul.mubr.f32.gmra.mxu0 %v2986
  %v3071 = vpop.f32.mrf.mxu0
  %v3072 = vadd.f32 %v2980, %v3071
  %v3073 = vpop.f32.mrf.mxu0
  %3074 = vmatprep.mubr.f32.mxu0 0.0
  %3075 = vmatmul.mubr.f32.gmra.mxu0 %v2989
  %v3076 = vpop.f32.mrf.mxu0
  %v3077 = vadd.f32 %v2980, %v3076
  %v3078 = vpop.f32.mrf.mxu0
  %3079 = vmatprep.mubr.f32.mxu0 0.0
  %3080 = vmatmul.mubr.f32.gmra.mxu0 %v2992
  %v3081 = vpop.f32.mrf.mxu0
  %v3082 = vadd.f32 %v2980, %v3081
  %v3083 = vpop.f32.mrf.mxu0
  %3084 = vmatprep.mubr.f32.mxu0 0.0
  %3085 = vmatmul.mubr.f32.gmra.mxu0 %v2995
  %v3086 = vpop.f32.mrf.mxu0
  %v3087 = vadd.f32 %v2980, %v3086
  %v3088 = vpop.f32.mrf.mxu0
  %3089 = vmatprep.mubr.f32.mxu0 0.0
  %3090 = vmatmul.mubr.f32.gmra.mxu0 %v2998
  %v3091 = vpop.f32.mrf.mxu0
  %v3092 = vadd.f32 %v2980, %v3091
  %v3093 = vpop.f32.mrf.mxu0
  %3094 = vdwg.mxu0
  %v3095 = vmul.f32 %v3067, 0.5
  %v3096 = vmul.f32 %v3072, 0.5
  %v3097 = vmul.f32 %v3077, 0.5
  %v3098 = vmul.f32 %v3082, 0.5
  %v3099 = vmul.f32 %v3087, 0.5
  %v3100 = vmul.f32 %v3092, 0.5
  %v3101 = vmul.f32 %v3067, 0.044715
  %v3102 = vmul.f32 %v3072, 0.044715
  %v3103 = vmul.f32 %v3077, 0.044715
  %v3104 = vmul.f32 %v3082, 0.044715
  %v3105 = vmul.f32 %v3087, 0.044715
  %v3106 = vmul.f32 %v3092, 0.044715
  %v3107 = vmul.f32 %v3101, %v3067
  %v3108 = vmul.f32 %v3102, %v3072
  %v3109 = vmul.f32 %v3103, %v3077
  %v3110 = vmul.f32 %v3104, %v3082
  %v3111 = vmul.f32 %v3105, %v3087
  %v3112 = vmul.f32 %v3106, %v3092
  %v3113 = vmul.f32 %v3107, %v3067
  %v3114 = vmul.f32 %v3108, %v3072
  %v3115 = vmul.f32 %v3109, %v3077
  %v3116 = vmul.f32 %v3110, %v3082
  %v3117 = vmul.f32 %v3111, %v3087
  %v3118 = vmul.f32 %v3112, %v3092
  %v3119 = vadd.f32 %v3067, %v3113
  %v3120 = vadd.f32 %v3072, %v3114
  %v3121 = vadd.f32 %v3077, %v3115
  %v3122 = vadd.f32 %v3082, %v3116
  %v3123 = vadd.f32 %v3087, %v3117
  %v3124 = vadd.f32 %v3092, %v3118
  %v3125 = vmul.f32 %v3119, 0.7978846
  %v3126 = vmul.f32 %v3120, 0.7978846
  %v3127 = vmul.f32 %v3121, 0.7978846
  %v3128 = vmul.f32 %v3122, 0.7978846
  %v3129 = vmul.f32 %v3123, 0.7978846
  %v3130 = vmul.f32 %v3124, 0.7978846
  %v3131 = vtanh.pop %v3125
  %v3132 = vtanh.pop %v3126
  %v3133 = vtanh.pop %v3127
  %v3134 = vtanh.pop %v3128
  %v3135 = vtanh.pop %v3129
  %v3136 = vtanh.pop %v3130
  %v3137 = vadd.f32 %v3131, 1.0
  %v3138 = vadd.f32 %v3132, 1.0
  %v3139 = vadd.f32 %v3133, 1.0
  %v3140 = vadd.f32 %v3134, 1.0
  %v3141 = vadd.f32 %v3135, 1.0
  %v3142 = vadd.f32 %v3136, 1.0
  %v3143 = vmul.f32 %v3095, %v3137
  %v3144 = vmul.f32 %v3096, %v3138
  %v3145 = vmul.f32 %v3097, %v3139
  %v3146 = vmul.f32 %v3098, %v3140
  %v3147 = vmul.f32 %v3099, %v3141
  %v3148 = vmul.f32 %v3100, %v3142
  %v3149 = vld [vmem:[%s3 + $0x40] sm:$0xff]
  %v3150 = vld [vmem:[%s3 + $0x48] sm:$0xff]
  %v3151 = vld [vmem:[%s3 + $0x50] sm:$0xff]
  %v3152 = vld [vmem:[%s3 + $0x58] sm:$0xff]
  %v3153 = vld [vmem:[%s3 + $0x60] sm:$0xff]
  %v3154 = vld [vmem:[%s3 + $0x68] sm:$0xff]
  %v3155 = vld [vmem:[%s3 + $0x70] sm:$0xff]
  %v3156 = vld [vmem:[%s3 + $0x78] sm:$0xff]
  %s3157 = scalar_lea.vmem %s4, 16
  %v3158 = vld [vmem:[%s3157] sm:$0x1]
  %v3160 = vlaneseq
  %v3161 = vshrl.u32 %v3160, 7
  %v3162 = vsub.s32 0, %v3161
  %v3163 = vrot.slane %v3158, %v3162
  %v3166 = vsel %vm1701, %v3143, 0
  %v3169 = vsel %vm1701, %v3144, 0
  %v3172 = vsel %vm1701, %v3145, 0
  %v3175 = vsel %vm1701, %v3146, 0
  %v3178 = vsel %vm1701, %v3147, 0
  %v3181 = vsel %vm1701, %v3148, 0
  %3183 = vmatprep.subr.mxu0 0.0
  %3184 = vmatpush1.msra.mxu0 0.0
  %3185 = vmatprep.subr.mxu0 0.0
  %3186 = vmatpush1.msra.mxu0 0.0
  %3187 = vmatprep.subr.mxu0 0.0
  %3188 = vmatpush1.msra.mxu0 0.0
  %3189 = vmatprep.subr.mxu0 0.0
  %3190 = vmatpush1.msra.mxu0 0.0
  %3191 = vmatprep.subr.mxu0 0.0
  %3192 = vmatpush1.msra.mxu0 0.0
  %3193 = vmatprep.subr.mxu0 0.0
  %3194 = vmatpush1.msra.mxu0 0.0
  %3195 = vmatprep.subr.mxu0 0.0
  %3196 = vmatpush1.msra.mxu0 0.0
  %3197 = vmatprep.subr.mxu0 0.0
  %3198 = vmatpush1.msra.mxu0 0.0
  %3199 = vmatprep.subr.mxu0 0.0
  %3200 = vmatpush1.msra.mxu0 %v3156
  %3201 = vmatprep.subr.mxu0 0.0
  %3202 = vmatpush1.msra.mxu0 %v3155
  %3203 = vmatprep.subr.mxu0 0.0
  %3204 = vmatpush1.msra.mxu0 %v3154
  %3205 = vmatprep.subr.mxu0 0.0
  %3206 = vmatpush1.msra.mxu0 %v3153
  %3207 = vmatprep.subr.mxu0 0.0
  %3208 = vmatpush1.msra.mxu0 %v3152
  %3209 = vmatprep.subr.mxu0 0.0
  %3210 = vmatpush1.msra.mxu0 %v3151
  %3211 = vmatprep.subr.mxu0 0.0
  %3212 = vmatpush1.msra.mxu0 %v3150
  %3213 = vmatprep.subr.mxu0 0.0
  %3214 = vmatpush1.msra.mxu0 %v3149
  %3215 = vmatprep.subr.mxu0 0.0
  %3216 = vmatpush2.msra.mxu0 0.0
  %3217 = vmatprep.subr.mxu0 0.0
  %3218 = vmatpush2.msra.mxu0 0.0
  %3219 = vmatprep.subr.mxu0 0.0
  %3220 = vmatpush2.msra.mxu0 0.0
  %3221 = vmatprep.subr.mxu0 0.0
  %3222 = vmatpush2.msra.mxu0 0.0
  %3223 = vmatprep.subr.mxu0 0.0
  %3224 = vmatpush2.msra.mxu0 0.0
  %3225 = vmatprep.subr.mxu0 0.0
  %3226 = vmatpush2.msra.mxu0 0.0
  %3227 = vmatprep.subr.mxu0 0.0
  %3228 = vmatpush2.msra.mxu0 0.0
  %3229 = vmatprep.subr.mxu0 0.0
  %3230 = vmatpush2.msra.mxu0 0.0
  %3231 = vmatprep.subr.mxu0 0.0
  %3232 = vmatpush2.msra.mxu0 0.0
  %3233 = vmatprep.subr.mxu0 0.0
  %3234 = vmatpush2.msra.mxu0 0.0
  %3235 = vmatprep.subr.mxu0 0.0
  %3236 = vmatpush2.msra.mxu0 0.0
  %3237 = vmatprep.subr.mxu0 0.0
  %3238 = vmatpush2.msra.mxu0 0.0
  %3239 = vmatprep.subr.mxu0 0.0
  %3240 = vmatpush2.msra.mxu0 0.0
  %3241 = vmatprep.subr.mxu0 0.0
  %3242 = vmatpush2.msra.mxu0 0.0
  %3243 = vmatprep.subr.mxu0 0.0
  %3244 = vmatpush2.msra.mxu0 0.0
  %3245 = vmatprep.subr.mxu0 0.0
  %3246 = vmatpush2.msra.mxu0 0.0
  %3247 = vmatprep.mubr.f32.mxu0 0.0
  %3248 = vmatmul.mubr.f32.gmra.mxu0 %v3166
  %v3249 = vpop.f32.mrf.mxu0
  %v3250 = vadd.f32 %v3163, %v3249
  %v3251 = vpop.f32.mrf.mxu0
  %3252 = vmatprep.mubr.f32.mxu0 0.0
  %3253 = vmatmul.mubr.f32.gmra.mxu0 %v3169
  %v3254 = vpop.f32.mrf.mxu0
  %v3255 = vadd.f32 %v3163, %v3254
  %v3256 = vpop.f32.mrf.mxu0
  %3257 = vmatprep.mubr.f32.mxu0 0.0
  %3258 = vmatmul.mubr.f32.gmra.mxu0 %v3172
  %v3259 = vpop.f32.mrf.mxu0
  %v3260 = vadd.f32 %v3163, %v3259
  %v3261 = vpop.f32.mrf.mxu0
  %3262 = vmatprep.mubr.f32.mxu0 0.0
  %3263 = vmatmul.mubr.f32.gmra.mxu0 %v3175
  %v3264 = vpop.f32.mrf.mxu0
  %v3265 = vadd.f32 %v3163, %v3264
  %v3266 = vpop.f32.mrf.mxu0
  %3267 = vmatprep.mubr.f32.mxu0 0.0
  %3268 = vmatmul.mubr.f32.gmra.mxu0 %v3178
  %v3269 = vpop.f32.mrf.mxu0
  %v3270 = vadd.f32 %v3163, %v3269
  %v3271 = vpop.f32.mrf.mxu0
  %3272 = vmatprep.mubr.f32.mxu0 0.0
  %3273 = vmatmul.mubr.f32.gmra.mxu0 %v3181
  %v3274 = vpop.f32.mrf.mxu0
  %v3275 = vadd.f32 %v3163, %v3274
  %v3276 = vpop.f32.mrf.mxu0
  %3277 = vdwg.mxu0
  %v3278 = vadd.f32 %v2968, %v3250
  %v3279 = vadd.f32 %v2969, %v3255
  %v3280 = vadd.f32 %v2970, %v3260
  %v3281 = vadd.f32 %v2971, %v3265
  %v3282 = vadd.f32 %v2972, %v3270
  %v3283 = vadd.f32 %v2973, %v3275
  %s3284 = scalar_lea.vmem %s4, 17
  %v3285 = vld [vmem:[%s3284] sm:$0x1]
  %s3286 = scalar_lea.vmem %s4, 18
  %v3287 = vld [vmem:[%s3286] sm:$0x1]
  %v3288 = vsel %vm266, %v3278, 0.0
  %3289 = vadd.xlane.f32.xlu0 %v3288
  %v3290 = vpop.xlane.xlu0 %3289
  %v3291 = vsel %vm266, %v3279, 0.0
  %3292 = vadd.xlane.f32.xlu0 %v3291
  %v3293 = vpop.xlane.xlu0 %3292
  %v3294 = vsel %vm266, %v3280, 0.0
  %3295 = vadd.xlane.f32.xlu0 %v3294
  %v3296 = vpop.xlane.xlu0 %3295
  %v3297 = vsel %vm266, %v3281, 0.0
  %3298 = vadd.xlane.f32.xlu0 %v3297
  %v3299 = vpop.xlane.xlu0 %3298
  %v3300 = vsel %vm266, %v3282, 0.0
  %3301 = vadd.xlane.f32.xlu0 %v3300
  %v3302 = vpop.xlane.xlu0 %3301
  %v3303 = vsel %vm266, %v3283, 0.0
  %3304 = vadd.xlane.f32.xlu0 %v3303
  %v3305 = vpop.xlane.xlu0 %3304
  %v3306 = vmul.f32 %v3290, %v285
  %v3307 = vmul.f32 %v3293, %v285
  %v3308 = vmul.f32 %v3296, %v285
  %v3309 = vmul.f32 %v3299, %v285
  %v3310 = vmul.f32 %v3302, %v285
  %v3311 = vmul.f32 %v3305, %v285
  %v3312 = vsub.f32 %v3278, %v3306
  %v3313 = vsub.f32 %v3279, %v3307
  %v3314 = vsub.f32 %v3280, %v3308
  %v3315 = vsub.f32 %v3281, %v3309
  %v3316 = vsub.f32 %v3282, %v3310
  %v3317 = vsub.f32 %v3283, %v3311
  %v3318 = vmul.f32 %v3312, %v3312
  %v3319 = vmul.f32 %v3313, %v3313
  %v3320 = vmul.f32 %v3314, %v3314
  %v3321 = vmul.f32 %v3315, %v3315
  %v3322 = vmul.f32 %v3316, %v3316
  %v3323 = vmul.f32 %v3317, %v3317
  %v3324 = vsel %vm266, %v3318, 0.0
  %3325 = vadd.xlane.f32.xlu0 %v3324
  %v3326 = vpop.xlane.xlu0 %3325
  %v3327 = vsel %vm266, %v3319, 0.0
  %3328 = vadd.xlane.f32.xlu0 %v3327
  %v3329 = vpop.xlane.xlu0 %3328
  %v3330 = vsel %vm266, %v3320, 0.0
  %3331 = vadd.xlane.f32.xlu0 %v3330
  %v3332 = vpop.xlane.xlu0 %3331
  %v3333 = vsel %vm266, %v3321, 0.0
  %3334 = vadd.xlane.f32.xlu0 %v3333
  %v3335 = vpop.xlane.xlu0 %3334
  %v3336 = vsel %vm266, %v3322, 0.0
  %3337 = vadd.xlane.f32.xlu0 %v3336
  %v3338 = vpop.xlane.xlu0 %3337
  %v3339 = vsel %vm266, %v3323, 0.0
  %3340 = vadd.xlane.f32.xlu0 %v3339
  %v3341 = vpop.xlane.xlu0 %3340
  %v3342 = vmul.f32 %v3326, %v285
  %v3343 = vmul.f32 %v3329, %v285
  %v3344 = vmul.f32 %v3332, %v285
  %v3345 = vmul.f32 %v3335, %v285
  %v3346 = vmul.f32 %v3338, %v285
  %v3347 = vmul.f32 %v3341, %v285
  %v3348 = vadd.f32 %v3342, 1e-12
  %v3349 = vadd.f32 %v3343, 1e-12
  %v3350 = vadd.f32 %v3344, 1e-12
  %v3351 = vadd.f32 %v3345, 1e-12
  %v3352 = vadd.f32 %v3346, 1e-12
  %v3353 = vadd.f32 %v3347, 1e-12
  %v3354 = vrsqrt.pop %v3348
  %v3355 = vrsqrt.pop %v3349
  %v3356 = vrsqrt.pop %v3350
  %v3357 = vrsqrt.pop %v3351
  %v3358 = vrsqrt.pop %v3352
  %v3359 = vrsqrt.pop %v3353
  %v3360 = vmul.f32 %v3312, %v3354
  %v3361 = vmul.f32 %v3313, %v3355
  %v3362 = vmul.f32 %v3314, %v3356
  %v3363 = vmul.f32 %v3315, %v3357
  %v3364 = vmul.f32 %v3316, %v3358
  %v3365 = vmul.f32 %v3317, %v3359
  %v3367 = vlaneseq
  %v3368 = vshrl.u32 %v3367, 7
  %v3369 = vsub.s32 0, %v3368
  %v3370 = vrot.slane %v3285, %v3369
  %v3372 = vmul.f32 %v3360, %v3370
  %v3373 = vmul.f32 %v3361, %v3370
  %v3374 = vmul.f32 %v3362, %v3370
  %v3375 = vmul.f32 %v3363, %v3370
  %v3376 = vmul.f32 %v3364, %v3370
  %v3377 = vmul.f32 %v3365, %v3370
  %v3379 = vlaneseq
  %v3380 = vshrl.u32 %v3379, 7
  %v3381 = vsub.s32 0, %v3380
  %v3382 = vrot.slane %v3287, %v3381
  %v3384 = vadd.f32 %v3372, %v3382
  %v3385 = vadd.f32 %v3373, %v3382
  %v3386 = vadd.f32 %v3374, %v3382
  %v3387 = vadd.f32 %v3375, %v3382
  %v3388 = vadd.f32 %v3376, %v3382
  %v3389 = vadd.f32 %v3377, %v3382
  %v3390 = vld [vmem:[%s3 + $0x80] sm:$0xff]
  %v3391 = vld [vmem:[%s3 + $0x88] sm:$0xff]
  %v3392 = vld [vmem:[%s3 + $0x90] sm:$0xff]
  %v3393 = vld [vmem:[%s3 + $0x98] sm:$0xff]
  %s3394 = scalar_lea.vmem %s4, 2
  %v3395 = vld [vmem:[%s3394] sm:$0x1]
  %v3396 = vlaneseq
  %v3397 = vshrl.u32 %v3396, 7
  %v3398 = vmul.u32 %v3397, 8
  %vm3399 = vcmp.eq.s32.totalorder %v27, %v3398
  %v3400 = vsel %vm3399, 1, 0
  %v3401 = vcvt.s32.f32 %v3400
  %v3402 = vadd.s32 %v3397, 4
  %v3403 = vmul.u32 %v3402, 8
  %vm3404 = vcmp.eq.s32.totalorder %v27, %v3403
  %v3405 = vsel %vm3404, 1, 0
  %v3406 = vcvt.s32.f32 %v3405
  %v3408 = vsel %vm723, %v3401, 0
  %3410 = vmatprep.subr.mxu0 0.0
  %3411 = vmatpush1.msra.mxu0 0.0
  %3412 = vmatprep.subr.mxu0 0.0
  %3413 = vmatpush1.msra.mxu0 0.0
  %3414 = vmatprep.subr.mxu0 0.0
  %3415 = vmatpush1.msra.mxu0 0.0
  %3416 = vmatprep.subr.mxu0 0.0
  %3417 = vmatpush1.msra.mxu0 0.0
  %3418 = vmatprep.subr.mxu0 0.0
  %3419 = vmatpush1.msra.mxu0 0.0
  %3420 = vmatprep.subr.mxu0 0.0
  %3421 = vmatpush1.msra.mxu0 0.0
  %3422 = vmatprep.subr.mxu0 0.0
  %3423 = vmatpush1.msra.mxu0 0.0
  %3424 = vmatprep.subr.mxu0 0.0
  %3425 = vmatpush1.msra.mxu0 0.0
  %3426 = vmatprep.subr.mxu0 0.0
  %3427 = vmatpush1.msra.mxu0 0.0
  %3428 = vmatprep.subr.mxu0 0.0
  %3429 = vmatpush1.msra.mxu0 0.0
  %3430 = vmatprep.subr.mxu0 0.0
  %3431 = vmatpush1.msra.mxu0 %v3389
  %3432 = vmatprep.subr.mxu0 0.0
  %3433 = vmatpush1.msra.mxu0 %v3388
  %3434 = vmatprep.subr.mxu0 0.0
  %3435 = vmatpush1.msra.mxu0 %v3387
  %3436 = vmatprep.subr.mxu0 0.0
  %3437 = vmatpush1.msra.mxu0 %v3386
  %3438 = vmatprep.subr.mxu0 0.0
  %3439 = vmatpush1.msra.mxu0 %v3385
  %3440 = vmatprep.subr.mxu0 0.0
  %3441 = vmatpush1.msra.mxu0 %v3384
  %3442 = vmatprep.subr.mxu0 0.0
  %3443 = vmatpush2.msra.mxu0 0.0
  %3444 = vmatprep.subr.mxu0 0.0
  %3445 = vmatpush2.msra.mxu0 0.0
  %3446 = vmatprep.subr.mxu0 0.0
  %3447 = vmatpush2.msra.mxu0 0.0
  %3448 = vmatprep.subr.mxu0 0.0
  %3449 = vmatpush2.msra.mxu0 0.0
  %3450 = vmatprep.subr.mxu0 0.0
  %3451 = vmatpush2.msra.mxu0 0.0
  %3452 = vmatprep.subr.mxu0 0.0
  %3453 = vmatpush2.msra.mxu0 0.0
  %3454 = vmatprep.subr.mxu0 0.0
  %3455 = vmatpush2.msra.mxu0 0.0
  %3456 = vmatprep.subr.mxu0 0.0
  %3457 = vmatpush2.msra.mxu0 0.0
  %3458 = vmatprep.subr.mxu0 0.0
  %3459 = vmatpush2.msra.mxu0 0.0
  %3460 = vmatprep.subr.mxu0 0.0
  %3461 = vmatpush2.msra.mxu0 0.0
  %3462 = vmatprep.subr.mxu0 0.0
  %3463 = vmatpush2.msra.mxu0 0.0
  %3464 = vmatprep.subr.mxu0 0.0
  %3465 = vmatpush2.msra.mxu0 0.0
  %3466 = vmatprep.subr.mxu0 0.0
  %3467 = vmatpush2.msra.mxu0 0.0
  %3468 = vmatprep.subr.mxu0 0.0
  %3469 = vmatpush2.msra.mxu0 0.0
  %3470 = vmatprep.subr.mxu0 0.0
  %3471 = vmatpush2.msra.mxu0 0.0
  %3472 = vmatprep.subr.mxu0 0.0
  %3473 = vmatpush2.msra.mxu0 0.0
  %3474 = vmatprep.mubr.f32.mxu0 0.0
  %3475 = vmatmul.mubr.f32.gmra.mxu0 %v3408
  %v3476 = vpop.f32.mrf.mxu0
  %v3477 = vadd.f32 0.0, %v3476
  %v3478 = vpop.f32.mrf.mxu0
  %3479 = vdwg.mxu0
  %v3481 = vlaneseq
  %v3482 = vshrl.u32 %v3481, 7
  %v3483 = vsub.s32 0, %v3482
  %v3484 = vrot.slane %v3395, %v3483
  %v3487 = vsel %vm266, %v3477, 0
  %3489 = vmatprep.subr.mxu0 0.0
  %3490 = vmatpush1.msra.mxu0 0.0
  %3491 = vmatprep.subr.mxu0 0.0
  %3492 = vmatpush1.msra.mxu0 0.0
  %3493 = vmatprep.subr.mxu0 0.0
  %3494 = vmatpush1.msra.mxu0 0.0
  %3495 = vmatprep.subr.mxu0 0.0
  %3496 = vmatpush1.msra.mxu0 0.0
  %3497 = vmatprep.subr.mxu0 0.0
  %3498 = vmatpush1.msra.mxu0 0.0
  %3499 = vmatprep.subr.mxu0 0.0
  %3500 = vmatpush1.msra.mxu0 0.0
  %3501 = vmatprep.subr.mxu0 0.0
  %3502 = vmatpush1.msra.mxu0 0.0
  %3503 = vmatprep.subr.mxu0 0.0
  %3504 = vmatpush1.msra.mxu0 0.0
  %3505 = vmatprep.subr.mxu0 0.0
  %3506 = vmatpush1.msra.mxu0 0.0
  %3507 = vmatprep.subr.mxu0 0.0
  %3508 = vmatpush1.msra.mxu0 0.0
  %3509 = vmatprep.subr.mxu0 0.0
  %3510 = vmatpush1.msra.mxu0 0.0
  %3511 = vmatprep.subr.mxu0 0.0
  %3512 = vmatpush1.msra.mxu0 0.0
  %3513 = vmatprep.subr.mxu0 0.0
  %3514 = vmatpush1.msra.mxu0 %v3393
  %3515 = vmatprep.subr.mxu0 0.0
  %3516 = vmatpush1.msra.mxu0 %v3392
  %3517 = vmatprep.subr.mxu0 0.0
  %3518 = vmatpush1.msra.mxu0 %v3391
  %3519 = vmatprep.subr.mxu0 0.0
  %3520 = vmatpush1.msra.mxu0 %v3390
  %3521 = vmatprep.subr.mxu0 0.0
  %3522 = vmatpush2.msra.mxu0 0.0
  %3523 = vmatprep.subr.mxu0 0.0
  %3524 = vmatpush2.msra.mxu0 0.0
  %3525 = vmatprep.subr.mxu0 0.0
  %3526 = vmatpush2.msra.mxu0 0.0
  %3527 = vmatprep.subr.mxu0 0.0
  %3528 = vmatpush2.msra.mxu0 0.0
  %3529 = vmatprep.subr.mxu0 0.0
  %3530 = vmatpush2.msra.mxu0 0.0
  %3531 = vmatprep.subr.mxu0 0.0
  %3532 = vmatpush2.msra.mxu0 0.0
  %3533 = vmatprep.subr.mxu0 0.0
  %3534 = vmatpush2.msra.mxu0 0.0
  %3535 = vmatprep.subr.mxu0 0.0
  %3536 = vmatpush2.msra.mxu0 0.0
  %3537 = vmatprep.subr.mxu0 0.0
  %3538 = vmatpush2.msra.mxu0 0.0
  %3539 = vmatprep.subr.mxu0 0.0
  %3540 = vmatpush2.msra.mxu0 0.0
  %3541 = vmatprep.subr.mxu0 0.0
  %3542 = vmatpush2.msra.mxu0 0.0
  %3543 = vmatprep.subr.mxu0 0.0
  %3544 = vmatpush2.msra.mxu0 0.0
  %3545 = vmatprep.subr.mxu0 0.0
  %3546 = vmatpush2.msra.mxu0 0.0
  %3547 = vmatprep.subr.mxu0 0.0
  %3548 = vmatpush2.msra.mxu0 0.0
  %3549 = vmatprep.subr.mxu0 0.0
  %3550 = vmatpush2.msra.mxu0 0.0
  %3551 = vmatprep.subr.mxu0 0.0
  %3552 = vmatpush2.msra.mxu0 0.0
  %3553 = vmatprep.mubr.f32.mxu0 0.0
  %3554 = vmatmul.mubr.f32.gmra.mxu0 %v3487
  %v3555 = vpop.f32.mrf.mxu0
  %v3556 = vadd.f32 %v3484, %v3555
  %v3557 = vpop.f32.mrf.mxu0
  %3558 = vdwg.mxu0
  %v3559 = vtanh.pop %v3556
  %v3561 = vsel %vm723, %v3406, 0
  %3563 = vmatprep.subr.mxu0 0.0
  %3564 = vmatpush1.msra.mxu0 0.0
  %3565 = vmatprep.subr.mxu0 0.0
  %3566 = vmatpush1.msra.mxu0 0.0
  %3567 = vmatprep.subr.mxu0 0.0
  %3568 = vmatpush1.msra.mxu0 0.0
  %3569 = vmatprep.subr.mxu0 0.0
  %3570 = vmatpush1.msra.mxu0 0.0
  %3571 = vmatprep.subr.mxu0 0.0
  %3572 = vmatpush1.msra.mxu0 0.0
  %3573 = vmatprep.subr.mxu0 0.0
  %3574 = vmatpush1.msra.mxu0 0.0
  %3575 = vmatprep.subr.mxu0 0.0
  %3576 = vmatpush1.msra.mxu0 0.0
  %3577 = vmatprep.subr.mxu0 0.0
  %3578 = vmatpush1.msra.mxu0 0.0
  %3579 = vmatprep.subr.mxu0 0.0
  %3580 = vmatpush1.msra.mxu0 0.0
  %3581 = vmatprep.subr.mxu0 0.0
  %3582 = vmatpush1.msra.mxu0 0.0
  %3583 = vmatprep.subr.mxu0 0.0
  %3584 = vmatpush1.msra.mxu0 %v3389
  %3585 = vmatprep.subr.mxu0 0.0
  %3586 = vmatpush1.msra.mxu0 %v3388
  %3587 = vmatprep.subr.mxu0 0.0
  %3588 = vmatpush1.msra.mxu0 %v3387
  %3589 = vmatprep.subr.mxu0 0.0
  %3590 = vmatpush1.msra.mxu0 %v3386
  %3591 = vmatprep.subr.mxu0 0.0
  %3592 = vmatpush1.msra.mxu0 %v3385
  %3593 = vmatprep.subr.mxu0 0.0
  %3594 = vmatpush1.msra.mxu0 %v3384
  %3595 = vmatprep.subr.mxu0 0.0
  %3596 = vmatpush2.msra.mxu0 0.0
  %3597 = vmatprep.subr.mxu0 0.0
  %3598 = vmatpush2.msra.mxu0 0.0
  %3599 = vmatprep.subr.mxu0 0.0
  %3600 = vmatpush2.msra.mxu0 0.0
  %3601 = vmatprep.subr.mxu0 0.0
  %3602 = vmatpush2.msra.mxu0 0.0
  %3603 = vmatprep.subr.mxu0 0.0
  %3604 = vmatpush2.msra.mxu0 0.0
  %3605 = vmatprep.subr.mxu0 0.0
  %3606 = vmatpush2.msra.mxu0 0.0
  %3607 = vmatprep.subr.mxu0 0.0
  %3608 = vmatpush2.msra.mxu0 0.0
  %3609 = vmatprep.subr.mxu0 0.0
  %3610 = vmatpush2.msra.mxu0 0.0
  %3611 = vmatprep.subr.mxu0 0.0
  %3612 = vmatpush2.msra.mxu0 0.0
  %3613 = vmatprep.subr.mxu0 0.0
  %3614 = vmatpush2.msra.mxu0 0.0
  %3615 = vmatprep.subr.mxu0 0.0
  %3616 = vmatpush2.msra.mxu0 0.0
  %3617 = vmatprep.subr.mxu0 0.0
  %3618 = vmatpush2.msra.mxu0 0.0
  %3619 = vmatprep.subr.mxu0 0.0
  %3620 = vmatpush2.msra.mxu0 0.0
  %3621 = vmatprep.subr.mxu0 0.0
  %3622 = vmatpush2.msra.mxu0 0.0
  %3623 = vmatprep.subr.mxu0 0.0
  %3624 = vmatpush2.msra.mxu0 0.0
  %3625 = vmatprep.subr.mxu0 0.0
  %3626 = vmatpush2.msra.mxu0 0.0
  %3627 = vmatprep.mubr.f32.mxu0 0.0
  %3628 = vmatmul.mubr.f32.gmra.mxu0 %v3561
  %v3629 = vpop.f32.mrf.mxu0
  %v3630 = vadd.f32 0.0, %v3629
  %v3631 = vpop.f32.mrf.mxu0
  %3632 = vdwg.mxu0
  %v3634 = vsel %vm266, %v3630, 0
  %3636 = vmatprep.subr.mxu0 0.0
  %3637 = vmatpush1.msra.mxu0 0.0
  %3638 = vmatprep.subr.mxu0 0.0
  %3639 = vmatpush1.msra.mxu0 0.0
  %3640 = vmatprep.subr.mxu0 0.0
  %3641 = vmatpush1.msra.mxu0 0.0
  %3642 = vmatprep.subr.mxu0 0.0
  %3643 = vmatpush1.msra.mxu0 0.0
  %3644 = vmatprep.subr.mxu0 0.0
  %3645 = vmatpush1.msra.mxu0 0.0
  %3646 = vmatprep.subr.mxu0 0.0
  %3647 = vmatpush1.msra.mxu0 0.0
  %3648 = vmatprep.subr.mxu0 0.0
  %3649 = vmatpush1.msra.mxu0 0.0
  %3650 = vmatprep.subr.mxu0 0.0
  %3651 = vmatpush1.msra.mxu0 0.0
  %3652 = vmatprep.subr.mxu0 0.0
  %3653 = vmatpush1.msra.mxu0 0.0
  %3654 = vmatprep.subr.mxu0 0.0
  %3655 = vmatpush1.msra.mxu0 0.0
  %3656 = vmatprep.subr.mxu0 0.0
  %3657 = vmatpush1.msra.mxu0 0.0
  %3658 = vmatprep.subr.mxu0 0.0
  %3659 = vmatpush1.msra.mxu0 0.0
  %3660 = vmatprep.subr.mxu0 0.0
  %3661 = vmatpush1.msra.mxu0 %v3393
  %3662 = vmatprep.subr.mxu0 0.0
  %3663 = vmatpush1.msra.mxu0 %v3392
  %3664 = vmatprep.subr.mxu0 0.0
  %3665 = vmatpush1.msra.mxu0 %v3391
  %3666 = vmatprep.subr.mxu0 0.0
  %3667 = vmatpush1.msra.mxu0 %v3390
  %3668 = vmatprep.subr.mxu0 0.0
  %3669 = vmatpush2.msra.mxu0 0.0
  %3670 = vmatprep.subr.mxu0 0.0
  %3671 = vmatpush2.msra.mxu0 0.0
  %3672 = vmatprep.subr.mxu0 0.0
  %3673 = vmatpush2.msra.mxu0 0.0
  %3674 = vmatprep.subr.mxu0 0.0
  %3675 = vmatpush2.msra.mxu0 0.0
  %3676 = vmatprep.subr.mxu0 0.0
  %3677 = vmatpush2.msra.mxu0 0.0
  %3678 = vmatprep.subr.mxu0 0.0
  %3679 = vmatpush2.msra.mxu0 0.0
  %3680 = vmatprep.subr.mxu0 0.0
  %3681 = vmatpush2.msra.mxu0 0.0
  %3682 = vmatprep.subr.mxu0 0.0
  %3683 = vmatpush2.msra.mxu0 0.0
  %3684 = vmatprep.subr.mxu0 0.0
  %3685 = vmatpush2.msra.mxu0 0.0
  %3686 = vmatprep.subr.mxu0 0.0
  %3687 = vmatpush2.msra.mxu0 0.0
  %3688 = vmatprep.subr.mxu0 0.0
  %3689 = vmatpush2.msra.mxu0 0.0
  %3690 = vmatprep.subr.mxu0 0.0
  %3691 = vmatpush2.msra.mxu0 0.0
  %3692 = vmatprep.subr.mxu0 0.0
  %3693 = vmatpush2.msra.mxu0 0.0
  %3694 = vmatprep.subr.mxu0 0.0
  %3695 = vmatpush2.msra.mxu0 0.0
  %3696 = vmatprep.subr.mxu0 0.0
  %3697 = vmatpush2.msra.mxu0 0.0
  %3698 = vmatprep.subr.mxu0 0.0
  %3699 = vmatpush2.msra.mxu0 0.0
  %3700 = vmatprep.mubr.f32.mxu0 0.0
  %3701 = vmatmul.mubr.f32.gmra.mxu0 %v3634
  %v3702 = vpop.f32.mrf.mxu0
  %v3703 = vadd.f32 %v3484, %v3702
  %v3704 = vpop.f32.mrf.mxu0
  %3705 = vdwg.mxu0
  %v3706 = vtanh.pop %v3703
  %v3708 = vsel %vm266, %v3706, 0
  %v3711 = vsel %vm266, %v3559, 0
  %3713 = vmatprep.subr.mxu0 0.0
  %3714 = vmatpush1.xpose.msra.mxu0 0.0
  %3715 = vmatprep.subr.mxu0 0.0
  %3716 = vmatpush1.xpose.msra.mxu0 0.0
  %3717 = vmatprep.subr.mxu0 0.0
  %3718 = vmatpush1.xpose.msra.mxu0 0.0
  %3719 = vmatprep.subr.mxu0 0.0
  %3720 = vmatpush1.xpose.msra.mxu0 0.0
  %3721 = vmatprep.subr.mxu0 0.0
  %3722 = vmatpush1.xpose.msra.mxu0 0.0
  %3723 = vmatprep.subr.mxu0 0.0
  %3724 = vmatpush1.xpose.msra.mxu0 0.0
  %3725 = vmatprep.subr.mxu0 0.0
  %3726 = vmatpush1.xpose.msra.mxu0 0.0
  %3727 = vmatprep.subr.mxu0 0.0
  %3728 = vmatpush1.xpose.msra.mxu0 0.0
  %3729 = vmatprep.subr.mxu0 0.0
  %3730 = vmatpush1.xpose.msra.mxu0 0.0
  %3731 = vmatprep.subr.mxu0 0.0
  %3732 = vmatpush1.xpose.msra.mxu0 0.0
  %3733 = vmatprep.subr.mxu0 0.0
  %3734 = vmatpush1.xpose.msra.mxu0 0.0
  %3735 = vmatprep.subr.mxu0 0.0
  %3736 = vmatpush1.xpose.msra.mxu0 0.0
  %3737 = vmatprep.subr.mxu0 0.0
  %3738 = vmatpush1.xpose.msra.mxu0 0.0
  %3739 = vmatprep.subr.mxu0 0.0
  %3740 = vmatpush1.xpose.msra.mxu0 0.0
  %3741 = vmatprep.subr.mxu0 0.0
  %3742 = vmatpush1.xpose.msra.mxu0 0.0
  %3743 = vmatprep.subr.mxu0 0.0
  %3744 = vmatpush1.xpose.msra.mxu0 %v3711
  %3745 = vmatprep.subr.mxu0 0.0
  %3746 = vmatpush2.xpose.msra.mxu0 0.0
  %3747 = vmatprep.subr.mxu0 0.0
  %3748 = vmatpush2.xpose.msra.mxu0 0.0
  %3749 = vmatprep.subr.mxu0 0.0
  %3750 = vmatpush2.xpose.msra.mxu0 0.0
  %3751 = vmatprep.subr.mxu0 0.0
  %3752 = vmatpush2.xpose.msra.mxu0 0.0
  %3753 = vmatprep.subr.mxu0 0.0
  %3754 = vmatpush2.xpose.msra.mxu0 0.0
  %3755 = vmatprep.subr.mxu0 0.0
  %3756 = vmatpush2.xpose.msra.mxu0 0.0
  %3757 = vmatprep.subr.mxu0 0.0
  %3758 = vmatpush2.xpose.msra.mxu0 0.0
  %3759 = vmatprep.subr.mxu0 0.0
  %3760 = vmatpush2.xpose.msra.mxu0 0.0
  %3761 = vmatprep.subr.mxu0 0.0
  %3762 = vmatpush2.xpose.msra.mxu0 0.0
  %3763 = vmatprep.subr.mxu0 0.0
  %3764 = vmatpush2.xpose.msra.mxu0 0.0
  %3765 = vmatprep.subr.mxu0 0.0
  %3766 = vmatpush2.xpose.msra.mxu0 0.0
  %3767 = vmatprep.subr.mxu0 0.0
  %3768 = vmatpush2.xpose.msra.mxu0 0.0
  %3769 = vmatprep.subr.mxu0 0.0
  %3770 = vmatpush2.xpose.msra.mxu0 0.0
  %3771 = vmatprep.subr.mxu0 0.0
  %3772 = vmatpush2.xpose.msra.mxu0 0.0
  %3773 = vmatprep.subr.mxu0 0.0
  %3774 = vmatpush2.xpose.msra.mxu0 0.0
  %3775 = vmatprep.subr.mxu0 0.0
  %3776 = vmatpush2.xpose.msra.mxu0 0.0
  %3777 = vmatprep.mubr.f32.mxu0 0.0
  %3778 = vmatmul.mubr.f32.gmra.mxu0 %v3708
  %v3779 = vpop.f32.mrf.mxu0
  %v3780 = vadd.f32 0.0, %v3779
  %v3781 = vpop.f32.mrf.mxu0
  %3782 = vdwg.mxu0
  %vm3783 = vcmask 25600
  %v3784 = vsel %vm3783, %v3780, -inf
  %3785 = vmax.xlane.f32.xlu0 %v3784
  %v3786 = vpop.xlane.xlu0 %3785
  %v3787 = vsub.f32 %v3780, %v3786
  %v3788 = vmul.f32 %v3787, 1.442695
  %v3789 = vpow.pop %v3788
  %v3790 = vsel %vm3783, %v3789, 0.0
  %3791 = vadd.xlane.f32.xlu0 %v3790
  %v3792 = vpop.xlane.xlu0 %3791
  %v3793 = vrcp.pop %v3792
  %v3794 = vmul.f32 %v3789, %v3793
  %v3795 = vld [vmem:[%s0] sm:$0xf]
  %3796 = vset.pattern.permute.xlu0 4
  %3797 = vperm.xlu0 %3796, %v3795
  %v3798 = vpop.permute.xlu0 %3797
  %vm3799 = vcmp.eq.s32.totalorder %v27, %v3798
  %v3800 = vsel %vm3799, 1, 0
  %v3801 = vcvt.s32.f32 %v3800
  %vm3802 = vcmask 31744
  %v3804 = vsel %vm3802, %v3794, 0
  %v3807 = vsel %vm164, %v3801, 0
  %3809 = vmatprep.subr.mxu0 0.0
  %3810 = vmatpush1.msra.mxu0 0.0
  %3811 = vmatprep.subr.mxu0 0.0
  %3812 = vmatpush1.msra.mxu0 0.0
  %3813 = vmatprep.subr.mxu0 0.0
  %3814 = vmatpush1.msra.mxu0 0.0
  %3815 = vmatprep.subr.mxu0 0.0
  %3816 = vmatpush1.msra.mxu0 0.0
  %3817 = vmatprep.subr.mxu0 0.0
  %3818 = vmatpush1.msra.mxu0 0.0
  %3819 = vmatprep.subr.mxu0 0.0
  %3820 = vmatpush1.msra.mxu0 0.0
  %3821 = vmatprep.subr.mxu0 0.0
  %3822 = vmatpush1.msra.mxu0 0.0
  %3823 = vmatprep.subr.mxu0 0.0
  %3824 = vmatpush1.msra.mxu0 0.0
  %3825 = vmatprep.subr.mxu0 0.0
  %3826 = vmatpush1.msra.mxu0 0.0
  %3827 = vmatprep.subr.mxu0 0.0
  %3828 = vmatpush1.msra.mxu0 0.0
  %3829 = vmatprep.subr.mxu0 0.0
  %3830 = vmatpush1.msra.mxu0 0.0
  %3831 = vmatprep.subr.mxu0 0.0
  %3832 = vmatpush1.msra.mxu0 0.0
  %3833 = vmatprep.subr.mxu0 0.0
  %3834 = vmatpush1.msra.mxu0 0.0
  %3835 = vmatprep.subr.mxu0 0.0
  %3836 = vmatpush1.msra.mxu0 0.0
  %3837 = vmatprep.subr.mxu0 0.0
  %3838 = vmatpush1.msra.mxu0 0.0
  %3839 = vmatprep.subr.mxu0 0.0
  %3840 = vmatpush1.msra.mxu0 %v3807
  %3841 = vmatprep.subr.mxu0 0.0
  %3842 = vmatpush2.msra.mxu0 0.0
  %3843 = vmatprep.subr.mxu0 0.0
  %3844 = vmatpush2.msra.mxu0 0.0
  %3845 = vmatprep.subr.mxu0 0.0
  %3846 = vmatpush2.msra.mxu0 0.0
  %3847 = vmatprep.subr.mxu0 0.0
  %3848 = vmatpush2.msra.mxu0 0.0
  %3849 = vmatprep.subr.mxu0 0.0
  %3850 = vmatpush2.msra.mxu0 0.0
  %3851 = vmatprep.subr.mxu0 0.0
  %3852 = vmatpush2.msra.mxu0 0.0
  %3853 = vmatprep.subr.mxu0 0.0
  %3854 = vmatpush2.msra.mxu0 0.0
  %3855 = vmatprep.subr.mxu0 0.0
  %3856 = vmatpush2.msra.mxu0 0.0
  %3857 = vmatprep.subr.mxu0 0.0
  %3858 = vmatpush2.msra.mxu0 0.0
  %3859 = vmatprep.subr.mxu0 0.0
  %3860 = vmatpush2.msra.mxu0 0.0
  %3861 = vmatprep.subr.mxu0 0.0
  %3862 = vmatpush2.msra.mxu0 0.0
  %3863 = vmatprep.subr.mxu0 0.0
  %3864 = vmatpush2.msra.mxu0 0.0
  %3865 = vmatprep.subr.mxu0 0.0
  %3866 = vmatpush2.msra.mxu0 0.0
  %3867 = vmatprep.subr.mxu0 0.0
  %3868 = vmatpush2.msra.mxu0 0.0
  %3869 = vmatprep.subr.mxu0 0.0
  %3870 = vmatpush2.msra.mxu0 0.0
  %3871 = vmatprep.subr.mxu0 0.0
  %3872 = vmatpush2.msra.mxu0 0.0
  %3873 = vmatprep.mubr.f32.mxu0 0.0
  %3874 = vmatmul.mubr.f32.gmra.mxu0 %v3804
  %v3875 = vpop.f32.mrf.mxu0
  %v3876 = vadd.f32 1e-06, %v3875
  %v3877 = vpop.f32.mrf.mxu0
  %3878 = vdwg.mxu0
  %v3879 = vld [vmem:[%s0] sm:$0x3]
  %3880 = vset.pattern.permute.xlu0 5
  %3881 = vperm.xlu0 %3880, %v3879
  %v3882 = vpop.permute.xlu0 %3881
  %vm3883 = vcmp.eq.s32.totalorder %v27, %v3882
  %v3884 = vsel %vm3883, 1, 0
  %v3885 = vcvt.s32.f32 %v3884
  %v3886 = vlog2.pop %v3876
  %v3887 = vmul.f32 %v3886, 0.6931472
  %v3888 = vmul.f32 %v3887, %v3885
  %vm3889 = vcmask 1041408
  %v3890 = vsel %vm3889, %v3888, 0.0
  %3891 = vadd.xlane.f32.xlu0 %v3890
  %v3892 = vpop.xlane.xlu0 %3891
  %v3893 = vsel %vm3889, %v3892, 0.0
  %v3894 = vrot.slane %v3893, 4
  %v3895 = vadd.f32 %v3893, %v3894
  %v3896 = vrot.slane %v3895, 2
  %v3897 = vadd.f32 %v3895, %v3896
  %v3898 = vrot.slane %v3897, 1
  %v3899 = vadd.f32 %v3897, %v3898
  %v3900 = vsub.f32 0.0, %v3899
  %v3901 = vmul.f32 %v3900, 0.5
  %3902 = vst [vmem:[%s5] sm:$0xff] %v3901
  %3903 = vst [vmem:[%s5] sm:$0x3] %v3876
  // Predicated region
  $region22: #{forward.1} parent=0 // pred_check
    _
  $region23: #{forward.1} parent=0 // pred_check_branch
    %3905 = sbr.rel (0) target = $region25
  $region24: #{forward.1} parent=0 // pred_region
    _
  $region25: #{forward.1} parent=0 // pred_fallthru
    _
  // Predicated region
  $region26: #{forward.1} parent=0 // pred_check
    _
  $region27: #{forward.1} parent=0 // pred_check_branch
    %3907 = sbr.rel (0) target = $region29
  $region28: #{forward.1} parent=0 // pred_region
    _
  $region29: #{forward.1} parent=0 // pred_fallthru
    _

</llo_original>
